<compile_context>
chip_gen: v6e
topology: v6e:2x2x1
jax: 0.10.0
libtpu: 0.0.40
codegen_flags: <defaults>
</compile_context>

<pallas_src>
import functools

import jax
import jax.numpy as jnp
import numpy as np
from jax.experimental import pallas as pl
from jax.experimental.pallas import tpu as pltpu

D_LAYERS = 8
W_HIDDEN = 256
INPUT_CH = 3
INPUT_CH_VIEWS = 3
OUTPUT_CH = 4
SKIP = 4  # skips=[4]


def _round_up(x, m):
    return ((x + m - 1) // m) * m


def _nerf_kernel(x_ref,
                 w0a, b0, w1, b1, w2, b2, w3, b3, w4, b4,
                 w5b, b5, w6, b6, w7, b7,
                 wo, bo,
                 o_ref, *, compute_dtype):
    # x_ref: (TN, 3) -- only the pts columns (views are dead on this branch).
    pts = x_ref[...].astype(compute_dtype)

    # Fused K=3 matmul: columns [0:256) are layer 0, columns [256:512) are the
    # pts part of the layer-5 skip, computed up front so pts does not stay
    # live across the network.  (The skinny K=3 wastes some MXU issue; only
    # worth moving to broadcast VPU adds if a bundle dump shows MXU binding
    # with VALU slack.)
    both = jnp.dot(pts, w0a[...], preferred_element_type=jnp.float32)   # (TN, 512) f32
    skip5 = both[:, W_HIDDEN:].astype(compute_dtype)                    # (TN, 256) bf16
    # Bias add in f32 (accumulator precision); ReLU after the downcast so the
    # VALU works on half-width data (bf16 VALUs on v6e/v7x).
    h = jnp.maximum((both[:, :W_HIDDEN] + b0[...]).astype(compute_dtype), 0)

    def lin_relu(h, w_ref, b_ref):
        y = jnp.dot(h, w_ref[...], preferred_element_type=jnp.float32) + b_ref[...]
        return jnp.maximum(y.astype(compute_dtype), 0)

    # layers 1..4: Linear(256, 256) + relu
    h = lin_relu(h, w1, b1)
    h = lin_relu(h, w2, b2)
    h = lin_relu(h, w3, b3)
    h = lin_relu(h, w4, b4)
    # skip at i==4: layer 5 is Linear(259, 256) + relu == h@W5b + pts@W5a + b5.
    y5 = jnp.dot(h, w5b[...], preferred_element_type=jnp.float32) + skip5 + b5[...]
    h = jnp.maximum(y5.astype(compute_dtype), 0)
    # layers 6, 7: Linear(256, 256) + relu
    h = lin_relu(h, w6, b6)
    h = lin_relu(h, w7, b7)
    # output_linear: Linear(256, 4), no activation, f32 output.
    # (4-wide output means masked vst; making it lane-dense is a measure-first
    # change for this compute-bound kernel.)
    o_ref[...] = jnp.dot(h, wo[...], preferred_element_type=jnp.float32) + bo[...]


def nerf_forward(x, packed_params, *, block_n=2048):
    """x: (N, input_ch + input_ch_views) f32. Returns (N, output_ch) f32."""
    n, d_in = x.shape
    assert d_in >= INPUT_CH
    compute_dtype = packed_params[0].dtype

    # Only the pts columns are consumed on the use_viewdirs=False path; drop
    # the dead view-direction bytes before the DMA.
    x_pts = x[:, :INPUT_CH]

    # Guarantee a >= 2 step grid so the ("parallel",) axis shards across both
    # v7x TensorCores even for modest ray batches.
    if n <= block_n:
        block_n = max(128, _round_up(pl.cdiv(n, 2), 128))
    n_pad = pl.cdiv(n, block_n) * block_n
    if n_pad != n:
        x_pts = jnp.pad(x_pts, ((0, n_pad - n), (0, 0)))

    def full_spec(p):
        nd = p.ndim
        return pl.BlockSpec(p.shape, lambda i, _nd=nd: (0,) * _nd)

    param_specs = [full_spec(p) for p in packed_params]

    grid_spec = pltpu.PrefetchScalarGridSpec(
        num_scalar_prefetch=0,
        grid=(n_pad // block_n,),
        in_specs=[pl.BlockSpec((block_n, INPUT_CH), lambda i: (i, 0))] + param_specs,
        out_specs=pl.BlockSpec((block_n, OUTPUT_CH), lambda i: (i, 0)),
    )

    flops_per_row = (2 * INPUT_CH * (2 * W_HIDDEN)          # fused (3,512) matmul
                     + 7 * 2 * W_HIDDEN * W_HIDDEN          # seven 256x256 layers
                     + 2 * W_HIDDEN * OUTPUT_CH)            # output layer
    weight_bytes = sum(int(np.prod(p.shape)) * p.dtype.itemsize
                       for p in packed_params)
    cost = pl.CostEstimate(
        flops=int(n_pad) * int(flops_per_row),
        transcendentals=0,
        bytes_accessed=int(weight_bytes + n_pad * (INPUT_CH + OUTPUT_CH) * 4),
    )

    out = pl.pallas_call(
        functools.partial(_nerf_kernel, compute_dtype=compute_dtype),
        out_shape=jax.ShapeDtypeStruct((n_pad, OUTPUT_CH), jnp.float32),
        grid_spec=grid_spec,
        compiler_params=pltpu.CompilerParams(
            dimension_semantics=("parallel",),
            # ~15-20 MiB real footprint at block_n=2048 (see header): above
            # v5e's 16 MiB scoped default, safely under v7x's 64 MiB physical.
            vmem_limit_bytes=48 * 1024 * 1024,
        ),
        cost_estimate=cost,
    )(x_pts, *packed_params)
    return out[:n]


def init_params(key):
    """Deterministic synthetic weights mirroring the PyTorch module:
    8 pts_linears (layer 5 has fan-in 259) + output_linear.
    Weights are stored as (in, out) = PyTorch weight transposed."""
    def linear(k, fan_in, fan_out):
        kw, kb = jax.random.split(k)
        bound = 1.0 / np.sqrt(fan_in)
        w = jax.random.uniform(kw, (fan_in, fan_out), jnp.float32, -bound, bound)
        b = jax.random.uniform(kb, (fan_out,), jnp.float32, -bound, bound)
        return w, b

    keys = jax.random.split(key, D_LAYERS + 1)
    in_dims = ([INPUT_CH] + [W_HIDDEN] * 4
               + [W_HIDDEN + INPUT_CH] + [W_HIDDEN] * 2)
    layers = [linear(keys[i], in_dims[i], W_HIDDEN) for i in range(D_LAYERS)]
    out_layer = linear(keys[D_LAYERS], W_HIDDEN, OUTPUT_CH)
    return layers, out_layer


def pack_params(layers, out_layer, dtype=jnp.bfloat16):
    """Kernel param list: weights in `dtype` (layer-0 weight fused with the
    pts part of layer 5 into a (3, 512) matrix), f32 biases as (1, out)."""
    w0, b0 = layers[0]
    w5, b5 = layers[SKIP + 1]
    w5a, w5b = w5[:INPUT_CH], w5[INPUT_CH:]
    packed = [jnp.concatenate([w0, w5a], axis=1).astype(dtype),   # (3, 512)
              b0.reshape(1, -1)]
    for i in (1, 2, 3, 4):
        w, b = layers[i]
        packed += [w.astype(dtype), b.reshape(1, -1)]
    packed += [w5b.astype(dtype), b5.reshape(1, -1)]
    for i in (6, 7):
        w, b = layers[i]
        packed += [w.astype(dtype), b.reshape(1, -1)]
    wo, bo = out_layer
    packed += [wo.astype(dtype), bo.reshape(1, -1)]
    return packed


def reference_forward_f32(x, layers, out_layer):
    """Plain-JAX f32 reference matching the PyTorch forward (use_viewdirs=False)."""
    pts = x[:, :INPUT_CH]
    h = pts
    for i in range(D_LAYERS):
        w, b = layers[i]
        if i == SKIP + 1:
            h = jnp.concatenate([pts, h], axis=-1)   # skip applied after layer 4
        h = jnp.maximum(h @ w + b, 0.0)
    wo, bo = out_layer
    return h @ wo + bo


def reference_forward_mixed(x, layers, out_layer, dtype=jnp.bfloat16):
    """Reference mirroring the kernel's mixed precision exactly (MXU inputs in
    `dtype`, f32 accumulation + bias adds, ReLU after the downcast, bf16 skip5)
    for an apples-to-apples validation."""
    def dot(a, w):
        return jnp.dot(a, w.astype(dtype), preferred_element_type=jnp.float32)

    pts = x[:, :INPUT_CH].astype(dtype)
    w0, b0 = layers[0]
    w5, b5 = layers[SKIP + 1]
    w5a, w5b = w5[:INPUT_CH], w5[INPUT_CH:]
    skip5 = dot(pts, w5a).astype(dtype)
    h = jnp.maximum((dot(pts, w0) + b0).astype(dtype), 0)
    for i in (1, 2, 3, 4):
        w, b = layers[i]
        h = jnp.maximum((dot(h, w) + b).astype(dtype), 0)
    h = jnp.maximum((dot(h, w5b) + skip5 + b5).astype(dtype), 0)
    for i in (6, 7):
        w, b = layers[i]
        h = jnp.maximum((dot(h, w) + b).astype(dtype), 0)
    wo, bo = out_layer
    return dot(h, wo) + bo


if __name__ == "__main__":
    key = jax.random.PRNGKey(0)
    k_param, k_x = jax.random.split(key)

    # Small test batch; N is deliberately NOT a multiple of the tile to
    # exercise the padding path, and N < default block_n exercises the
    # >=2-step grid clamp (block_n -> 384, grid=(2,)).
    N = 600
    x = jax.random.normal(k_x, (N, INPUT_CH + INPUT_CH_VIEWS), jnp.float32)
    layers, out_layer = init_params(k_param)
    packed = pack_params(layers, out_layer)           # bf16 weights, f32 biases

    out = nerf_forward(x, packed)
    out = jax.block_until_ready(out)

    # Tight check vs a reference with the same bf16/f32 mixed precision.
    ref_mixed = reference_forward_mixed(x, layers, out_layer)
    np.testing.assert_allclose(np.asarray(out), np.asarray(ref_mixed),
                               rtol=2e-3, atol=2e-3)
    # Loose sanity check vs the full-precision (PyTorch-equivalent) math.
    ref_f32 = reference_forward_f32(x, layers, out_layer)
    np.testing.assert_allclose(np.asarray(out), np.asarray(ref_f32),
                               rtol=2e-2, atol=2e-2)
    print("KERNEL_OK")
</pallas_src>

<mosaic_0001>
module attributes {stable_mosaic.version = 11 : i64} {
  func.func @_nerf_kernel(%arg0: i32, %arg1: memref<384x3xf32, #tpu.memory_space<vmem>>, %arg2: memref<3x512xbf16, #tpu.memory_space<vmem>>, %arg3: memref<1x256xf32, #tpu.memory_space<vmem>>, %arg4: memref<256x256xbf16, #tpu.memory_space<vmem>>, %arg5: memref<1x256xf32, #tpu.memory_space<vmem>>, %arg6: memref<256x256xbf16, #tpu.memory_space<vmem>>, %arg7: memref<1x256xf32, #tpu.memory_space<vmem>>, %arg8: memref<256x256xbf16, #tpu.memory_space<vmem>>, %arg9: memref<1x256xf32, #tpu.memory_space<vmem>>, %arg10: memref<256x256xbf16, #tpu.memory_space<vmem>>, %arg11: memref<1x256xf32, #tpu.memory_space<vmem>>, %arg12: memref<256x256xbf16, #tpu.memory_space<vmem>>, %arg13: memref<1x256xf32, #tpu.memory_space<vmem>>, %arg14: memref<256x256xbf16, #tpu.memory_space<vmem>>, %arg15: memref<1x256xf32, #tpu.memory_space<vmem>>, %arg16: memref<256x256xbf16, #tpu.memory_space<vmem>>, %arg17: memref<1x256xf32, #tpu.memory_space<vmem>>, %arg18: memref<256x4xbf16, #tpu.memory_space<vmem>>, %arg19: memref<1x4xf32, #tpu.memory_space<vmem>>, %arg20: memref<384x4xf32, #tpu.memory_space<vmem>>) attributes {dimension_semantics = [#tpu.dimension_semantics<parallel>], iteration_bounds = array<i64: 2>, scalar_prefetch = 0 : i64, scratch_operands = 0 : i64, tpu.core_type = #tpu.core_type<tc>, window_params = [{transform_indices = @transform_0, window_bounds = array<i64: 384, 3>}, {pipeline_mode = #tpu.pipeline_mode<synchronous>, transform_indices = @transform_1, window_bounds = array<i64: 3, 512>}, {pipeline_mode = #tpu.pipeline_mode<synchronous>, transform_indices = @transform_2, window_bounds = array<i64: 1, 256>}, {pipeline_mode = #tpu.pipeline_mode<synchronous>, transform_indices = @transform_3, window_bounds = array<i64: 256, 256>}, {pipeline_mode = #tpu.pipeline_mode<synchronous>, transform_indices = @transform_4, window_bounds = array<i64: 1, 256>}, {pipeline_mode = #tpu.pipeline_mode<synchronous>, transform_indices = @transform_5, window_bounds = array<i64: 256, 256>}, {pipeline_mode = #tpu.pipeline_mode<synchronous>, transform_indices = @transform_6, window_bounds = array<i64: 1, 256>}, {pipeline_mode = #tpu.pipeline_mode<synchronous>, transform_indices = @transform_7, window_bounds = array<i64: 256, 256>}, {pipeline_mode = #tpu.pipeline_mode<synchronous>, transform_indices = @transform_8, window_bounds = array<i64: 1, 256>}, {pipeline_mode = #tpu.pipeline_mode<synchronous>, transform_indices = @transform_9, window_bounds = array<i64: 256, 256>}, {pipeline_mode = #tpu.pipeline_mode<synchronous>, transform_indices = @transform_10, window_bounds = array<i64: 1, 256>}, {pipeline_mode = #tpu.pipeline_mode<synchronous>, transform_indices = @transform_11, window_bounds = array<i64: 256, 256>}, {pipeline_mode = #tpu.pipeline_mode<synchronous>, transform_indices = @transform_12, window_bounds = array<i64: 1, 256>}, {pipeline_mode = #tpu.pipeline_mode<synchronous>, transform_indices = @transform_13, window_bounds = array<i64: 256, 256>}, {pipeline_mode = #tpu.pipeline_mode<synchronous>, transform_indices = @transform_14, window_bounds = array<i64: 1, 256>}, {pipeline_mode = #tpu.pipeline_mode<synchronous>, transform_indices = @transform_15, window_bounds = array<i64: 256, 256>}, {pipeline_mode = #tpu.pipeline_mode<synchronous>, transform_indices = @transform_16, window_bounds = array<i64: 1, 256>}, {pipeline_mode = #tpu.pipeline_mode<synchronous>, transform_indices = @transform_17, window_bounds = array<i64: 256, 4>}, {pipeline_mode = #tpu.pipeline_mode<synchronous>, transform_indices = @transform_18, window_bounds = array<i64: 1, 4>}, {transform_indices = @transform_19, window_bounds = array<i64: 384, 4>}]} {
    %c0 = arith.constant 0 : index
    %c0_0 = arith.constant 0 : index
    %0 = vector.load %arg1[%c0, %c0_0] : memref<384x3xf32, #tpu.memory_space<vmem>>, vector<384x3xf32>
    %1 = arith.truncf %0 : vector<384x3xf32> to vector<384x3xbf16>
    %c0_1 = arith.constant 0 : index
    %c0_2 = arith.constant 0 : index
    %2 = vector.load %arg2[%c0_1, %c0_2] : memref<3x512xbf16, #tpu.memory_space<vmem>>, vector<3x512xbf16>
    %cst = arith.constant dense<0.000000e+00> : vector<384x512xf32>
    %3 = tpu.matmul %1, %2, %cst {dimension_numbers = #tpu.dot_dimension_numbers<[1], [0], [0], [1], [0, 0, 1, 1], [], []>} : vector<384x3xbf16>, vector<3x512xbf16>, vector<384x512xf32> -> vector<384x512xf32>
    %4 = vector.extract_strided_slice %3 {offsets = [0, 256], sizes = [384, 256], strides = [1, 1]} : vector<384x512xf32> to vector<384x256xf32>
    %5 = arith.truncf %4 : vector<384x256xf32> to vector<384x256xbf16>
    %6 = vector.extract_strided_slice %3 {offsets = [0, 0], sizes = [384, 256], strides = [1, 1]} : vector<384x512xf32> to vector<384x256xf32>
    %c0_3 = arith.constant 0 : index
    %c0_4 = arith.constant 0 : index
    %7 = vector.load %arg3[%c0_3, %c0_4] : memref<1x256xf32, #tpu.memory_space<vmem>>, vector<1x256xf32>
    %8 = vector.broadcast %7 : vector<1x256xf32> to vector<384x256xf32>
    %9 = arith.addf %6, %8 : vector<384x256xf32>
    %10 = arith.truncf %9 : vector<384x256xf32> to vector<384x256xbf16>
    %cst_5 = arith.constant 0.000000e+00 : bf16
    %11 = vector.broadcast %cst_5 : bf16 to vector<384x256xbf16>
    %12 = arith.maximumf %10, %11 : vector<384x256xbf16>
    %c0_6 = arith.constant 0 : index
    %c0_7 = arith.constant 0 : index
    %13 = vector.load %arg4[%c0_6, %c0_7] : memref<256x256xbf16, #tpu.memory_space<vmem>>, vector<256x256xbf16>
    %cst_8 = arith.constant dense<0.000000e+00> : vector<384x256xf32>
    %14 = tpu.matmul %12, %13, %cst_8 {dimension_numbers = #tpu.dot_dimension_numbers<[1], [0], [0], [1], [0, 0, 1, 1], [], []>} : vector<384x256xbf16>, vector<256x256xbf16>, vector<384x256xf32> -> vector<384x256xf32>
    %c0_9 = arith.constant 0 : index
    %c0_10 = arith.constant 0 : index
    %15 = vector.load %arg5[%c0_9, %c0_10] : memref<1x256xf32, #tpu.memory_space<vmem>>, vector<1x256xf32>
    %16 = vector.broadcast %15 : vector<1x256xf32> to vector<384x256xf32>
    %17 = arith.addf %14, %16 : vector<384x256xf32>
    %18 = arith.truncf %17 : vector<384x256xf32> to vector<384x256xbf16>
    %cst_11 = arith.constant 0.000000e+00 : bf16
    %19 = vector.broadcast %cst_11 : bf16 to vector<384x256xbf16>
    %20 = arith.maximumf %18, %19 : vector<384x256xbf16>
    %c0_12 = arith.constant 0 : index
    %c0_13 = arith.constant 0 : index
    %21 = vector.load %arg6[%c0_12, %c0_13] : memref<256x256xbf16, #tpu.memory_space<vmem>>, vector<256x256xbf16>
    %cst_14 = arith.constant dense<0.000000e+00> : vector<384x256xf32>
    %22 = tpu.matmul %20, %21, %cst_14 {dimension_numbers = #tpu.dot_dimension_numbers<[1], [0], [0], [1], [0, 0, 1, 1], [], []>} : vector<384x256xbf16>, vector<256x256xbf16>, vector<384x256xf32> -> vector<384x256xf32>
    %c0_15 = arith.constant 0 : index
    %c0_16 = arith.constant 0 : index
    %23 = vector.load %arg7[%c0_15, %c0_16] : memref<1x256xf32, #tpu.memory_space<vmem>>, vector<1x256xf32>
    %24 = vector.broadcast %23 : vector<1x256xf32> to vector<384x256xf32>
    %25 = arith.addf %22, %24 : vector<384x256xf32>
    %26 = arith.truncf %25 : vector<384x256xf32> to vector<384x256xbf16>
    %cst_17 = arith.constant 0.000000e+00 : bf16
    %27 = vector.broadcast %cst_17 : bf16 to vector<384x256xbf16>
    %28 = arith.maximumf %26, %27 : vector<384x256xbf16>
    %c0_18 = arith.constant 0 : index
    %c0_19 = arith.constant 0 : index
    %29 = vector.load %arg8[%c0_18, %c0_19] : memref<256x256xbf16, #tpu.memory_space<vmem>>, vector<256x256xbf16>
    %cst_20 = arith.constant dense<0.000000e+00> : vector<384x256xf32>
    %30 = tpu.matmul %28, %29, %cst_20 {dimension_numbers = #tpu.dot_dimension_numbers<[1], [0], [0], [1], [0, 0, 1, 1], [], []>} : vector<384x256xbf16>, vector<256x256xbf16>, vector<384x256xf32> -> vector<384x256xf32>
    %c0_21 = arith.constant 0 : index
    %c0_22 = arith.constant 0 : index
    %31 = vector.load %arg9[%c0_21, %c0_22] : memref<1x256xf32, #tpu.memory_space<vmem>>, vector<1x256xf32>
    %32 = vector.broadcast %31 : vector<1x256xf32> to vector<384x256xf32>
    %33 = arith.addf %30, %32 : vector<384x256xf32>
    %34 = arith.truncf %33 : vector<384x256xf32> to vector<384x256xbf16>
    %cst_23 = arith.constant 0.000000e+00 : bf16
    %35 = vector.broadcast %cst_23 : bf16 to vector<384x256xbf16>
    %36 = arith.maximumf %34, %35 : vector<384x256xbf16>
    %c0_24 = arith.constant 0 : index
    %c0_25 = arith.constant 0 : index
    %37 = vector.load %arg10[%c0_24, %c0_25] : memref<256x256xbf16, #tpu.memory_space<vmem>>, vector<256x256xbf16>
    %cst_26 = arith.constant dense<0.000000e+00> : vector<384x256xf32>
    %38 = tpu.matmul %36, %37, %cst_26 {dimension_numbers = #tpu.dot_dimension_numbers<[1], [0], [0], [1], [0, 0, 1, 1], [], []>} : vector<384x256xbf16>, vector<256x256xbf16>, vector<384x256xf32> -> vector<384x256xf32>
    %c0_27 = arith.constant 0 : index
    %c0_28 = arith.constant 0 : index
    %39 = vector.load %arg11[%c0_27, %c0_28] : memref<1x256xf32, #tpu.memory_space<vmem>>, vector<1x256xf32>
    %40 = vector.broadcast %39 : vector<1x256xf32> to vector<384x256xf32>
    %41 = arith.addf %38, %40 : vector<384x256xf32>
    %42 = arith.truncf %41 : vector<384x256xf32> to vector<384x256xbf16>
    %cst_29 = arith.constant 0.000000e+00 : bf16
    %43 = vector.broadcast %cst_29 : bf16 to vector<384x256xbf16>
    %44 = arith.maximumf %42, %43 : vector<384x256xbf16>
    %c0_30 = arith.constant 0 : index
    %c0_31 = arith.constant 0 : index
    %45 = vector.load %arg12[%c0_30, %c0_31] : memref<256x256xbf16, #tpu.memory_space<vmem>>, vector<256x256xbf16>
    %cst_32 = arith.constant dense<0.000000e+00> : vector<384x256xf32>
    %46 = tpu.matmul %44, %45, %cst_32 {dimension_numbers = #tpu.dot_dimension_numbers<[1], [0], [0], [1], [0, 0, 1, 1], [], []>} : vector<384x256xbf16>, vector<256x256xbf16>, vector<384x256xf32> -> vector<384x256xf32>
    %47 = arith.extf %5 : vector<384x256xbf16> to vector<384x256xf32>
    %48 = arith.addf %46, %47 : vector<384x256xf32>
    %c0_33 = arith.constant 0 : index
    %c0_34 = arith.constant 0 : index
    %49 = vector.load %arg13[%c0_33, %c0_34] : memref<1x256xf32, #tpu.memory_space<vmem>>, vector<1x256xf32>
    %50 = vector.broadcast %49 : vector<1x256xf32> to vector<384x256xf32>
    %51 = arith.addf %48, %50 : vector<384x256xf32>
    %52 = arith.truncf %51 : vector<384x256xf32> to vector<384x256xbf16>
    %cst_35 = arith.constant 0.000000e+00 : bf16
    %53 = vector.broadcast %cst_35 : bf16 to vector<384x256xbf16>
    %54 = arith.maximumf %52, %53 : vector<384x256xbf16>
    %c0_36 = arith.constant 0 : index
    %c0_37 = arith.constant 0 : index
    %55 = vector.load %arg14[%c0_36, %c0_37] : memref<256x256xbf16, #tpu.memory_space<vmem>>, vector<256x256xbf16>
    %cst_38 = arith.constant dense<0.000000e+00> : vector<384x256xf32>
    %56 = tpu.matmul %54, %55, %cst_38 {dimension_numbers = #tpu.dot_dimension_numbers<[1], [0], [0], [1], [0, 0, 1, 1], [], []>} : vector<384x256xbf16>, vector<256x256xbf16>, vector<384x256xf32> -> vector<384x256xf32>
    %c0_39 = arith.constant 0 : index
    %c0_40 = arith.constant 0 : index
    %57 = vector.load %arg15[%c0_39, %c0_40] : memref<1x256xf32, #tpu.memory_space<vmem>>, vector<1x256xf32>
    %58 = vector.broadcast %57 : vector<1x256xf32> to vector<384x256xf32>
    %59 = arith.addf %56, %58 : vector<384x256xf32>
    %60 = arith.truncf %59 : vector<384x256xf32> to vector<384x256xbf16>
    %cst_41 = arith.constant 0.000000e+00 : bf16
    %61 = vector.broadcast %cst_41 : bf16 to vector<384x256xbf16>
    %62 = arith.maximumf %60, %61 : vector<384x256xbf16>
    %c0_42 = arith.constant 0 : index
    %c0_43 = arith.constant 0 : index
    %63 = vector.load %arg16[%c0_42, %c0_43] : memref<256x256xbf16, #tpu.memory_space<vmem>>, vector<256x256xbf16>
    %cst_44 = arith.constant dense<0.000000e+00> : vector<384x256xf32>
    %64 = tpu.matmul %62, %63, %cst_44 {dimension_numbers = #tpu.dot_dimension_numbers<[1], [0], [0], [1], [0, 0, 1, 1], [], []>} : vector<384x256xbf16>, vector<256x256xbf16>, vector<384x256xf32> -> vector<384x256xf32>
    %c0_45 = arith.constant 0 : index
    %c0_46 = arith.constant 0 : index
    %65 = vector.load %arg17[%c0_45, %c0_46] : memref<1x256xf32, #tpu.memory_space<vmem>>, vector<1x256xf32>
    %66 = vector.broadcast %65 : vector<1x256xf32> to vector<384x256xf32>
    %67 = arith.addf %64, %66 : vector<384x256xf32>
    %68 = arith.truncf %67 : vector<384x256xf32> to vector<384x256xbf16>
    %cst_47 = arith.constant 0.000000e+00 : bf16
    %69 = vector.broadcast %cst_47 : bf16 to vector<384x256xbf16>
    %70 = arith.maximumf %68, %69 : vector<384x256xbf16>
    %c0_48 = arith.constant 0 : index
    %c0_49 = arith.constant 0 : index
    %71 = vector.load %arg18[%c0_48, %c0_49] : memref<256x4xbf16, #tpu.memory_space<vmem>>, vector<256x4xbf16>
    %cst_50 = arith.constant dense<0.000000e+00> : vector<384x4xf32>
    %72 = tpu.matmul %70, %71, %cst_50 {dimension_numbers = #tpu.dot_dimension_numbers<[1], [0], [0], [1], [0, 0, 1, 1], [], []>} : vector<384x256xbf16>, vector<256x4xbf16>, vector<384x4xf32> -> vector<384x4xf32>
    %c0_51 = arith.constant 0 : index
    %c0_52 = arith.constant 0 : index
    %73 = vector.load %arg19[%c0_51, %c0_52] : memref<1x4xf32, #tpu.memory_space<vmem>>, vector<1x4xf32>
    %74 = vector.broadcast %73 : vector<1x4xf32> to vector<384x4xf32>
    %75 = arith.addf %72, %74 : vector<384x4xf32>
    %c0_53 = arith.constant 0 : index
    %c0_54 = arith.constant 0 : index
    %76 = vector.load %arg20[%c0_53, %c0_54] : memref<384x4xf32, #tpu.memory_space<vmem>>, vector<384x4xf32>
    tpu.vector_store %arg20[%c0_53, %c0_54], %75 {strides = array<i32>} : memref<384x4xf32, #tpu.memory_space<vmem>>, vector<384x4xf32>,
    return
  }
  func.func @transform_0(%arg0: i32) -> (i32, i32) {
    %c0_i32 = arith.constant 0 : i32
    %c0_i32_0 = arith.constant 0 : i32
    return %arg0, %c0_i32 : i32, i32
  }
  func.func @transform_1(%arg0: i32) -> (i32, i32) {
    %c0_i32 = arith.constant 0 : i32
    %c0_i32_0 = arith.constant 0 : i32
    %c0_i32_1 = arith.constant 0 : i32
    return %c0_i32, %c0_i32_0 : i32, i32
  }
  func.func @transform_2(%arg0: i32) -> (i32, i32) {
    %c0_i32 = arith.constant 0 : i32
    %c0_i32_0 = arith.constant 0 : i32
    %c0_i32_1 = arith.constant 0 : i32
    return %c0_i32, %c0_i32_0 : i32, i32
  }
  func.func @transform_3(%arg0: i32) -> (i32, i32) {
    %c0_i32 = arith.constant 0 : i32
    %c0_i32_0 = arith.constant 0 : i32
    %c0_i32_1 = arith.constant 0 : i32
    return %c0_i32, %c0_i32_0 : i32, i32
  }
  func.func @transform_4(%arg0: i32) -> (i32, i32) {
    %c0_i32 = arith.constant 0 : i32
    %c0_i32_0 = arith.constant 0 : i32
    %c0_i32_1 = arith.constant 0 : i32
    return %c0_i32, %c0_i32_0 : i32, i32
  }
  func.func @transform_5(%arg0: i32) -> (i32, i32) {
    %c0_i32 = arith.constant 0 : i32
    %c0_i32_0 = arith.constant 0 : i32
    %c0_i32_1 = arith.constant 0 : i32
    return %c0_i32, %c0_i32_0 : i32, i32
  }
  func.func @transform_6(%arg0: i32) -> (i32, i32) {
    %c0_i32 = arith.constant 0 : i32
    %c0_i32_0 = arith.constant 0 : i32
    %c0_i32_1 = arith.constant 0 : i32
    return %c0_i32, %c0_i32_0 : i32, i32
  }
  func.func @transform_7(%arg0: i32) -> (i32, i32) {
    %c0_i32 = arith.constant 0 : i32
    %c0_i32_0 = arith.constant 0 : i32
    %c0_i32_1 = arith.constant 0 : i32
    return %c0_i32, %c0_i32_0 : i32, i32
  }
  func.func @transform_8(%arg0: i32) -> (i32, i32) {
    %c0_i32 = arith.constant 0 : i32
    %c0_i32_0 = arith.constant 0 : i32
    %c0_i32_1 = arith.constant 0 : i32
    return %c0_i32, %c0_i32_0 : i32, i32
  }
  func.func @transform_9(%arg0: i32) -> (i32, i32) {
    %c0_i32 = arith.constant 0 : i32
    %c0_i32_0 = arith.constant 0 : i32
    %c0_i32_1 = arith.constant 0 : i32
    return %c0_i32, %c0_i32_0 : i32, i32
  }
  func.func @transform_10(%arg0: i32) -> (i32, i32) {
    %c0_i32 = arith.constant 0 : i32
    %c0_i32_0 = arith.constant 0 : i32
    %c0_i32_1 = arith.constant 0 : i32
    return %c0_i32, %c0_i32_0 : i32, i32
  }
  func.func @transform_11(%arg0: i32) -> (i32, i32) {
    %c0_i32 = arith.constant 0 : i32
    %c0_i32_0 = arith.constant 0 : i32
    %c0_i32_1 = arith.constant 0 : i32
    return %c0_i32, %c0_i32_0 : i32, i32
  }
  func.func @transform_12(%arg0: i32) -> (i32, i32) {
    %c0_i32 = arith.constant 0 : i32
    %c0_i32_0 = arith.constant 0 : i32
    %c0_i32_1 = arith.constant 0 : i32
    return %c0_i32, %c0_i32_0 : i32, i32
  }
  func.func @transform_13(%arg0: i32) -> (i32, i32) {
    %c0_i32 = arith.constant 0 : i32
    %c0_i32_0 = arith.constant 0 : i32
    %c0_i32_1 = arith.constant 0 : i32
    return %c0_i32, %c0_i32_0 : i32, i32
  }
  func.func @transform_14(%arg0: i32) -> (i32, i32) {
    %c0_i32 = arith.constant 0 : i32
    %c0_i32_0 = arith.constant 0 : i32
    %c0_i32_1 = arith.constant 0 : i32
    return %c0_i32, %c0_i32_0 : i32, i32
  }
  func.func @transform_15(%arg0: i32) -> (i32, i32) {
    %c0_i32 = arith.constant 0 : i32
    %c0_i32_0 = arith.constant 0 : i32
    %c0_i32_1 = arith.constant 0 : i32
    return %c0_i32, %c0_i32_0 : i32, i32
  }
  func.func @transform_16(%arg0: i32) -> (i32, i32) {
    %c0_i32 = arith.constant 0 : i32
    %c0_i32_0 = arith.constant 0 : i32
    %c0_i32_1 = arith.constant 0 : i32
    return %c0_i32, %c0_i32_0 : i32, i32
  }
  func.func @transform_17(%arg0: i32) -> (i32, i32) {
    %c0_i32 = arith.constant 0 : i32
    %c0_i32_0 = arith.constant 0 : i32
    %c0_i32_1 = arith.constant 0 : i32
    return %c0_i32, %c0_i32_0 : i32, i32
  }
  func.func @transform_18(%arg0: i32) -> (i32, i32) {
    %c0_i32 = arith.constant 0 : i32
    %c0_i32_0 = arith.constant 0 : i32
    %c0_i32_1 = arith.constant 0 : i32
    return %c0_i32, %c0_i32_0 : i32, i32
  }
  func.func @transform_19(%arg0: i32) -> (i32, i32) {
    %c0_i32 = arith.constant 0 : i32
    %c0_i32_0 = arith.constant 0 : i32
    return %arg0, %c0_i32 : i32, i32
  }
}

</mosaic_0001>

<llo_original>
// kernel: tpu_custom_call.1
$region0: #{tpu_custom_call.1}
  #allocation0 [shape = 'u32[]', space=smem, size = 0x4, offset = 0x4, fixed_abs, tag = 'smem constant byte address 0x4 - core index']
  #allocation1 [shape = 'u32[144,128]{1,0:T(1,128)}', space=vmem, size = 0x12000, scoped, tag = 'internal scratch']
  %s0 = inlined_call_operand.vmem [shape: f32[768,3], index: 0, kind: input, shape index: {}]
  %s1 = inlined_call_operand.vmem [shape: bf16[3,512], index: 1, kind: input, shape index: {}]
  %s2 = inlined_call_operand.vmem [shape: f32[1,256], index: 2, kind: input, shape index: {}]
  %s3 = inlined_call_operand.vmem [shape: bf16[256,256], index: 3, kind: input, shape index: {}]
  %s4 = inlined_call_operand.vmem [shape: f32[1,256], index: 4, kind: input, shape index: {}]
  %s5 = inlined_call_operand.vmem [shape: bf16[256,256], index: 5, kind: input, shape index: {}]
  %s6 = inlined_call_operand.vmem [shape: f32[1,256], index: 6, kind: input, shape index: {}]
  %s7 = inlined_call_operand.vmem [shape: bf16[256,256], index: 7, kind: input, shape index: {}]
  %s8 = inlined_call_operand.vmem [shape: f32[1,256], index: 8, kind: input, shape index: {}]
  %s9 = inlined_call_operand.hbm [shape: bf16[256,256], index: 9, kind: input, shape index: {}]
  %s10 = inlined_call_operand.vmem [shape: f32[1,256], index: 10, kind: input, shape index: {}]
  %s11 = inlined_call_operand.hbm [shape: bf16[256,256], index: 11, kind: input, shape index: {}]
  %s12 = inlined_call_operand.vmem [shape: f32[1,256], index: 12, kind: input, shape index: {}]
  %s13 = inlined_call_operand.hbm [shape: bf16[256,256], index: 13, kind: input, shape index: {}]
  %s14 = inlined_call_operand.vmem [shape: f32[1,256], index: 14, kind: input, shape index: {}]
  %s15 = inlined_call_operand.hbm [shape: bf16[256,256], index: 15, kind: input, shape index: {}]
  %s16 = inlined_call_operand.vmem [shape: f32[1,256], index: 16, kind: input, shape index: {}]
  %s17 = inlined_call_operand.vmem [shape: bf16[256,4], index: 17, kind: input, shape index: {}]
  %s18 = inlined_call_operand.vmem [shape: f32[1,4], index: 18, kind: input, shape index: {}]
  %s19 = inlined_call_operand.vmem [shape: f32[768,4], index: 19, kind: output, shape index: {}]
  %s20 = sld [smem:[#allocation0]]
  $region125: #{tpu_custom_call.1} parent=0
    _
  %s22 = ssub.s32 1, %s20
  %s23 = scalar_select 0, %s22, %s20
  $region1: #{tpu_custom_call.1} parent=0
    #allocation2 [shape = 'u8[131072]{0}', space=vmem, size = 0x20000, scoped, tag = 'input window, operand 9, single buffered']
    #allocation3 [shape = 's32[2]{0}', space=sflag, size = 0x8, scoped, tag = 'scoped memory for tpu_custom_call.1']
    #allocation4 [shape = 'u8[131072]{0}', space=vmem, size = 0x20000, scoped, tag = 'input window, operand 11, single buffered']
    #allocation5 [shape = 's32[1]{0}', space=sflag, size = 0x4, scoped, tag = 'scoped memory for tpu_custom_call.1']
    #allocation6 [shape = 'u8[131072]{0}', space=vmem, size = 0x20000, scoped, tag = 'input window, operand 13, single buffered']
    #allocation7 [shape = 'u8[131072]{0}', space=vmem, size = 0x20000, scoped, tag = 'input window, operand 15, single buffered']
    #allocation8 [shape = 's32[1]{0}', space=sflag, size = 0x4, scoped, tag = 'scoped memory for tpu_custom_call.1']
    %24 = vsyncpa [#allocation3], 0
    %25 = vsyncpa [#allocation5], 0
    %26 = vsyncpa [#allocation8], 0
    loop: start=0, step=1, limit=4
    $region2: #{tpu_custom_call.1} parent=1 // loop_pre_header
      _
    $region3: #{tpu_custom_call.1} parent=1 // loop_header
      %s28 = sphi 0, %s32
      %p29 = scmp.ge.s32.totalorder %s28, 4
      %s38 = sphi 0, %s40
      %s41 = sphi 0, %s38
      %s42 = sphi 0, %s41
      %s58 = sphi 0, %s42
      %s62 = sphi 0, %s62
      %s64 = sphi 0, %s62
      %s65 = sphi 0, %s64
      %s79 = sphi 0, %s65
      %s83 = sphi 0, %s83
      %s85 = sphi 0, %s83
      %s86 = sphi 0, %s85
      %s100 = sphi 0, %s86
      %s104 = sphi 0, %s104
      %s106 = sphi 0, %s104
      %s107 = sphi 0, %s106
      %s121 = sphi 0, %s107
      %s125 = sphi 0, %s125
      %s127 = sphi 0, %s125
      %s128 = sphi 0, %s127
      %s142 = sphi 0, %s128
      %s146 = sphi 0, %s146
      %s148 = sphi 0, %s146
      %s149 = sphi 0, %s148
      %s163 = sphi 0, %s149
      %s167 = sphi 0, %s167
      %s169 = sphi 0, %s167
      %s170 = sphi 0, %s169
      %s184 = sphi 0, %s170
      %s188 = sphi 0, %s188
      %s190 = sphi 0, %s188
      %s191 = sphi 0, %s190
      %s205 = sphi 0, %s191
      %s209 = sphi 0, %s209
      %s211 = sphi 0, %s209
      %s212 = sphi 0, %s211
      %s226 = sphi 0, %s212
      %s230 = sphi 0, %s230
      %s232 = sphi 0, %s230
      %s233 = sphi 0, %s232
      %s247 = sphi 0, %s233
      %s251 = sphi 0, %s251
      %s253 = sphi 0, %s251
      %s254 = sphi 0, %s253
      %s268 = sphi 0, %s254
      %s272 = sphi 0, %s272
      %s274 = sphi 0, %s272
      %s275 = sphi 0, %s274
      %s289 = sphi 0, %s275
      %s293 = sphi 0, %s293
      %s295 = sphi 0, %s293
      %s296 = sphi 0, %s295
      %s310 = sphi 0, %s296
      %s314 = sphi 0, %s314
      %s316 = sphi 0, %s314
      %s317 = sphi 0, %s316
      %s331 = sphi 0, %s317
      %s335 = sphi 0, %s335
      %s337 = sphi 0, %s335
      %s338 = sphi 0, %s337
      %s352 = sphi 0, %s338
      %s356 = sphi 0, %s356
      %s358 = sphi 0, %s356
      %s359 = sphi 0, %s358
      %s373 = sphi 0, %s359
      %s377 = sphi 0, %s377
      %s379 = sphi 0, %s377
      %s380 = sphi 0, %s379
      %s394 = sphi 0, %s380
      %s398 = sphi 0, %s398
      %s400 = sphi 0, %s398
      %s401 = sphi 0, %s400
      %s415 = sphi 0, %s401
      %s419 = sphi 0, %s419
      %s421 = sphi 0, %s419
      %s422 = sphi 0, %s421
      %s436 = sphi 0, %s422
      %s442 = sphi 0, %s444
      %s445 = sphi 0, %s442
      %s446 = sphi 0, %s445
      %s462 = sphi 0, %s446
    $region4: #{tpu_custom_call.1} parent=1 // loop_header_branch
      %31 = sbr.rel (%p29) target = $region8
    $region5: #{tpu_custom_call.1} parent=1 // loop_body
      %s33 = ssub.s32 %s28, 1
      %s34 = ssub.s32 %s28, 2
      %s35 = sadd.s32 %s28, 1
      %s36 = ssub.s32 %s28, %s35
      %p37 = scmp.eq.s32.totalorder %s36, 0
      %s39 = sadd.s32 %s38, 1
      %s40 = scalar_select %p37, %s38, %s39
      %p43 = pneg %p37
      %p44 = scmp.eq.s32.totalorder %s28, 1
      %p45 = por %p43, %p44
      %p46 = scmp.ne.s32.totalorder %s38, %s41
      %p47 = scmp.eq.s32.totalorder %s28, 0
      %p48 = por %p46, %p47
      %p49 = scmp.ne.s32.totalorder %s38, %s41
      %p50 = scmp.eq.s32.totalorder %s33, 1
      %p51 = por %p49, %p50
      %p52 = scmp.ne.s32.totalorder %s41, %s42
      %p53 = scmp.eq.s32.totalorder %s33, 0
      %p54 = por %p52, %p53
      %p55 = scmp.ne.s32.totalorder %s41, %s42
      %p56 = scmp.eq.s32.totalorder %s34, 1
      %p57 = por %p55, %p56
      %p59 = scmp.ne.s32.totalorder %s42, %s58
      %p60 = scmp.eq.s32.totalorder %s34, 0
      %p61 = por %p59, %p60
      %s63 = sadd.s32 %s62, 1
      %p66 = scmp.eq.s32.totalorder %s28, 1
      %p67 = scmp.ne.s32.totalorder %s62, %s64
      %p68 = scmp.eq.s32.totalorder %s28, 0
      %p69 = por %p67, %p68
      %p70 = scmp.ne.s32.totalorder %s62, %s64
      %p71 = scmp.eq.s32.totalorder %s33, 1
      %p72 = por %p70, %p71
      %p73 = scmp.ne.s32.totalorder %s64, %s65
      %p74 = scmp.eq.s32.totalorder %s33, 0
      %p75 = por %p73, %p74
      %p76 = scmp.ne.s32.totalorder %s64, %s65
      %p77 = scmp.eq.s32.totalorder %s34, 1
      %p78 = por %p76, %p77
      %p80 = scmp.ne.s32.totalorder %s65, %s79
      %p81 = scmp.eq.s32.totalorder %s34, 0
      %p82 = por %p80, %p81
      %s84 = sadd.s32 %s83, 1
      %p87 = scmp.eq.s32.totalorder %s28, 1
      %p88 = scmp.ne.s32.totalorder %s83, %s85
      %p89 = scmp.eq.s32.totalorder %s28, 0
      %p90 = por %p88, %p89
      %p91 = scmp.ne.s32.totalorder %s83, %s85
      %p92 = scmp.eq.s32.totalorder %s33, 1
      %p93 = por %p91, %p92
      %p94 = scmp.ne.s32.totalorder %s85, %s86
      %p95 = scmp.eq.s32.totalorder %s33, 0
      %p96 = por %p94, %p95
      %p97 = scmp.ne.s32.totalorder %s85, %s86
      %p98 = scmp.eq.s32.totalorder %s34, 1
      %p99 = por %p97, %p98
      %p101 = scmp.ne.s32.totalorder %s86, %s100
      %p102 = scmp.eq.s32.totalorder %s34, 0
      %p103 = por %p101, %p102
      %s105 = sadd.s32 %s104, 1
      %p108 = scmp.eq.s32.totalorder %s28, 1
      %p109 = scmp.ne.s32.totalorder %s104, %s106
      %p110 = scmp.eq.s32.totalorder %s28, 0
      %p111 = por %p109, %p110
      %p112 = scmp.ne.s32.totalorder %s104, %s106
      %p113 = scmp.eq.s32.totalorder %s33, 1
      %p114 = por %p112, %p113
      %p115 = scmp.ne.s32.totalorder %s106, %s107
      %p116 = scmp.eq.s32.totalorder %s33, 0
      %p117 = por %p115, %p116
      %p118 = scmp.ne.s32.totalorder %s106, %s107
      %p119 = scmp.eq.s32.totalorder %s34, 1
      %p120 = por %p118, %p119
      %p122 = scmp.ne.s32.totalorder %s107, %s121
      %p123 = scmp.eq.s32.totalorder %s34, 0
      %p124 = por %p122, %p123
      %s126 = sadd.s32 %s125, 1
      %p129 = scmp.eq.s32.totalorder %s28, 1
      %p130 = scmp.ne.s32.totalorder %s125, %s127
      %p131 = scmp.eq.s32.totalorder %s28, 0
      %p132 = por %p130, %p131
      %p133 = scmp.ne.s32.totalorder %s125, %s127
      %p134 = scmp.eq.s32.totalorder %s33, 1
      %p135 = por %p133, %p134
      %p136 = scmp.ne.s32.totalorder %s127, %s128
      %p137 = scmp.eq.s32.totalorder %s33, 0
      %p138 = por %p136, %p137
      %p139 = scmp.ne.s32.totalorder %s127, %s128
      %p140 = scmp.eq.s32.totalorder %s34, 1
      %p141 = por %p139, %p140
      %p143 = scmp.ne.s32.totalorder %s128, %s142
      %p144 = scmp.eq.s32.totalorder %s34, 0
      %p145 = por %p143, %p144
      %s147 = sadd.s32 %s146, 1
      %p150 = scmp.eq.s32.totalorder %s28, 1
      %p151 = scmp.ne.s32.totalorder %s146, %s148
      %p152 = scmp.eq.s32.totalorder %s28, 0
      %p153 = por %p151, %p152
      %p154 = scmp.ne.s32.totalorder %s146, %s148
      %p155 = scmp.eq.s32.totalorder %s33, 1
      %p156 = por %p154, %p155
      %p157 = scmp.ne.s32.totalorder %s148, %s149
      %p158 = scmp.eq.s32.totalorder %s33, 0
      %p159 = por %p157, %p158
      %p160 = scmp.ne.s32.totalorder %s148, %s149
      %p161 = scmp.eq.s32.totalorder %s34, 1
      %p162 = por %p160, %p161
      %p164 = scmp.ne.s32.totalorder %s149, %s163
      %p165 = scmp.eq.s32.totalorder %s34, 0
      %p166 = por %p164, %p165
      %s168 = sadd.s32 %s167, 1
      %p171 = scmp.eq.s32.totalorder %s28, 1
      %p172 = scmp.ne.s32.totalorder %s167, %s169
      %p173 = scmp.eq.s32.totalorder %s28, 0
      %p174 = por %p172, %p173
      %p175 = scmp.ne.s32.totalorder %s167, %s169
      %p176 = scmp.eq.s32.totalorder %s33, 1
      %p177 = por %p175, %p176
      %p178 = scmp.ne.s32.totalorder %s169, %s170
      %p179 = scmp.eq.s32.totalorder %s33, 0
      %p180 = por %p178, %p179
      %p181 = scmp.ne.s32.totalorder %s169, %s170
      %p182 = scmp.eq.s32.totalorder %s34, 1
      %p183 = por %p181, %p182
      %p185 = scmp.ne.s32.totalorder %s170, %s184
      %p186 = scmp.eq.s32.totalorder %s34, 0
      %p187 = por %p185, %p186
      %s189 = sadd.s32 %s188, 1
      %p192 = scmp.eq.s32.totalorder %s28, 1
      %p193 = scmp.ne.s32.totalorder %s188, %s190
      %p194 = scmp.eq.s32.totalorder %s28, 0
      %p195 = por %p193, %p194
      %p196 = scmp.ne.s32.totalorder %s188, %s190
      %p197 = scmp.eq.s32.totalorder %s33, 1
      %p198 = por %p196, %p197
      %p199 = scmp.ne.s32.totalorder %s190, %s191
      %p200 = scmp.eq.s32.totalorder %s33, 0
      %p201 = por %p199, %p200
      %p202 = scmp.ne.s32.totalorder %s190, %s191
      %p203 = scmp.eq.s32.totalorder %s34, 1
      %p204 = por %p202, %p203
      %p206 = scmp.ne.s32.totalorder %s191, %s205
      %p207 = scmp.eq.s32.totalorder %s34, 0
      %p208 = por %p206, %p207
      %s210 = sadd.s32 %s209, 1
      %p213 = scmp.eq.s32.totalorder %s28, 1
      %p214 = scmp.ne.s32.totalorder %s209, %s211
      %p215 = scmp.eq.s32.totalorder %s28, 0
      %p216 = por %p214, %p215
      %p217 = scmp.ne.s32.totalorder %s209, %s211
      %p218 = scmp.eq.s32.totalorder %s33, 1
      %p219 = por %p217, %p218
      %p220 = scmp.ne.s32.totalorder %s211, %s212
      %p221 = scmp.eq.s32.totalorder %s33, 0
      %p222 = por %p220, %p221
      %p223 = scmp.ne.s32.totalorder %s211, %s212
      %p224 = scmp.eq.s32.totalorder %s34, 1
      %p225 = por %p223, %p224
      %p227 = scmp.ne.s32.totalorder %s212, %s226
      %p228 = scmp.eq.s32.totalorder %s34, 0
      %p229 = por %p227, %p228
      %s231 = sadd.s32 %s230, 1
      %p234 = scmp.eq.s32.totalorder %s28, 1
      %p235 = scmp.ne.s32.totalorder %s230, %s232
      %p236 = scmp.eq.s32.totalorder %s28, 0
      %p237 = por %p235, %p236
      %p238 = scmp.ne.s32.totalorder %s230, %s232
      %p239 = scmp.eq.s32.totalorder %s33, 1
      %p240 = por %p238, %p239
      %p241 = scmp.ne.s32.totalorder %s232, %s233
      %p242 = scmp.eq.s32.totalorder %s33, 0
      %p243 = por %p241, %p242
      %p244 = scmp.ne.s32.totalorder %s232, %s233
      %p245 = scmp.eq.s32.totalorder %s34, 1
      %p246 = por %p244, %p245
      %p248 = scmp.ne.s32.totalorder %s233, %s247
      %p249 = scmp.eq.s32.totalorder %s34, 0
      %p250 = por %p248, %p249
      %s252 = sadd.s32 %s251, 1
      %p255 = scmp.eq.s32.totalorder %s28, 1
      %p256 = scmp.ne.s32.totalorder %s251, %s253
      %p257 = scmp.eq.s32.totalorder %s28, 0
      %p258 = por %p256, %p257
      %p259 = scmp.ne.s32.totalorder %s251, %s253
      %p260 = scmp.eq.s32.totalorder %s33, 1
      %p261 = por %p259, %p260
      %p262 = scmp.ne.s32.totalorder %s253, %s254
      %p263 = scmp.eq.s32.totalorder %s33, 0
      %p264 = por %p262, %p263
      %p265 = scmp.ne.s32.totalorder %s253, %s254
      %p266 = scmp.eq.s32.totalorder %s34, 1
      %p267 = por %p265, %p266
      %p269 = scmp.ne.s32.totalorder %s254, %s268
      %p270 = scmp.eq.s32.totalorder %s34, 0
      %p271 = por %p269, %p270
      %s273 = sadd.s32 %s272, 1
      %p276 = scmp.eq.s32.totalorder %s28, 1
      %p277 = scmp.ne.s32.totalorder %s272, %s274
      %p278 = scmp.eq.s32.totalorder %s28, 0
      %p279 = por %p277, %p278
      %p280 = scmp.ne.s32.totalorder %s272, %s274
      %p281 = scmp.eq.s32.totalorder %s33, 1
      %p282 = por %p280, %p281
      %p283 = scmp.ne.s32.totalorder %s274, %s275
      %p284 = scmp.eq.s32.totalorder %s33, 0
      %p285 = por %p283, %p284
      %p286 = scmp.ne.s32.totalorder %s274, %s275
      %p287 = scmp.eq.s32.totalorder %s34, 1
      %p288 = por %p286, %p287
      %p290 = scmp.ne.s32.totalorder %s275, %s289
      %p291 = scmp.eq.s32.totalorder %s34, 0
      %p292 = por %p290, %p291
      %s294 = sadd.s32 %s293, 1
      %p297 = scmp.eq.s32.totalorder %s28, 1
      %p298 = scmp.ne.s32.totalorder %s293, %s295
      %p299 = scmp.eq.s32.totalorder %s28, 0
      %p300 = por %p298, %p299
      %p301 = scmp.ne.s32.totalorder %s293, %s295
      %p302 = scmp.eq.s32.totalorder %s33, 1
      %p303 = por %p301, %p302
      %p304 = scmp.ne.s32.totalorder %s295, %s296
      %p305 = scmp.eq.s32.totalorder %s33, 0
      %p306 = por %p304, %p305
      %p307 = scmp.ne.s32.totalorder %s295, %s296
      %p308 = scmp.eq.s32.totalorder %s34, 1
      %p309 = por %p307, %p308
      %p311 = scmp.ne.s32.totalorder %s296, %s310
      %p312 = scmp.eq.s32.totalorder %s34, 0
      %p313 = por %p311, %p312
      %s315 = sadd.s32 %s314, 1
      %p318 = scmp.eq.s32.totalorder %s28, 1
      %p319 = scmp.ne.s32.totalorder %s314, %s316
      %p320 = scmp.eq.s32.totalorder %s28, 0
      %p321 = por %p319, %p320
      %p322 = scmp.ne.s32.totalorder %s314, %s316
      %p323 = scmp.eq.s32.totalorder %s33, 1
      %p324 = por %p322, %p323
      %p325 = scmp.ne.s32.totalorder %s316, %s317
      %p326 = scmp.eq.s32.totalorder %s33, 0
      %p327 = por %p325, %p326
      %p328 = scmp.ne.s32.totalorder %s316, %s317
      %p329 = scmp.eq.s32.totalorder %s34, 1
      %p330 = por %p328, %p329
      %p332 = scmp.ne.s32.totalorder %s317, %s331
      %p333 = scmp.eq.s32.totalorder %s34, 0
      %p334 = por %p332, %p333
      %s336 = sadd.s32 %s335, 1
      %p339 = scmp.eq.s32.totalorder %s28, 1
      %p340 = scmp.ne.s32.totalorder %s335, %s337
      %p341 = scmp.eq.s32.totalorder %s28, 0
      %p342 = por %p340, %p341
      %p343 = scmp.ne.s32.totalorder %s335, %s337
      %p344 = scmp.eq.s32.totalorder %s33, 1
      %p345 = por %p343, %p344
      %p346 = scmp.ne.s32.totalorder %s337, %s338
      %p347 = scmp.eq.s32.totalorder %s33, 0
      %p348 = por %p346, %p347
      %p349 = scmp.ne.s32.totalorder %s337, %s338
      %p350 = scmp.eq.s32.totalorder %s34, 1
      %p351 = por %p349, %p350
      %p353 = scmp.ne.s32.totalorder %s338, %s352
      %p354 = scmp.eq.s32.totalorder %s34, 0
      %p355 = por %p353, %p354
      %s357 = sadd.s32 %s356, 1
      %p360 = scmp.eq.s32.totalorder %s28, 1
      %p361 = scmp.ne.s32.totalorder %s356, %s358
      %p362 = scmp.eq.s32.totalorder %s28, 0
      %p363 = por %p361, %p362
      %p364 = scmp.ne.s32.totalorder %s356, %s358
      %p365 = scmp.eq.s32.totalorder %s33, 1
      %p366 = por %p364, %p365
      %p367 = scmp.ne.s32.totalorder %s358, %s359
      %p368 = scmp.eq.s32.totalorder %s33, 0
      %p369 = por %p367, %p368
      %p370 = scmp.ne.s32.totalorder %s358, %s359
      %p371 = scmp.eq.s32.totalorder %s34, 1
      %p372 = por %p370, %p371
      %p374 = scmp.ne.s32.totalorder %s359, %s373
      %p375 = scmp.eq.s32.totalorder %s34, 0
      %p376 = por %p374, %p375
      %s378 = sadd.s32 %s377, 1
      %p381 = scmp.eq.s32.totalorder %s28, 1
      %p382 = scmp.ne.s32.totalorder %s377, %s379
      %p383 = scmp.eq.s32.totalorder %s28, 0
      %p384 = por %p382, %p383
      %p385 = scmp.ne.s32.totalorder %s377, %s379
      %p386 = scmp.eq.s32.totalorder %s33, 1
      %p387 = por %p385, %p386
      %p388 = scmp.ne.s32.totalorder %s379, %s380
      %p389 = scmp.eq.s32.totalorder %s33, 0
      %p390 = por %p388, %p389
      %p391 = scmp.ne.s32.totalorder %s379, %s380
      %p392 = scmp.eq.s32.totalorder %s34, 1
      %p393 = por %p391, %p392
      %p395 = scmp.ne.s32.totalorder %s380, %s394
      %p396 = scmp.eq.s32.totalorder %s34, 0
      %p397 = por %p395, %p396
      %s399 = sadd.s32 %s398, 1
      %p402 = scmp.eq.s32.totalorder %s28, 1
      %p403 = scmp.ne.s32.totalorder %s398, %s400
      %p404 = scmp.eq.s32.totalorder %s28, 0
      %p405 = por %p403, %p404
      %p406 = scmp.ne.s32.totalorder %s398, %s400
      %p407 = scmp.eq.s32.totalorder %s33, 1
      %p408 = por %p406, %p407
      %p409 = scmp.ne.s32.totalorder %s400, %s401
      %p410 = scmp.eq.s32.totalorder %s33, 0
      %p411 = por %p409, %p410
      %p412 = scmp.ne.s32.totalorder %s400, %s401
      %p413 = scmp.eq.s32.totalorder %s34, 1
      %p414 = por %p412, %p413
      %p416 = scmp.ne.s32.totalorder %s401, %s415
      %p417 = scmp.eq.s32.totalorder %s34, 0
      %p418 = por %p416, %p417
      %s420 = sadd.s32 %s419, 1
      %p423 = scmp.eq.s32.totalorder %s28, 1
      %p424 = scmp.ne.s32.totalorder %s419, %s421
      %p425 = scmp.eq.s32.totalorder %s28, 0
      %p426 = por %p424, %p425
      %p427 = scmp.ne.s32.totalorder %s419, %s421
      %p428 = scmp.eq.s32.totalorder %s33, 1
      %p429 = por %p427, %p428
      %p430 = scmp.ne.s32.totalorder %s421, %s422
      %p431 = scmp.eq.s32.totalorder %s33, 0
      %p432 = por %p430, %p431
      %p433 = scmp.ne.s32.totalorder %s421, %s422
      %p434 = scmp.eq.s32.totalorder %s34, 1
      %p435 = por %p433, %p434
      %p437 = scmp.ne.s32.totalorder %s422, %s436
      %p438 = scmp.eq.s32.totalorder %s34, 0
      %p439 = por %p437, %p438
      %s440 = ssub.s32 %s28, %s35
      %p441 = scmp.eq.s32.totalorder %s440, 0
      %s443 = sadd.s32 %s442, 1
      %s444 = scalar_select %p441, %s442, %s443
      %p447 = pneg %p441
      %p448 = scmp.eq.s32.totalorder %s28, 1
      %p449 = por %p447, %p448
      %p450 = scmp.ne.s32.totalorder %s442, %s445
      %p451 = scmp.eq.s32.totalorder %s28, 0
      %p452 = por %p450, %p451
      %p453 = scmp.ne.s32.totalorder %s442, %s445
      %p454 = scmp.eq.s32.totalorder %s33, 1
      %p455 = por %p453, %p454
      %p456 = scmp.ne.s32.totalorder %s445, %s446
      %p457 = scmp.eq.s32.totalorder %s33, 0
      %p458 = por %p456, %p457
      %p459 = scmp.ne.s32.totalorder %s445, %s446
      %p460 = scmp.eq.s32.totalorder %s34, 1
      %p461 = por %p459, %p460
      %p463 = scmp.ne.s32.totalorder %s446, %s462
      %p464 = scmp.eq.s32.totalorder %s34, 0
      %p465 = por %p463, %p464
      %p466 = scmp.le.s32.totalorder 1, %s28
      %p467 = scmp.lt.s32.totalorder %s28, 3
      %p468 = pnand %p466, %p467
      %p469 = pneg %p468
      // Predicated region
      $region9: #{tpu_custom_call.1} parent=5 // pred_check
        _
      $region10: #{tpu_custom_call.1} parent=5 // pred_check_branch
        %471 = sbr.rel (%p468) target = $region12
      $region11: #{tpu_custom_call.1} parent=5 // pred_region
        %s472 = ssub.s32 %s28, 1
        // Predicated region
        $region13: #{tpu_custom_call.1} parent=11 // pred_check
          %p473 = pneg %p75
        $region14: #{tpu_custom_call.1} parent=11 // pred_check_branch
          %475 = sbr.rel (%p473) target = $region16
        $region15: #{tpu_custom_call.1} parent=11 // pred_region
          _
        $region16: #{tpu_custom_call.1} parent=11 // pred_fallthru
          _
        // Predicated region
        $region17: #{tpu_custom_call.1} parent=11 // pred_check
          %p476 = pneg %p96
        $region18: #{tpu_custom_call.1} parent=11 // pred_check_branch
          %478 = sbr.rel (%p476) target = $region20
        $region19: #{tpu_custom_call.1} parent=11 // pred_region
          _
        $region20: #{tpu_custom_call.1} parent=11 // pred_fallthru
          _
        // Predicated region
        $region21: #{tpu_custom_call.1} parent=11 // pred_check
          %p479 = pneg %p117
        $region22: #{tpu_custom_call.1} parent=11 // pred_check_branch
          %481 = sbr.rel (%p479) target = $region24
        $region23: #{tpu_custom_call.1} parent=11 // pred_region
          _
        $region24: #{tpu_custom_call.1} parent=11 // pred_fallthru
          _
        // Predicated region
        $region25: #{tpu_custom_call.1} parent=11 // pred_check
          %p482 = pneg %p138
        $region26: #{tpu_custom_call.1} parent=11 // pred_check_branch
          %484 = sbr.rel (%p482) target = $region28
        $region27: #{tpu_custom_call.1} parent=11 // pred_region
          _
        $region28: #{tpu_custom_call.1} parent=11 // pred_fallthru
          _
        // Predicated region
        $region29: #{tpu_custom_call.1} parent=11 // pred_check
          %p485 = pneg %p159
        $region30: #{tpu_custom_call.1} parent=11 // pred_check_branch
          %487 = sbr.rel (%p485) target = $region32
        $region31: #{tpu_custom_call.1} parent=11 // pred_region
          _
        $region32: #{tpu_custom_call.1} parent=11 // pred_fallthru
          _
        // Predicated region
        $region33: #{tpu_custom_call.1} parent=11 // pred_check
          %p488 = pneg %p180
        $region34: #{tpu_custom_call.1} parent=11 // pred_check_branch
          %490 = sbr.rel (%p488) target = $region36
        $region35: #{tpu_custom_call.1} parent=11 // pred_region
          _
        $region36: #{tpu_custom_call.1} parent=11 // pred_fallthru
          _
        // Predicated region
        $region37: #{tpu_custom_call.1} parent=11 // pred_check
          %p491 = pneg %p201
        $region38: #{tpu_custom_call.1} parent=11 // pred_check_branch
          %493 = sbr.rel (%p491) target = $region40
        $region39: #{tpu_custom_call.1} parent=11 // pred_region
          _
        $region40: #{tpu_custom_call.1} parent=11 // pred_fallthru
          _
        // Predicated region
        $region41: #{tpu_custom_call.1} parent=11 // pred_check
          %p494 = pneg %p222
        $region42: #{tpu_custom_call.1} parent=11 // pred_check_branch
          %496 = sbr.rel (%p494) target = $region44
        $region43: #{tpu_custom_call.1} parent=11 // pred_region
          _
        $region44: #{tpu_custom_call.1} parent=11 // pred_fallthru
          _
        // Predicated region
        $region45: #{tpu_custom_call.1} parent=11 // pred_check
          %p497 = pneg %p243
        $region46: #{tpu_custom_call.1} parent=11 // pred_check_branch
          %499 = sbr.rel (%p497) target = $region48
        $region47: #{tpu_custom_call.1} parent=11 // pred_region
          %s501 = ssub.s32 4096, 4096
          %502 = vsyncadd [#allocation3], %s501
          %s503 = sshll.u32 [#allocation2], 4
          %s504 = int_to_ptr.vmem [resolvable:$true] %s503
          %509 = dma.hbm_to_vmem [thread:$0]  %s9, 4096, %s504, [#allocation3], 128, 128, 8
        $region48: #{tpu_custom_call.1} parent=11 // pred_fallthru
          _
        // Predicated region
        $region49: #{tpu_custom_call.1} parent=11 // pred_check
          %p510 = pneg %p264
        $region50: #{tpu_custom_call.1} parent=11 // pred_check_branch
          %512 = sbr.rel (%p510) target = $region52
        $region51: #{tpu_custom_call.1} parent=11 // pred_region
          _
        $region52: #{tpu_custom_call.1} parent=11 // pred_fallthru
          _
        // Predicated region
        $region53: #{tpu_custom_call.1} parent=11 // pred_check
          %p513 = pneg %p285
        $region54: #{tpu_custom_call.1} parent=11 // pred_check_branch
          %515 = sbr.rel (%p513) target = $region56
        $region55: #{tpu_custom_call.1} parent=11 // pred_region
          %s517 = ssub.s32 4096, 4096
          %518 = vsyncadd [#allocation5], %s517
          %s519 = sshll.u32 [#allocation4], 4
          %s520 = int_to_ptr.vmem [resolvable:$true] %s519
          %525 = dma.hbm_to_vmem [thread:$0]  %s11, 4096, %s520, [#allocation5], 128, 128, 8
        $region56: #{tpu_custom_call.1} parent=11 // pred_fallthru
          _
        // Predicated region
        $region57: #{tpu_custom_call.1} parent=11 // pred_check
          %p526 = pneg %p306
        $region58: #{tpu_custom_call.1} parent=11 // pred_check_branch
          %528 = sbr.rel (%p526) target = $region60
        $region59: #{tpu_custom_call.1} parent=11 // pred_region
          _
        $region60: #{tpu_custom_call.1} parent=11 // pred_fallthru
          _
        // Predicated region
        $region61: #{tpu_custom_call.1} parent=11 // pred_check
          %p529 = pneg %p327
        $region62: #{tpu_custom_call.1} parent=11 // pred_check_branch
          %531 = sbr.rel (%p529) target = $region64
        $region63: #{tpu_custom_call.1} parent=11 // pred_region
          %s533 = ssub.s32 4096, 4096
          %534 = vsyncadd [#allocation5], %s533
          %s535 = sshll.u32 [#allocation6], 4
          %s536 = int_to_ptr.vmem [resolvable:$true] %s535
          %541 = dma.hbm_to_vmem [thread:$0]  %s13, 4096, %s536, [#allocation5], 128, 128, 8
        $region64: #{tpu_custom_call.1} parent=11 // pred_fallthru
          _
        // Predicated region
        $region65: #{tpu_custom_call.1} parent=11 // pred_check
          %p542 = pneg %p348
        $region66: #{tpu_custom_call.1} parent=11 // pred_check_branch
          %544 = sbr.rel (%p542) target = $region68
        $region67: #{tpu_custom_call.1} parent=11 // pred_region
          _
        $region68: #{tpu_custom_call.1} parent=11 // pred_fallthru
          _
        // Predicated region
        $region69: #{tpu_custom_call.1} parent=11 // pred_check
          %p545 = pneg %p369
        $region70: #{tpu_custom_call.1} parent=11 // pred_check_branch
          %547 = sbr.rel (%p545) target = $region72
        $region71: #{tpu_custom_call.1} parent=11 // pred_region
          %s549 = ssub.s32 4096, 4096
          %550 = vsyncadd [#allocation8], %s549
          %s551 = sshll.u32 [#allocation7], 4
          %s552 = int_to_ptr.vmem [resolvable:$true] %s551
          %557 = dma.hbm_to_vmem [thread:$0]  %s15, 4096, %s552, [#allocation8], 128, 128, 8
        $region72: #{tpu_custom_call.1} parent=11 // pred_fallthru
          _
        // Predicated region
        $region73: #{tpu_custom_call.1} parent=11 // pred_check
          %p558 = pneg %p390
        $region74: #{tpu_custom_call.1} parent=11 // pred_check_branch
          %560 = sbr.rel (%p558) target = $region76
        $region75: #{tpu_custom_call.1} parent=11 // pred_region
          _
        $region76: #{tpu_custom_call.1} parent=11 // pred_fallthru
          _
        // Predicated region
        $region77: #{tpu_custom_call.1} parent=11 // pred_check
          %p561 = pneg %p411
        $region78: #{tpu_custom_call.1} parent=11 // pred_check_branch
          %563 = sbr.rel (%p561) target = $region80
        $region79: #{tpu_custom_call.1} parent=11 // pred_region
          _
        $region80: #{tpu_custom_call.1} parent=11 // pred_fallthru
          _
        // Predicated region
        $region81: #{tpu_custom_call.1} parent=11 // pred_check
          %p564 = pneg %p432
        $region82: #{tpu_custom_call.1} parent=11 // pred_check_branch
          %566 = sbr.rel (%p564) target = $region84
        $region83: #{tpu_custom_call.1} parent=11 // pred_region
          _
        $region84: #{tpu_custom_call.1} parent=11 // pred_fallthru
          _
      $region12: #{tpu_custom_call.1} parent=5 // pred_fallthru
        _
      %p567 = scmp.lt.s32.totalorder %s28, 2
      // Predicated region
      $region85: #{tpu_custom_call.1} parent=5 // pred_check
        %p568 = pneg %p567
      $region86: #{tpu_custom_call.1} parent=5 // pred_check_branch
        %570 = sbr.rel (%p568) target = $region88
      $region87: #{tpu_custom_call.1} parent=5 // pred_region
        // Predicated region
        $region89: #{tpu_custom_call.1} parent=87 // pred_check
          %p571 = pneg %p48
        $region90: #{tpu_custom_call.1} parent=87 // pred_check_branch
          %573 = sbr.rel (%p571) target = $region92
        $region91: #{tpu_custom_call.1} parent=87 // pred_region
          %s574 = smul.u32 48, %s28
          %p575 = scmp.lt.s32.totalorder %s574, 95
          %s576 = scalar_select %p575, %s574, 95
          %s577 = smul.addr %s576, 8
          %s578 = scalar_lea.vmem %s0, %s577
          %s579 = smul.u32 48, %s28
        $region92: #{tpu_custom_call.1} parent=87 // pred_fallthru
          _
      $region88: #{tpu_custom_call.1} parent=5 // pred_fallthru
        _
      %p580 = scmp.le.s32.totalorder 1, %s28
      %p581 = scmp.lt.s32.totalorder %s28, 3
      %p582 = pnand %p580, %p581
      %p583 = pneg %p582
      // Predicated region
      $region93: #{tpu_custom_call.1} parent=5 // pred_check
        _
      $region94: #{tpu_custom_call.1} parent=5 // pred_check_branch
        %585 = sbr.rel (%p582) target = $region96
      $region95: #{tpu_custom_call.1} parent=5 // pred_region
        %s586 = ssub.s32 %s28, 1
        // Predicated region
        $region97: #{tpu_custom_call.1} parent=95 // pred_check
          %p587 = pneg %p243
        $region98: #{tpu_custom_call.1} parent=95 // pred_check_branch
          %589 = sbr.rel (%p587) target = $region100
        $region99: #{tpu_custom_call.1} parent=95 // pred_region
          %590 = dma.done [#allocation3], 4096
        $region100: #{tpu_custom_call.1} parent=95 // pred_fallthru
          _
        // Predicated region
        $region101: #{tpu_custom_call.1} parent=95 // pred_check
          %p591 = pneg %p285
        $region102: #{tpu_custom_call.1} parent=95 // pred_check_branch
          %593 = sbr.rel (%p591) target = $region104
        $region103: #{tpu_custom_call.1} parent=95 // pred_region
          %594 = dma.done [#allocation5], 4096
        $region104: #{tpu_custom_call.1} parent=95 // pred_fallthru
          _
        // Predicated region
        $region105: #{tpu_custom_call.1} parent=95 // pred_check
          %p595 = pneg %p327
        $region106: #{tpu_custom_call.1} parent=95 // pred_check_branch
          %597 = sbr.rel (%p595) target = $region108
        $region107: #{tpu_custom_call.1} parent=95 // pred_region
          %598 = dma.done [#allocation5], 4096
        $region108: #{tpu_custom_call.1} parent=95 // pred_fallthru
          _
        // Predicated region
        $region109: #{tpu_custom_call.1} parent=95 // pred_check
          %p599 = pneg %p369
        $region110: #{tpu_custom_call.1} parent=95 // pred_check_branch
          %601 = sbr.rel (%p599) target = $region112
        $region111: #{tpu_custom_call.1} parent=95 // pred_region
          %602 = dma.done [#allocation8], 4096
        $region112: #{tpu_custom_call.1} parent=95 // pred_fallthru
          _
        %s603 = smul.u32 48, %s33
        %p604 = scmp.lt.s32.totalorder %s603, 95
        %s605 = scalar_select %p604, %s603, 95
        %s606 = smul.addr %s605, 8
        %s607 = scalar_lea.vmem %s0, %s606
        %p608 = pneg %p54
        %p609 = pneg %p51
        %p610 = pneg %p75
        %p611 = pneg %p72
        %p612 = pneg %p96
        %p613 = pneg %p93
        %p614 = pneg %p117
        %p615 = pneg %p114
        %p616 = pneg %p138
        %p617 = pneg %p135
        %p618 = pneg %p159
        %p619 = pneg %p156
        %p620 = pneg %p180
        %p621 = pneg %p177
        %p622 = pneg %p201
        %p623 = pneg %p198
        %p624 = pneg %p222
        %p625 = pneg %p219
        %p626 = pneg %p243
        %p627 = pneg %p240
        %p628 = pneg %p264
        %p629 = pneg %p261
        %p630 = pneg %p285
        %p631 = pneg %p282
        %p632 = pneg %p306
        %p633 = pneg %p303
        %p634 = pneg %p327
        %p635 = pneg %p324
        %p636 = pneg %p348
        %p637 = pneg %p345
        %p638 = pneg %p369
        %p639 = pneg %p366
        %p640 = pneg %p390
        %p641 = pneg %p387
        %p642 = pneg %p411
        %p643 = pneg %p408
        %p644 = pneg %p432
        %p645 = pneg %p429
        %p646 = pneg %p458
        %p647 = pneg %p455
        %s648 = smul.u32 48, %s33
        %p649 = scmp.lt.s32.totalorder %s648, 95
        %s650 = scalar_select %p649, %s648, 95
        %s651 = smul.addr %s650, 8
        %s652 = scalar_lea.vmem %s19, %s651
        %s653 = smul.u32 48, %s33
        %p654 = scmp.lt.s32.totalorder %s653, 95
        %s655 = scalar_select %p654, %s653, 95
        %s656 = smul.addr %s655, 8
        %s657 = scalar_lea.vmem %s0, %s656
        %s658 = smul.u32 48, %s33
        %s659 = smul.u32 48, %s33
        %p660 = scmp.lt.s32.totalorder %s659, 95
        %s661 = scalar_select %p660, %s659, 95
        %s662 = smul.addr %s661, 8
        %s663 = scalar_lea.vmem %s19, %s662
        %s664 = smul.u32 48, %s33
        %v666 = vld [vmem:[%s657] sm:$0xff]
        %v667 = vld [vmem:[%s657 + $0x8] sm:$0xff]
        %v668 = vld [vmem:[%s657 + $0x10] sm:$0xff]
        %v669 = vld [vmem:[%s657 + $0x18] sm:$0xff]
        %v670 = vld [vmem:[%s657 + $0x20] sm:$0xff]
        %v671 = vld [vmem:[%s657 + $0x28] sm:$0xff]
        %v672 = vld [vmem:[%s657 + $0x30] sm:$0xff]
        %v673 = vld [vmem:[%s657 + $0x38] sm:$0xff]
        %v674 = vld [vmem:[%s657 + $0x40] sm:$0xff]
        %v675 = vld [vmem:[%s657 + $0x48] sm:$0xff]
        %v676 = vld [vmem:[%s657 + $0x50] sm:$0xff]
        %v677 = vld [vmem:[%s657 + $0x58] sm:$0xff]
        %v678 = vld [vmem:[%s657 + $0x60] sm:$0xff]
        %v679 = vld [vmem:[%s657 + $0x68] sm:$0xff]
        %v680 = vld [vmem:[%s657 + $0x70] sm:$0xff]
        %v681 = vld [vmem:[%s657 + $0x78] sm:$0xff]
        %v682 = vld [vmem:[%s657 + $0x80] sm:$0xff]
        %v683 = vld [vmem:[%s657 + $0x88] sm:$0xff]
        %v684 = vld [vmem:[%s657 + $0x90] sm:$0xff]
        %v685 = vld [vmem:[%s657 + $0x98] sm:$0xff]
        %v686 = vld [vmem:[%s657 + $0xa0] sm:$0xff]
        %v687 = vld [vmem:[%s657 + $0xa8] sm:$0xff]
        %v688 = vld [vmem:[%s657 + $0xb0] sm:$0xff]
        %v689 = vld [vmem:[%s657 + $0xb8] sm:$0xff]
        %v690 = vld [vmem:[%s657 + $0xc0] sm:$0xff]
        %v691 = vld [vmem:[%s657 + $0xc8] sm:$0xff]
        %v692 = vld [vmem:[%s657 + $0xd0] sm:$0xff]
        %v693 = vld [vmem:[%s657 + $0xd8] sm:$0xff]
        %v694 = vld [vmem:[%s657 + $0xe0] sm:$0xff]
        %v695 = vld [vmem:[%s657 + $0xe8] sm:$0xff]
        %v696 = vld [vmem:[%s657 + $0xf0] sm:$0xff]
        %v697 = vld [vmem:[%s657 + $0xf8] sm:$0xff]
        %v698 = vld [vmem:[%s657 + $0x100] sm:$0xff]
        %v699 = vld [vmem:[%s657 + $0x108] sm:$0xff]
        %v700 = vld [vmem:[%s657 + $0x110] sm:$0xff]
        %v701 = vld [vmem:[%s657 + $0x118] sm:$0xff]
        %v702 = vld [vmem:[%s657 + $0x120] sm:$0xff]
        %v703 = vld [vmem:[%s657 + $0x128] sm:$0xff]
        %v704 = vld [vmem:[%s657 + $0x130] sm:$0xff]
        %v705 = vld [vmem:[%s657 + $0x138] sm:$0xff]
        %v706 = vld [vmem:[%s657 + $0x140] sm:$0xff]
        %v707 = vld [vmem:[%s657 + $0x148] sm:$0xff]
        %v708 = vld [vmem:[%s657 + $0x150] sm:$0xff]
        %v709 = vld [vmem:[%s657 + $0x158] sm:$0xff]
        %v710 = vld [vmem:[%s657 + $0x160] sm:$0xff]
        %v711 = vld [vmem:[%s657 + $0x168] sm:$0xff]
        %v712 = vld [vmem:[%s657 + $0x170] sm:$0xff]
        %v713 = vld [vmem:[%s657 + $0x178] sm:$0xff]
        %v714 = vpack.c.bf16 %v667, %v666
        %v715 = vpack.c.bf16 %v669, %v668
        %v716 = vpack.c.bf16 %v671, %v670
        %v717 = vpack.c.bf16 %v673, %v672
        %v718 = vpack.c.bf16 %v675, %v674
        %v719 = vpack.c.bf16 %v677, %v676
        %v720 = vpack.c.bf16 %v679, %v678
        %v721 = vpack.c.bf16 %v681, %v680
        %v722 = vpack.c.bf16 %v683, %v682
        %v723 = vpack.c.bf16 %v685, %v684
        %v724 = vpack.c.bf16 %v687, %v686
        %v725 = vpack.c.bf16 %v689, %v688
        %v726 = vpack.c.bf16 %v691, %v690
        %v727 = vpack.c.bf16 %v693, %v692
        %v728 = vpack.c.bf16 %v695, %v694
        %v729 = vpack.c.bf16 %v697, %v696
        %v730 = vpack.c.bf16 %v699, %v698
        %v731 = vpack.c.bf16 %v701, %v700
        %v732 = vpack.c.bf16 %v703, %v702
        %v733 = vpack.c.bf16 %v705, %v704
        %v734 = vpack.c.bf16 %v707, %v706
        %v735 = vpack.c.bf16 %v709, %v708
        %v736 = vpack.c.bf16 %v711, %v710
        %v737 = vpack.c.bf16 %v713, %v712
        %v738 = vld [vmem:[%s1] sm:$0xff]
        %v740 = vcombine.high %v738, %v738
        %v742 = vunpack.c.l.s4 1983009808
        %v743 = vunpack.c.0.s8 %v742
        %v744 = vlaneseq
        %v745 = vshrl.u32 %v744, 7
        %v746 = vsub.s32 %v743, %v745
        %v747 = vrot.slane %v738, %v746
        %v749 = vunpack.c.l.s4 1983009808
        %v750 = vunpack.c.0.s8 %v749
        %v751 = vlaneseq
        %v752 = vshrl.u32 %v751, 7
        %v753 = vsub.s32 %v750, %v752
        %v754 = vrot.slane %v740, %v753
        %v755 = vcombine.high %v747, %v747
        %v756 = vcombine.high %v754, %v754
        %vm757 = vcmask 23552
        %v759 = vsel %vm757, %v714, 0
        %v762 = vsel %vm757, %v715, 0
        %v765 = vsel %vm757, %v716, 0
        %v768 = vsel %vm757, %v717, 0
        %v771 = vsel %vm757, %v718, 0
        %v774 = vsel %vm757, %v719, 0
        %v777 = vsel %vm757, %v720, 0
        %v780 = vsel %vm757, %v721, 0
        %v783 = vsel %vm757, %v722, 0
        %v786 = vsel %vm757, %v723, 0
        %v789 = vsel %vm757, %v724, 0
        %v792 = vsel %vm757, %v725, 0
        %v795 = vsel %vm757, %v726, 0
        %v798 = vsel %vm757, %v727, 0
        %v801 = vsel %vm757, %v728, 0
        %v804 = vsel %vm757, %v729, 0
        %v807 = vsel %vm757, %v730, 0
        %v810 = vsel %vm757, %v731, 0
        %v813 = vsel %vm757, %v732, 0
        %v816 = vsel %vm757, %v733, 0
        %v819 = vsel %vm757, %v734, 0
        %v822 = vsel %vm757, %v735, 0
        %v825 = vsel %vm757, %v736, 0
        %v828 = vsel %vm757, %v737, 0
        %vm830 = vcmask 1040384
        %vm831 = vcmask 1041408
        %v832 = vsel %vm830, 4294967295, 65535
        %v833 = vsel %vm831, %v832, 0
        %v835 = vand.u32 %v747, %v833
        %v838 = vand.u32 %v755, %v833
        %v841 = vand.u32 %v754, %v833
        %v844 = vand.u32 %v756, %v833
        %846 = vmatprep.subr.bf16.mxu0 0
        %847 = vmatpush1.bf16.msra.mxu0 0
        %848 = vmatprep.subr.bf16.mxu0 0
        %849 = vmatpush1.bf16.msra.mxu0 0
        %850 = vmatprep.subr.bf16.mxu0 0
        %851 = vmatpush1.bf16.msra.mxu0 0
        %852 = vmatprep.subr.bf16.mxu0 0
        %853 = vmatpush1.bf16.msra.mxu0 0
        %854 = vmatprep.subr.bf16.mxu0 0
        %855 = vmatpush1.bf16.msra.mxu0 0
        %856 = vmatprep.subr.bf16.mxu0 0
        %857 = vmatpush1.bf16.msra.mxu0 0
        %858 = vmatprep.subr.bf16.mxu0 0
        %859 = vmatpush1.bf16.msra.mxu0 0
        %860 = vmatprep.subr.bf16.mxu0 %v838
        %861 = vmatpush1.bf16.msra.mxu0 %v835
        %862 = vmatprep.subr.bf16.mxu0 0
        %863 = vmatpush2.bf16.msra.mxu0 0
        %864 = vmatprep.subr.bf16.mxu0 0
        %865 = vmatpush2.bf16.msra.mxu0 0
        %866 = vmatprep.subr.bf16.mxu0 0
        %867 = vmatpush2.bf16.msra.mxu0 0
        %868 = vmatprep.subr.bf16.mxu0 0
        %869 = vmatpush2.bf16.msra.mxu0 0
        %870 = vmatprep.subr.bf16.mxu0 0
        %871 = vmatpush2.bf16.msra.mxu0 0
        %872 = vmatprep.subr.bf16.mxu0 0
        %873 = vmatpush2.bf16.msra.mxu0 0
        %874 = vmatprep.subr.bf16.mxu0 0
        %875 = vmatpush2.bf16.msra.mxu0 0
        %876 = vmatprep.subr.bf16.mxu0 0
        %877 = vmatpush2.bf16.msra.mxu0 0
        %878 = vmatprep.mubr.bf16.mxu0 0
        %879 = vmatmul.mubr.bf16.gmra.mxu0 %v759
        %v880 = vpop.f32.mrf.mxu0
        %v881 = vadd.f32 0.0, %v880
        %v882 = vpop.f32.mrf.mxu0
        %v883 = vadd.f32 0.0, %v882
        %v884 = vpop.f32.mrf.mxu0
        %v885 = vadd.f32 0.0, %v884
        %v886 = vpop.f32.mrf.mxu0
        %v887 = vadd.f32 0.0, %v886
        %888 = vmatprep.mubr.bf16.mxu0 0
        %889 = vmatmul.mubr.bf16.gmra.mxu0 %v762
        %v890 = vpop.f32.mrf.mxu0
        %v891 = vadd.f32 0.0, %v890
        %v892 = vpop.f32.mrf.mxu0
        %v893 = vadd.f32 0.0, %v892
        %v894 = vpop.f32.mrf.mxu0
        %v895 = vadd.f32 0.0, %v894
        %v896 = vpop.f32.mrf.mxu0
        %v897 = vadd.f32 0.0, %v896
        %898 = vmatprep.mubr.bf16.mxu0 0
        %899 = vmatmul.mubr.bf16.gmra.mxu0 %v765
        %v900 = vpop.f32.mrf.mxu0
        %v901 = vadd.f32 0.0, %v900
        %v902 = vpop.f32.mrf.mxu0
        %v903 = vadd.f32 0.0, %v902
        %v904 = vpop.f32.mrf.mxu0
        %v905 = vadd.f32 0.0, %v904
        %v906 = vpop.f32.mrf.mxu0
        %v907 = vadd.f32 0.0, %v906
        %908 = vmatprep.mubr.bf16.mxu0 0
        %909 = vmatmul.mubr.bf16.gmra.mxu0 %v768
        %v910 = vpop.f32.mrf.mxu0
        %v911 = vadd.f32 0.0, %v910
        %v912 = vpop.f32.mrf.mxu0
        %v913 = vadd.f32 0.0, %v912
        %v914 = vpop.f32.mrf.mxu0
        %v915 = vadd.f32 0.0, %v914
        %v916 = vpop.f32.mrf.mxu0
        %v917 = vadd.f32 0.0, %v916
        %918 = vmatprep.mubr.bf16.mxu0 0
        %919 = vmatmul.mubr.bf16.gmra.mxu0 %v771
        %v920 = vpop.f32.mrf.mxu0
        %v921 = vadd.f32 0.0, %v920
        %v922 = vpop.f32.mrf.mxu0
        %v923 = vadd.f32 0.0, %v922
        %v924 = vpop.f32.mrf.mxu0
        %v925 = vadd.f32 0.0, %v924
        %v926 = vpop.f32.mrf.mxu0
        %v927 = vadd.f32 0.0, %v926
        %928 = vmatprep.mubr.bf16.mxu0 0
        %929 = vmatmul.mubr.bf16.gmra.mxu0 %v774
        %v930 = vpop.f32.mrf.mxu0
        %v931 = vadd.f32 0.0, %v930
        %v932 = vpop.f32.mrf.mxu0
        %v933 = vadd.f32 0.0, %v932
        %v934 = vpop.f32.mrf.mxu0
        %v935 = vadd.f32 0.0, %v934
        %v936 = vpop.f32.mrf.mxu0
        %v937 = vadd.f32 0.0, %v936
        %938 = vmatprep.mubr.bf16.mxu0 0
        %939 = vmatmul.mubr.bf16.gmra.mxu0 %v777
        %v940 = vpop.f32.mrf.mxu0
        %v941 = vadd.f32 0.0, %v940
        %v942 = vpop.f32.mrf.mxu0
        %v943 = vadd.f32 0.0, %v942
        %v944 = vpop.f32.mrf.mxu0
        %v945 = vadd.f32 0.0, %v944
        %v946 = vpop.f32.mrf.mxu0
        %v947 = vadd.f32 0.0, %v946
        %948 = vmatprep.mubr.bf16.mxu0 0
        %949 = vmatmul.mubr.bf16.gmra.mxu0 %v780
        %v950 = vpop.f32.mrf.mxu0
        %v951 = vadd.f32 0.0, %v950
        %v952 = vpop.f32.mrf.mxu0
        %v953 = vadd.f32 0.0, %v952
        %v954 = vpop.f32.mrf.mxu0
        %v955 = vadd.f32 0.0, %v954
        %v956 = vpop.f32.mrf.mxu0
        %v957 = vadd.f32 0.0, %v956
        %958 = vmatprep.mubr.bf16.mxu0 0
        %959 = vmatmul.mubr.bf16.gmra.mxu0 %v783
        %v960 = vpop.f32.mrf.mxu0
        %v961 = vadd.f32 0.0, %v960
        %v962 = vpop.f32.mrf.mxu0
        %v963 = vadd.f32 0.0, %v962
        %v964 = vpop.f32.mrf.mxu0
        %v965 = vadd.f32 0.0, %v964
        %v966 = vpop.f32.mrf.mxu0
        %v967 = vadd.f32 0.0, %v966
        %968 = vmatprep.mubr.bf16.mxu0 0
        %969 = vmatmul.mubr.bf16.gmra.mxu0 %v786
        %v970 = vpop.f32.mrf.mxu0
        %v971 = vadd.f32 0.0, %v970
        %v972 = vpop.f32.mrf.mxu0
        %v973 = vadd.f32 0.0, %v972
        %v974 = vpop.f32.mrf.mxu0
        %v975 = vadd.f32 0.0, %v974
        %v976 = vpop.f32.mrf.mxu0
        %v977 = vadd.f32 0.0, %v976
        %978 = vmatprep.mubr.bf16.mxu0 0
        %979 = vmatmul.mubr.bf16.gmra.mxu0 %v789
        %v980 = vpop.f32.mrf.mxu0
        %v981 = vadd.f32 0.0, %v980
        %v982 = vpop.f32.mrf.mxu0
        %v983 = vadd.f32 0.0, %v982
        %v984 = vpop.f32.mrf.mxu0
        %v985 = vadd.f32 0.0, %v984
        %v986 = vpop.f32.mrf.mxu0
        %v987 = vadd.f32 0.0, %v986
        %988 = vmatprep.mubr.bf16.mxu0 0
        %989 = vmatmul.mubr.bf16.gmra.mxu0 %v792
        %v990 = vpop.f32.mrf.mxu0
        %v991 = vadd.f32 0.0, %v990
        %v992 = vpop.f32.mrf.mxu0
        %v993 = vadd.f32 0.0, %v992
        %v994 = vpop.f32.mrf.mxu0
        %v995 = vadd.f32 0.0, %v994
        %v996 = vpop.f32.mrf.mxu0
        %v997 = vadd.f32 0.0, %v996
        %998 = vmatprep.mubr.bf16.mxu0 0
        %999 = vmatmul.mubr.bf16.gmra.mxu0 %v795
        %v1000 = vpop.f32.mrf.mxu0
        %v1001 = vadd.f32 0.0, %v1000
        %v1002 = vpop.f32.mrf.mxu0
        %v1003 = vadd.f32 0.0, %v1002
        %v1004 = vpop.f32.mrf.mxu0
        %v1005 = vadd.f32 0.0, %v1004
        %v1006 = vpop.f32.mrf.mxu0
        %v1007 = vadd.f32 0.0, %v1006
        %1008 = vmatprep.mubr.bf16.mxu0 0
        %1009 = vmatmul.mubr.bf16.gmra.mxu0 %v798
        %v1010 = vpop.f32.mrf.mxu0
        %v1011 = vadd.f32 0.0, %v1010
        %v1012 = vpop.f32.mrf.mxu0
        %v1013 = vadd.f32 0.0, %v1012
        %v1014 = vpop.f32.mrf.mxu0
        %v1015 = vadd.f32 0.0, %v1014
        %v1016 = vpop.f32.mrf.mxu0
        %v1017 = vadd.f32 0.0, %v1016
        %1018 = vmatprep.mubr.bf16.mxu0 0
        %1019 = vmatmul.mubr.bf16.gmra.mxu0 %v801
        %v1020 = vpop.f32.mrf.mxu0
        %v1021 = vadd.f32 0.0, %v1020
        %v1022 = vpop.f32.mrf.mxu0
        %v1023 = vadd.f32 0.0, %v1022
        %v1024 = vpop.f32.mrf.mxu0
        %v1025 = vadd.f32 0.0, %v1024
        %v1026 = vpop.f32.mrf.mxu0
        %v1027 = vadd.f32 0.0, %v1026
        %1028 = vmatprep.mubr.bf16.mxu0 0
        %1029 = vmatmul.mubr.bf16.gmra.mxu0 %v804
        %v1030 = vpop.f32.mrf.mxu0
        %v1031 = vadd.f32 0.0, %v1030
        %v1032 = vpop.f32.mrf.mxu0
        %v1033 = vadd.f32 0.0, %v1032
        %v1034 = vpop.f32.mrf.mxu0
        %v1035 = vadd.f32 0.0, %v1034
        %v1036 = vpop.f32.mrf.mxu0
        %v1037 = vadd.f32 0.0, %v1036
        %1038 = vmatprep.mubr.bf16.mxu0 0
        %1039 = vmatmul.mubr.bf16.gmra.mxu0 %v807
        %v1040 = vpop.f32.mrf.mxu0
        %v1041 = vadd.f32 0.0, %v1040
        %v1042 = vpop.f32.mrf.mxu0
        %v1043 = vadd.f32 0.0, %v1042
        %v1044 = vpop.f32.mrf.mxu0
        %v1045 = vadd.f32 0.0, %v1044
        %v1046 = vpop.f32.mrf.mxu0
        %v1047 = vadd.f32 0.0, %v1046
        %1048 = vmatprep.mubr.bf16.mxu0 0
        %1049 = vmatmul.mubr.bf16.gmra.mxu0 %v810
        %v1050 = vpop.f32.mrf.mxu0
        %v1051 = vadd.f32 0.0, %v1050
        %v1052 = vpop.f32.mrf.mxu0
        %v1053 = vadd.f32 0.0, %v1052
        %v1054 = vpop.f32.mrf.mxu0
        %v1055 = vadd.f32 0.0, %v1054
        %v1056 = vpop.f32.mrf.mxu0
        %v1057 = vadd.f32 0.0, %v1056
        %1058 = vmatprep.mubr.bf16.mxu0 0
        %1059 = vmatmul.mubr.bf16.gmra.mxu0 %v813
        %v1060 = vpop.f32.mrf.mxu0
        %v1061 = vadd.f32 0.0, %v1060
        %v1062 = vpop.f32.mrf.mxu0
        %v1063 = vadd.f32 0.0, %v1062
        %v1064 = vpop.f32.mrf.mxu0
        %v1065 = vadd.f32 0.0, %v1064
        %v1066 = vpop.f32.mrf.mxu0
        %v1067 = vadd.f32 0.0, %v1066
        %1068 = vmatprep.mubr.bf16.mxu0 0
        %1069 = vmatmul.mubr.bf16.gmra.mxu0 %v816
        %v1070 = vpop.f32.mrf.mxu0
        %v1071 = vadd.f32 0.0, %v1070
        %v1072 = vpop.f32.mrf.mxu0
        %v1073 = vadd.f32 0.0, %v1072
        %v1074 = vpop.f32.mrf.mxu0
        %v1075 = vadd.f32 0.0, %v1074
        %v1076 = vpop.f32.mrf.mxu0
        %v1077 = vadd.f32 0.0, %v1076
        %1078 = vmatprep.mubr.bf16.mxu0 0
        %1079 = vmatmul.mubr.bf16.gmra.mxu0 %v819
        %v1080 = vpop.f32.mrf.mxu0
        %v1081 = vadd.f32 0.0, %v1080
        %v1082 = vpop.f32.mrf.mxu0
        %v1083 = vadd.f32 0.0, %v1082
        %v1084 = vpop.f32.mrf.mxu0
        %v1085 = vadd.f32 0.0, %v1084
        %v1086 = vpop.f32.mrf.mxu0
        %v1087 = vadd.f32 0.0, %v1086
        %1088 = vmatprep.mubr.bf16.mxu0 0
        %1089 = vmatmul.mubr.bf16.gmra.mxu0 %v822
        %v1090 = vpop.f32.mrf.mxu0
        %v1091 = vadd.f32 0.0, %v1090
        %v1092 = vpop.f32.mrf.mxu0
        %v1093 = vadd.f32 0.0, %v1092
        %v1094 = vpop.f32.mrf.mxu0
        %v1095 = vadd.f32 0.0, %v1094
        %v1096 = vpop.f32.mrf.mxu0
        %v1097 = vadd.f32 0.0, %v1096
        %1098 = vmatprep.mubr.bf16.mxu0 0
        %1099 = vmatmul.mubr.bf16.gmra.mxu0 %v825
        %v1100 = vpop.f32.mrf.mxu0
        %v1101 = vadd.f32 0.0, %v1100
        %v1102 = vpop.f32.mrf.mxu0
        %v1103 = vadd.f32 0.0, %v1102
        %v1104 = vpop.f32.mrf.mxu0
        %v1105 = vadd.f32 0.0, %v1104
        %v1106 = vpop.f32.mrf.mxu0
        %v1107 = vadd.f32 0.0, %v1106
        %1108 = vmatprep.mubr.bf16.mxu0 0
        %1109 = vmatmul.mubr.bf16.gmra.mxu0 %v828
        %v1110 = vpop.f32.mrf.mxu0
        %v1111 = vadd.f32 0.0, %v1110
        %v1112 = vpop.f32.mrf.mxu0
        %v1113 = vadd.f32 0.0, %v1112
        %v1114 = vpop.f32.mrf.mxu0
        %v1115 = vadd.f32 0.0, %v1114
        %v1116 = vpop.f32.mrf.mxu0
        %v1117 = vadd.f32 0.0, %v1116
        %1118 = vdwg.mxu0
        %1119 = vmatprep.subr.bf16.mxu0 0
        %1120 = vmatpush1.bf16.msra.mxu0 0
        %1121 = vmatprep.subr.bf16.mxu0 0
        %1122 = vmatpush1.bf16.msra.mxu0 0
        %1123 = vmatprep.subr.bf16.mxu0 0
        %1124 = vmatpush1.bf16.msra.mxu0 0
        %1125 = vmatprep.subr.bf16.mxu0 0
        %1126 = vmatpush1.bf16.msra.mxu0 0
        %1127 = vmatprep.subr.bf16.mxu0 0
        %1128 = vmatpush1.bf16.msra.mxu0 0
        %1129 = vmatprep.subr.bf16.mxu0 0
        %1130 = vmatpush1.bf16.msra.mxu0 0
        %1131 = vmatprep.subr.bf16.mxu0 0
        %1132 = vmatpush1.bf16.msra.mxu0 0
        %1133 = vmatprep.subr.bf16.mxu0 %v844
        %1134 = vmatpush1.bf16.msra.mxu0 %v841
        %1135 = vmatprep.subr.bf16.mxu0 0
        %1136 = vmatpush2.bf16.msra.mxu0 0
        %1137 = vmatprep.subr.bf16.mxu0 0
        %1138 = vmatpush2.bf16.msra.mxu0 0
        %1139 = vmatprep.subr.bf16.mxu0 0
        %1140 = vmatpush2.bf16.msra.mxu0 0
        %1141 = vmatprep.subr.bf16.mxu0 0
        %1142 = vmatpush2.bf16.msra.mxu0 0
        %1143 = vmatprep.subr.bf16.mxu0 0
        %1144 = vmatpush2.bf16.msra.mxu0 0
        %1145 = vmatprep.subr.bf16.mxu0 0
        %1146 = vmatpush2.bf16.msra.mxu0 0
        %1147 = vmatprep.subr.bf16.mxu0 0
        %1148 = vmatpush2.bf16.msra.mxu0 0
        %1149 = vmatprep.subr.bf16.mxu0 0
        %1150 = vmatpush2.bf16.msra.mxu0 0
        %1151 = vmatprep.mubr.bf16.mxu0 0
        %1152 = vmatmul.mubr.bf16.gmra.mxu0 %v759
        %v1153 = vpop.f32.mrf.mxu0
        %v1154 = vadd.f32 0.0, %v1153
        %v1155 = vpop.f32.mrf.mxu0
        %v1156 = vadd.f32 0.0, %v1155
        %v1157 = vpop.f32.mrf.mxu0
        %v1158 = vadd.f32 0.0, %v1157
        %v1159 = vpop.f32.mrf.mxu0
        %v1160 = vadd.f32 0.0, %v1159
        %1161 = vmatprep.mubr.bf16.mxu0 0
        %1162 = vmatmul.mubr.bf16.gmra.mxu0 %v762
        %v1163 = vpop.f32.mrf.mxu0
        %v1164 = vadd.f32 0.0, %v1163
        %v1165 = vpop.f32.mrf.mxu0
        %v1166 = vadd.f32 0.0, %v1165
        %v1167 = vpop.f32.mrf.mxu0
        %v1168 = vadd.f32 0.0, %v1167
        %v1169 = vpop.f32.mrf.mxu0
        %v1170 = vadd.f32 0.0, %v1169
        %1171 = vmatprep.mubr.bf16.mxu0 0
        %1172 = vmatmul.mubr.bf16.gmra.mxu0 %v765
        %v1173 = vpop.f32.mrf.mxu0
        %v1174 = vadd.f32 0.0, %v1173
        %v1175 = vpop.f32.mrf.mxu0
        %v1176 = vadd.f32 0.0, %v1175
        %v1177 = vpop.f32.mrf.mxu0
        %v1178 = vadd.f32 0.0, %v1177
        %v1179 = vpop.f32.mrf.mxu0
        %v1180 = vadd.f32 0.0, %v1179
        %1181 = vmatprep.mubr.bf16.mxu0 0
        %1182 = vmatmul.mubr.bf16.gmra.mxu0 %v768
        %v1183 = vpop.f32.mrf.mxu0
        %v1184 = vadd.f32 0.0, %v1183
        %v1185 = vpop.f32.mrf.mxu0
        %v1186 = vadd.f32 0.0, %v1185
        %v1187 = vpop.f32.mrf.mxu0
        %v1188 = vadd.f32 0.0, %v1187
        %v1189 = vpop.f32.mrf.mxu0
        %v1190 = vadd.f32 0.0, %v1189
        %1191 = vmatprep.mubr.bf16.mxu0 0
        %1192 = vmatmul.mubr.bf16.gmra.mxu0 %v771
        %v1193 = vpop.f32.mrf.mxu0
        %v1194 = vadd.f32 0.0, %v1193
        %v1195 = vpop.f32.mrf.mxu0
        %v1196 = vadd.f32 0.0, %v1195
        %v1197 = vpop.f32.mrf.mxu0
        %v1198 = vadd.f32 0.0, %v1197
        %v1199 = vpop.f32.mrf.mxu0
        %v1200 = vadd.f32 0.0, %v1199
        %1201 = vmatprep.mubr.bf16.mxu0 0
        %1202 = vmatmul.mubr.bf16.gmra.mxu0 %v774
        %v1203 = vpop.f32.mrf.mxu0
        %v1204 = vadd.f32 0.0, %v1203
        %v1205 = vpop.f32.mrf.mxu0
        %v1206 = vadd.f32 0.0, %v1205
        %v1207 = vpop.f32.mrf.mxu0
        %v1208 = vadd.f32 0.0, %v1207
        %v1209 = vpop.f32.mrf.mxu0
        %v1210 = vadd.f32 0.0, %v1209
        %1211 = vmatprep.mubr.bf16.mxu0 0
        %1212 = vmatmul.mubr.bf16.gmra.mxu0 %v777
        %v1213 = vpop.f32.mrf.mxu0
        %v1214 = vadd.f32 0.0, %v1213
        %v1215 = vpop.f32.mrf.mxu0
        %v1216 = vadd.f32 0.0, %v1215
        %v1217 = vpop.f32.mrf.mxu0
        %v1218 = vadd.f32 0.0, %v1217
        %v1219 = vpop.f32.mrf.mxu0
        %v1220 = vadd.f32 0.0, %v1219
        %1221 = vmatprep.mubr.bf16.mxu0 0
        %1222 = vmatmul.mubr.bf16.gmra.mxu0 %v780
        %v1223 = vpop.f32.mrf.mxu0
        %v1224 = vadd.f32 0.0, %v1223
        %v1225 = vpop.f32.mrf.mxu0
        %v1226 = vadd.f32 0.0, %v1225
        %v1227 = vpop.f32.mrf.mxu0
        %v1228 = vadd.f32 0.0, %v1227
        %v1229 = vpop.f32.mrf.mxu0
        %v1230 = vadd.f32 0.0, %v1229
        %1231 = vmatprep.mubr.bf16.mxu0 0
        %1232 = vmatmul.mubr.bf16.gmra.mxu0 %v783
        %v1233 = vpop.f32.mrf.mxu0
        %v1234 = vadd.f32 0.0, %v1233
        %v1235 = vpop.f32.mrf.mxu0
        %v1236 = vadd.f32 0.0, %v1235
        %v1237 = vpop.f32.mrf.mxu0
        %v1238 = vadd.f32 0.0, %v1237
        %v1239 = vpop.f32.mrf.mxu0
        %v1240 = vadd.f32 0.0, %v1239
        %1241 = vmatprep.mubr.bf16.mxu0 0
        %1242 = vmatmul.mubr.bf16.gmra.mxu0 %v786
        %v1243 = vpop.f32.mrf.mxu0
        %v1244 = vadd.f32 0.0, %v1243
        %v1245 = vpop.f32.mrf.mxu0
        %v1246 = vadd.f32 0.0, %v1245
        %v1247 = vpop.f32.mrf.mxu0
        %v1248 = vadd.f32 0.0, %v1247
        %v1249 = vpop.f32.mrf.mxu0
        %v1250 = vadd.f32 0.0, %v1249
        %1251 = vmatprep.mubr.bf16.mxu0 0
        %1252 = vmatmul.mubr.bf16.gmra.mxu0 %v789
        %v1253 = vpop.f32.mrf.mxu0
        %v1254 = vadd.f32 0.0, %v1253
        %v1255 = vpop.f32.mrf.mxu0
        %v1256 = vadd.f32 0.0, %v1255
        %v1257 = vpop.f32.mrf.mxu0
        %v1258 = vadd.f32 0.0, %v1257
        %v1259 = vpop.f32.mrf.mxu0
        %v1260 = vadd.f32 0.0, %v1259
        %1261 = vmatprep.mubr.bf16.mxu0 0
        %1262 = vmatmul.mubr.bf16.gmra.mxu0 %v792
        %v1263 = vpop.f32.mrf.mxu0
        %v1264 = vadd.f32 0.0, %v1263
        %v1265 = vpop.f32.mrf.mxu0
        %v1266 = vadd.f32 0.0, %v1265
        %v1267 = vpop.f32.mrf.mxu0
        %v1268 = vadd.f32 0.0, %v1267
        %v1269 = vpop.f32.mrf.mxu0
        %v1270 = vadd.f32 0.0, %v1269
        %1271 = vmatprep.mubr.bf16.mxu0 0
        %1272 = vmatmul.mubr.bf16.gmra.mxu0 %v795
        %v1273 = vpop.f32.mrf.mxu0
        %v1274 = vadd.f32 0.0, %v1273
        %v1275 = vpop.f32.mrf.mxu0
        %v1276 = vadd.f32 0.0, %v1275
        %v1277 = vpop.f32.mrf.mxu0
        %v1278 = vadd.f32 0.0, %v1277
        %v1279 = vpop.f32.mrf.mxu0
        %v1280 = vadd.f32 0.0, %v1279
        %1281 = vmatprep.mubr.bf16.mxu0 0
        %1282 = vmatmul.mubr.bf16.gmra.mxu0 %v798
        %v1283 = vpop.f32.mrf.mxu0
        %v1284 = vadd.f32 0.0, %v1283
        %v1285 = vpop.f32.mrf.mxu0
        %v1286 = vadd.f32 0.0, %v1285
        %v1287 = vpop.f32.mrf.mxu0
        %v1288 = vadd.f32 0.0, %v1287
        %v1289 = vpop.f32.mrf.mxu0
        %v1290 = vadd.f32 0.0, %v1289
        %1291 = vmatprep.mubr.bf16.mxu0 0
        %1292 = vmatmul.mubr.bf16.gmra.mxu0 %v801
        %v1293 = vpop.f32.mrf.mxu0
        %v1294 = vadd.f32 0.0, %v1293
        %v1295 = vpop.f32.mrf.mxu0
        %v1296 = vadd.f32 0.0, %v1295
        %v1297 = vpop.f32.mrf.mxu0
        %v1298 = vadd.f32 0.0, %v1297
        %v1299 = vpop.f32.mrf.mxu0
        %v1300 = vadd.f32 0.0, %v1299
        %1301 = vmatprep.mubr.bf16.mxu0 0
        %1302 = vmatmul.mubr.bf16.gmra.mxu0 %v804
        %v1303 = vpop.f32.mrf.mxu0
        %v1304 = vadd.f32 0.0, %v1303
        %v1305 = vpop.f32.mrf.mxu0
        %v1306 = vadd.f32 0.0, %v1305
        %v1307 = vpop.f32.mrf.mxu0
        %v1308 = vadd.f32 0.0, %v1307
        %v1309 = vpop.f32.mrf.mxu0
        %v1310 = vadd.f32 0.0, %v1309
        %1311 = vmatprep.mubr.bf16.mxu0 0
        %1312 = vmatmul.mubr.bf16.gmra.mxu0 %v807
        %v1313 = vpop.f32.mrf.mxu0
        %v1314 = vadd.f32 0.0, %v1313
        %v1315 = vpop.f32.mrf.mxu0
        %v1316 = vadd.f32 0.0, %v1315
        %v1317 = vpop.f32.mrf.mxu0
        %v1318 = vadd.f32 0.0, %v1317
        %v1319 = vpop.f32.mrf.mxu0
        %v1320 = vadd.f32 0.0, %v1319
        %1321 = vmatprep.mubr.bf16.mxu0 0
        %1322 = vmatmul.mubr.bf16.gmra.mxu0 %v810
        %v1323 = vpop.f32.mrf.mxu0
        %v1324 = vadd.f32 0.0, %v1323
        %v1325 = vpop.f32.mrf.mxu0
        %v1326 = vadd.f32 0.0, %v1325
        %v1327 = vpop.f32.mrf.mxu0
        %v1328 = vadd.f32 0.0, %v1327
        %v1329 = vpop.f32.mrf.mxu0
        %v1330 = vadd.f32 0.0, %v1329
        %1331 = vmatprep.mubr.bf16.mxu0 0
        %1332 = vmatmul.mubr.bf16.gmra.mxu0 %v813
        %v1333 = vpop.f32.mrf.mxu0
        %v1334 = vadd.f32 0.0, %v1333
        %v1335 = vpop.f32.mrf.mxu0
        %v1336 = vadd.f32 0.0, %v1335
        %v1337 = vpop.f32.mrf.mxu0
        %v1338 = vadd.f32 0.0, %v1337
        %v1339 = vpop.f32.mrf.mxu0
        %v1340 = vadd.f32 0.0, %v1339
        %1341 = vmatprep.mubr.bf16.mxu0 0
        %1342 = vmatmul.mubr.bf16.gmra.mxu0 %v816
        %v1343 = vpop.f32.mrf.mxu0
        %v1344 = vadd.f32 0.0, %v1343
        %v1345 = vpop.f32.mrf.mxu0
        %v1346 = vadd.f32 0.0, %v1345
        %v1347 = vpop.f32.mrf.mxu0
        %v1348 = vadd.f32 0.0, %v1347
        %v1349 = vpop.f32.mrf.mxu0
        %v1350 = vadd.f32 0.0, %v1349
        %1351 = vmatprep.mubr.bf16.mxu0 0
        %1352 = vmatmul.mubr.bf16.gmra.mxu0 %v819
        %v1353 = vpop.f32.mrf.mxu0
        %v1354 = vadd.f32 0.0, %v1353
        %v1355 = vpop.f32.mrf.mxu0
        %v1356 = vadd.f32 0.0, %v1355
        %v1357 = vpop.f32.mrf.mxu0
        %v1358 = vadd.f32 0.0, %v1357
        %v1359 = vpop.f32.mrf.mxu0
        %v1360 = vadd.f32 0.0, %v1359
        %1361 = vmatprep.mubr.bf16.mxu0 0
        %1362 = vmatmul.mubr.bf16.gmra.mxu0 %v822
        %v1363 = vpop.f32.mrf.mxu0
        %v1364 = vadd.f32 0.0, %v1363
        %v1365 = vpop.f32.mrf.mxu0
        %v1366 = vadd.f32 0.0, %v1365
        %v1367 = vpop.f32.mrf.mxu0
        %v1368 = vadd.f32 0.0, %v1367
        %v1369 = vpop.f32.mrf.mxu0
        %v1370 = vadd.f32 0.0, %v1369
        %1371 = vmatprep.mubr.bf16.mxu0 0
        %1372 = vmatmul.mubr.bf16.gmra.mxu0 %v825
        %v1373 = vpop.f32.mrf.mxu0
        %v1374 = vadd.f32 0.0, %v1373
        %v1375 = vpop.f32.mrf.mxu0
        %v1376 = vadd.f32 0.0, %v1375
        %v1377 = vpop.f32.mrf.mxu0
        %v1378 = vadd.f32 0.0, %v1377
        %v1379 = vpop.f32.mrf.mxu0
        %v1380 = vadd.f32 0.0, %v1379
        %1381 = vmatprep.mubr.bf16.mxu0 0
        %1382 = vmatmul.mubr.bf16.gmra.mxu0 %v828
        %v1383 = vpop.f32.mrf.mxu0
        %v1384 = vadd.f32 0.0, %v1383
        %v1385 = vpop.f32.mrf.mxu0
        %v1386 = vadd.f32 0.0, %v1385
        %v1387 = vpop.f32.mrf.mxu0
        %v1388 = vadd.f32 0.0, %v1387
        %v1389 = vpop.f32.mrf.mxu0
        %v1390 = vadd.f32 0.0, %v1389
        %1391 = vdwg.mxu0
        %v1392 = vpack.c.bf16 %v1158, %v1154
        %v1393 = vpack.c.bf16 %v1160, %v1156
        %v1394 = vpack.c.bf16 %v1168, %v1164
        %v1395 = vpack.c.bf16 %v1170, %v1166
        %v1396 = vpack.c.bf16 %v1178, %v1174
        %v1397 = vpack.c.bf16 %v1180, %v1176
        %v1398 = vpack.c.bf16 %v1188, %v1184
        %v1399 = vpack.c.bf16 %v1190, %v1186
        %v1400 = vpack.c.bf16 %v1198, %v1194
        %v1401 = vpack.c.bf16 %v1200, %v1196
        %v1402 = vpack.c.bf16 %v1208, %v1204
        %v1403 = vpack.c.bf16 %v1210, %v1206
        %v1404 = vpack.c.bf16 %v1218, %v1214
        %v1405 = vpack.c.bf16 %v1220, %v1216
        %v1406 = vpack.c.bf16 %v1228, %v1224
        %v1407 = vpack.c.bf16 %v1230, %v1226
        %v1408 = vpack.c.bf16 %v1238, %v1234
        %v1409 = vpack.c.bf16 %v1240, %v1236
        %v1410 = vpack.c.bf16 %v1248, %v1244
        %v1411 = vpack.c.bf16 %v1250, %v1246
        %v1412 = vpack.c.bf16 %v1258, %v1254
        %v1413 = vpack.c.bf16 %v1260, %v1256
        %v1414 = vpack.c.bf16 %v1268, %v1264
        %v1415 = vpack.c.bf16 %v1270, %v1266
        %v1416 = vpack.c.bf16 %v1278, %v1274
        %v1417 = vpack.c.bf16 %v1280, %v1276
        %v1418 = vpack.c.bf16 %v1288, %v1284
        %v1419 = vpack.c.bf16 %v1290, %v1286
        %v1420 = vpack.c.bf16 %v1298, %v1294
        %v1421 = vpack.c.bf16 %v1300, %v1296
        %v1422 = vpack.c.bf16 %v1308, %v1304
        %v1423 = vpack.c.bf16 %v1310, %v1306
        %v1424 = vpack.c.bf16 %v1318, %v1314
        %v1425 = vpack.c.bf16 %v1320, %v1316
        %v1426 = vpack.c.bf16 %v1328, %v1324
        %v1427 = vpack.c.bf16 %v1330, %v1326
        %v1428 = vpack.c.bf16 %v1338, %v1334
        %v1429 = vpack.c.bf16 %v1340, %v1336
        %v1430 = vpack.c.bf16 %v1348, %v1344
        %v1431 = vpack.c.bf16 %v1350, %v1346
        %v1432 = vpack.c.bf16 %v1358, %v1354
        %v1433 = vpack.c.bf16 %v1360, %v1356
        %v1434 = vpack.c.bf16 %v1368, %v1364
        %v1435 = vpack.c.bf16 %v1370, %v1366
        %v1436 = vpack.c.bf16 %v1378, %v1374
        %v1437 = vpack.c.bf16 %v1380, %v1376
        %v1438 = vpack.c.bf16 %v1388, %v1384
        %v1439 = vpack.c.bf16 %v1390, %v1386
        %v1440 = vld [vmem:[%s2] sm:$0x3]
        %v1442 = vlaneseq
        %v1443 = vshrl.u32 %v1442, 7
        %v1444 = vsub.s32 0, %v1443
        %v1445 = vrot.slane %v1440, %v1444
        %v1446 = vlaneseq
        %v1447 = vshrl.u32 %v1446, 7
        %v1448 = vsub.s32 1, %v1447
        %v1449 = vrot.slane %v1440, %v1448
        %v1452 = vadd.f32 %v881, %v1445
        %v1453 = vadd.f32 %v883, %v1449
        %v1454 = vadd.f32 %v885, %v1445
        %v1455 = vadd.f32 %v887, %v1449
        %v1456 = vadd.f32 %v891, %v1445
        %v1457 = vadd.f32 %v893, %v1449
        %v1458 = vadd.f32 %v895, %v1445
        %v1459 = vadd.f32 %v897, %v1449
        %v1460 = vadd.f32 %v901, %v1445
        %v1461 = vadd.f32 %v903, %v1449
        %v1462 = vadd.f32 %v905, %v1445
        %v1463 = vadd.f32 %v907, %v1449
        %v1464 = vadd.f32 %v911, %v1445
        %v1465 = vadd.f32 %v913, %v1449
        %v1466 = vadd.f32 %v915, %v1445
        %v1467 = vadd.f32 %v917, %v1449
        %v1468 = vadd.f32 %v921, %v1445
        %v1469 = vadd.f32 %v923, %v1449
        %v1470 = vadd.f32 %v925, %v1445
        %v1471 = vadd.f32 %v927, %v1449
        %v1472 = vadd.f32 %v931, %v1445
        %v1473 = vadd.f32 %v933, %v1449
        %v1474 = vadd.f32 %v935, %v1445
        %v1475 = vadd.f32 %v937, %v1449
        %v1476 = vadd.f32 %v941, %v1445
        %v1477 = vadd.f32 %v943, %v1449
        %v1478 = vadd.f32 %v945, %v1445
        %v1479 = vadd.f32 %v947, %v1449
        %v1480 = vadd.f32 %v951, %v1445
        %v1481 = vadd.f32 %v953, %v1449
        %v1482 = vadd.f32 %v955, %v1445
        %v1483 = vadd.f32 %v957, %v1449
        %v1484 = vadd.f32 %v961, %v1445
        %v1485 = vadd.f32 %v963, %v1449
        %v1486 = vadd.f32 %v965, %v1445
        %v1487 = vadd.f32 %v967, %v1449
        %v1488 = vadd.f32 %v971, %v1445
        %v1489 = vadd.f32 %v973, %v1449
        %v1490 = vadd.f32 %v975, %v1445
        %v1491 = vadd.f32 %v977, %v1449
        %v1492 = vadd.f32 %v981, %v1445
        %v1493 = vadd.f32 %v983, %v1449
        %v1494 = vadd.f32 %v985, %v1445
        %v1495 = vadd.f32 %v987, %v1449
        %v1496 = vadd.f32 %v991, %v1445
        %v1497 = vadd.f32 %v993, %v1449
        %v1498 = vadd.f32 %v995, %v1445
        %v1499 = vadd.f32 %v997, %v1449
        %v1500 = vadd.f32 %v1001, %v1445
        %v1501 = vadd.f32 %v1003, %v1449
        %v1502 = vadd.f32 %v1005, %v1445
        %v1503 = vadd.f32 %v1007, %v1449
        %v1504 = vadd.f32 %v1011, %v1445
        %v1505 = vadd.f32 %v1013, %v1449
        %v1506 = vadd.f32 %v1015, %v1445
        %v1507 = vadd.f32 %v1017, %v1449
        %v1508 = vadd.f32 %v1021, %v1445
        %v1509 = vadd.f32 %v1023, %v1449
        %v1510 = vadd.f32 %v1025, %v1445
        %v1511 = vadd.f32 %v1027, %v1449
        %v1512 = vadd.f32 %v1031, %v1445
        %v1513 = vadd.f32 %v1033, %v1449
        %v1514 = vadd.f32 %v1035, %v1445
        %v1515 = vadd.f32 %v1037, %v1449
        %v1516 = vadd.f32 %v1041, %v1445
        %v1517 = vadd.f32 %v1043, %v1449
        %v1518 = vadd.f32 %v1045, %v1445
        %v1519 = vadd.f32 %v1047, %v1449
        %v1520 = vadd.f32 %v1051, %v1445
        %v1521 = vadd.f32 %v1053, %v1449
        %v1522 = vadd.f32 %v1055, %v1445
        %v1523 = vadd.f32 %v1057, %v1449
        %v1524 = vadd.f32 %v1061, %v1445
        %v1525 = vadd.f32 %v1063, %v1449
        %v1526 = vadd.f32 %v1065, %v1445
        %v1527 = vadd.f32 %v1067, %v1449
        %v1528 = vadd.f32 %v1071, %v1445
        %v1529 = vadd.f32 %v1073, %v1449
        %v1530 = vadd.f32 %v1075, %v1445
        %v1531 = vadd.f32 %v1077, %v1449
        %v1532 = vadd.f32 %v1081, %v1445
        %v1533 = vadd.f32 %v1083, %v1449
        %v1534 = vadd.f32 %v1085, %v1445
        %v1535 = vadd.f32 %v1087, %v1449
        %v1536 = vadd.f32 %v1091, %v1445
        %v1537 = vadd.f32 %v1093, %v1449
        %v1538 = vadd.f32 %v1095, %v1445
        %v1539 = vadd.f32 %v1097, %v1449
        %v1540 = vadd.f32 %v1101, %v1445
        %v1541 = vadd.f32 %v1103, %v1449
        %v1542 = vadd.f32 %v1105, %v1445
        %v1543 = vadd.f32 %v1107, %v1449
        %v1544 = vadd.f32 %v1111, %v1445
        %v1545 = vadd.f32 %v1113, %v1449
        %v1546 = vadd.f32 %v1115, %v1445
        %v1547 = vadd.f32 %v1117, %v1449
        %v1548 = vpack.c.bf16 %v1454, %v1452
        %v1549 = vpack.c.bf16 %v1455, %v1453
        %v1550 = vpack.c.bf16 %v1458, %v1456
        %v1551 = vpack.c.bf16 %v1459, %v1457
        %v1552 = vpack.c.bf16 %v1462, %v1460
        %v1553 = vpack.c.bf16 %v1463, %v1461
        %v1554 = vpack.c.bf16 %v1466, %v1464
        %v1555 = vpack.c.bf16 %v1467, %v1465
        %v1556 = vpack.c.bf16 %v1470, %v1468
        %v1557 = vpack.c.bf16 %v1471, %v1469
        %v1558 = vpack.c.bf16 %v1474, %v1472
        %v1559 = vpack.c.bf16 %v1475, %v1473
        %v1560 = vpack.c.bf16 %v1478, %v1476
        %v1561 = vpack.c.bf16 %v1479, %v1477
        %v1562 = vpack.c.bf16 %v1482, %v1480
        %v1563 = vpack.c.bf16 %v1483, %v1481
        %v1564 = vpack.c.bf16 %v1486, %v1484
        %v1565 = vpack.c.bf16 %v1487, %v1485
        %v1566 = vpack.c.bf16 %v1490, %v1488
        %v1567 = vpack.c.bf16 %v1491, %v1489
        %v1568 = vpack.c.bf16 %v1494, %v1492
        %v1569 = vpack.c.bf16 %v1495, %v1493
        %v1570 = vpack.c.bf16 %v1498, %v1496
        %v1571 = vpack.c.bf16 %v1499, %v1497
        %v1572 = vpack.c.bf16 %v1502, %v1500
        %v1573 = vpack.c.bf16 %v1503, %v1501
        %v1574 = vpack.c.bf16 %v1506, %v1504
        %v1575 = vpack.c.bf16 %v1507, %v1505
        %v1576 = vpack.c.bf16 %v1510, %v1508
        %v1577 = vpack.c.bf16 %v1511, %v1509
        %v1578 = vpack.c.bf16 %v1514, %v1512
        %v1579 = vpack.c.bf16 %v1515, %v1513
        %v1580 = vpack.c.bf16 %v1518, %v1516
        %v1581 = vpack.c.bf16 %v1519, %v1517
        %v1582 = vpack.c.bf16 %v1522, %v1520
        %v1583 = vpack.c.bf16 %v1523, %v1521
        %v1584 = vpack.c.bf16 %v1526, %v1524
        %v1585 = vpack.c.bf16 %v1527, %v1525
        %v1586 = vpack.c.bf16 %v1530, %v1528
        %v1587 = vpack.c.bf16 %v1531, %v1529
        %v1588 = vpack.c.bf16 %v1534, %v1532
        %v1589 = vpack.c.bf16 %v1535, %v1533
        %v1590 = vpack.c.bf16 %v1538, %v1536
        %v1591 = vpack.c.bf16 %v1539, %v1537
        %v1592 = vpack.c.bf16 %v1542, %v1540
        %v1593 = vpack.c.bf16 %v1543, %v1541
        %v1594 = vpack.c.bf16 %v1546, %v1544
        %v1595 = vpack.c.bf16 %v1547, %v1545
        %v1596 = vmax.bf16 %v1548, 0
        %v1597 = vmax.bf16 %v1549, 0
        %v1598 = vmax.bf16 %v1550, 0
        %v1599 = vmax.bf16 %v1551, 0
        %v1600 = vmax.bf16 %v1552, 0
        %v1601 = vmax.bf16 %v1553, 0
        %v1602 = vmax.bf16 %v1554, 0
        %v1603 = vmax.bf16 %v1555, 0
        %v1604 = vmax.bf16 %v1556, 0
        %v1605 = vmax.bf16 %v1557, 0
        %v1606 = vmax.bf16 %v1558, 0
        %v1607 = vmax.bf16 %v1559, 0
        %v1608 = vmax.bf16 %v1560, 0
        %v1609 = vmax.bf16 %v1561, 0
        %v1610 = vmax.bf16 %v1562, 0
        %v1611 = vmax.bf16 %v1563, 0
        %v1612 = vmax.bf16 %v1564, 0
        %v1613 = vmax.bf16 %v1565, 0
        %v1614 = vmax.bf16 %v1566, 0
        %v1615 = vmax.bf16 %v1567, 0
        %v1616 = vmax.bf16 %v1568, 0
        %v1617 = vmax.bf16 %v1569, 0
        %v1618 = vmax.bf16 %v1570, 0
        %v1619 = vmax.bf16 %v1571, 0
        %v1620 = vmax.bf16 %v1572, 0
        %v1621 = vmax.bf16 %v1573, 0
        %v1622 = vmax.bf16 %v1574, 0
        %v1623 = vmax.bf16 %v1575, 0
        %v1624 = vmax.bf16 %v1576, 0
        %v1625 = vmax.bf16 %v1577, 0
        %v1626 = vmax.bf16 %v1578, 0
        %v1627 = vmax.bf16 %v1579, 0
        %v1628 = vmax.bf16 %v1580, 0
        %v1629 = vmax.bf16 %v1581, 0
        %v1630 = vmax.bf16 %v1582, 0
        %v1631 = vmax.bf16 %v1583, 0
        %v1632 = vmax.bf16 %v1584, 0
        %v1633 = vmax.bf16 %v1585, 0
        %v1634 = vmax.bf16 %v1586, 0
        %v1635 = vmax.bf16 %v1587, 0
        %v1636 = vmax.bf16 %v1588, 0
        %v1637 = vmax.bf16 %v1589, 0
        %v1638 = vmax.bf16 %v1590, 0
        %v1639 = vmax.bf16 %v1591, 0
        %v1640 = vmax.bf16 %v1592, 0
        %v1641 = vmax.bf16 %v1593, 0
        %v1642 = vmax.bf16 %v1594, 0
        %v1643 = vmax.bf16 %v1595, 0
        %v1644 = vld [vmem:[%s3] sm:$0xff]
        %v1645 = vld [vmem:[%s3 + $0x8] sm:$0xff]
        %v1646 = vld [vmem:[%s3 + $0x10] sm:$0xff]
        %v1647 = vld [vmem:[%s3 + $0x18] sm:$0xff]
        %v1648 = vld [vmem:[%s3 + $0x20] sm:$0xff]
        %v1649 = vld [vmem:[%s3 + $0x28] sm:$0xff]
        %v1650 = vld [vmem:[%s3 + $0x30] sm:$0xff]
        %v1651 = vld [vmem:[%s3 + $0x38] sm:$0xff]
        %v1652 = vld [vmem:[%s3 + $0x40] sm:$0xff]
        %v1653 = vld [vmem:[%s3 + $0x48] sm:$0xff]
        %v1654 = vld [vmem:[%s3 + $0x50] sm:$0xff]
        %v1655 = vld [vmem:[%s3 + $0x58] sm:$0xff]
        %v1656 = vld [vmem:[%s3 + $0x60] sm:$0xff]
        %v1657 = vld [vmem:[%s3 + $0x68] sm:$0xff]
        %v1658 = vld [vmem:[%s3 + $0x70] sm:$0xff]
        %v1659 = vld [vmem:[%s3 + $0x78] sm:$0xff]
        %v1660 = vld [vmem:[%s3 + $0x80] sm:$0xff]
        %v1661 = vld [vmem:[%s3 + $0x88] sm:$0xff]
        %v1662 = vld [vmem:[%s3 + $0x90] sm:$0xff]
        %v1663 = vld [vmem:[%s3 + $0x98] sm:$0xff]
        %v1664 = vld [vmem:[%s3 + $0xa0] sm:$0xff]
        %v1665 = vld [vmem:[%s3 + $0xa8] sm:$0xff]
        %v1666 = vld [vmem:[%s3 + $0xb0] sm:$0xff]
        %v1667 = vld [vmem:[%s3 + $0xb8] sm:$0xff]
        %v1668 = vld [vmem:[%s3 + $0xc0] sm:$0xff]
        %v1669 = vld [vmem:[%s3 + $0xc8] sm:$0xff]
        %v1670 = vld [vmem:[%s3 + $0xd0] sm:$0xff]
        %v1671 = vld [vmem:[%s3 + $0xd8] sm:$0xff]
        %v1672 = vld [vmem:[%s3 + $0xe0] sm:$0xff]
        %v1673 = vld [vmem:[%s3 + $0xe8] sm:$0xff]
        %v1674 = vld [vmem:[%s3 + $0xf0] sm:$0xff]
        %v1675 = vld [vmem:[%s3 + $0xf8] sm:$0xff]
        %v1676 = vld [vmem:[%s4] sm:$0x3]
        %v1678 = vlaneseq
        %v1679 = vshrl.u32 %v1678, 7
        %v1680 = vsub.s32 0, %v1679
        %v1681 = vrot.slane %v1676, %v1680
        %v1682 = vlaneseq
        %v1683 = vshrl.u32 %v1682, 7
        %v1684 = vsub.s32 1, %v1683
        %v1685 = vrot.slane %v1676, %v1684
        %v1720 = vunpack.c.l.b16 %v1644
        %v1721 = vunpack.c.h.b16 %v1644
        %v1722 = vunpack.c.l.b16 %v1645
        %v1723 = vunpack.c.h.b16 %v1645
        %v1724 = vunpack.c.l.b16 %v1646
        %v1725 = vunpack.c.h.b16 %v1646
        %v1726 = vunpack.c.l.b16 %v1647
        %v1727 = vunpack.c.h.b16 %v1647
        %v1728 = vunpack.c.l.b16 %v1648
        %v1729 = vunpack.c.h.b16 %v1648
        %v1730 = vunpack.c.l.b16 %v1649
        %v1731 = vunpack.c.h.b16 %v1649
        %v1732 = vunpack.c.l.b16 %v1650
        %v1733 = vunpack.c.h.b16 %v1650
        %v1734 = vunpack.c.l.b16 %v1651
        %v1735 = vunpack.c.h.b16 %v1651
        %v1736 = vunpack.c.l.b16 %v1652
        %v1737 = vunpack.c.h.b16 %v1652
        %v1738 = vunpack.c.l.b16 %v1653
        %v1739 = vunpack.c.h.b16 %v1653
        %v1740 = vunpack.c.l.b16 %v1654
        %v1741 = vunpack.c.h.b16 %v1654
        %v1742 = vunpack.c.l.b16 %v1655
        %v1743 = vunpack.c.h.b16 %v1655
        %v1744 = vunpack.c.l.b16 %v1656
        %v1745 = vunpack.c.h.b16 %v1656
        %v1746 = vunpack.c.l.b16 %v1657
        %v1747 = vunpack.c.h.b16 %v1657
        %v1748 = vunpack.c.l.b16 %v1658
        %v1749 = vunpack.c.h.b16 %v1658
        %v1750 = vunpack.c.l.b16 %v1659
        %v1751 = vunpack.c.h.b16 %v1659
        %v1752 = vunpack.c.l.b16 %v1660
        %v1753 = vunpack.c.h.b16 %v1660
        %v1754 = vunpack.c.l.b16 %v1661
        %v1755 = vunpack.c.h.b16 %v1661
        %v1756 = vunpack.c.l.b16 %v1662
        %v1757 = vunpack.c.h.b16 %v1662
        %v1758 = vunpack.c.l.b16 %v1663
        %v1759 = vunpack.c.h.b16 %v1663
        %v1760 = vunpack.c.l.b16 %v1664
        %v1761 = vunpack.c.h.b16 %v1664
        %v1762 = vunpack.c.l.b16 %v1665
        %v1763 = vunpack.c.h.b16 %v1665
        %v1764 = vunpack.c.l.b16 %v1666
        %v1765 = vunpack.c.h.b16 %v1666
        %v1766 = vunpack.c.l.b16 %v1667
        %v1767 = vunpack.c.h.b16 %v1667
        %v1768 = vunpack.c.l.b16 %v1668
        %v1769 = vunpack.c.h.b16 %v1668
        %v1770 = vunpack.c.l.b16 %v1669
        %v1771 = vunpack.c.h.b16 %v1669
        %v1772 = vunpack.c.l.b16 %v1670
        %v1773 = vunpack.c.h.b16 %v1670
        %v1774 = vunpack.c.l.b16 %v1671
        %v1775 = vunpack.c.h.b16 %v1671
        %v1776 = vunpack.c.l.b16 %v1672
        %v1777 = vunpack.c.h.b16 %v1672
        %v1778 = vunpack.c.l.b16 %v1673
        %v1779 = vunpack.c.h.b16 %v1673
        %v1780 = vunpack.c.l.b16 %v1674
        %v1781 = vunpack.c.h.b16 %v1674
        %v1782 = vunpack.c.l.b16 %v1675
        %v1783 = vunpack.c.h.b16 %v1675
        %v1784 = vpack.c.b16 %v1722, %v1720
        %v1785 = vpack.c.b16 %v1723, %v1721
        %v1786 = vpack.c.b16 %v1726, %v1724
        %v1787 = vpack.c.b16 %v1727, %v1725
        %v1788 = vpack.c.b16 %v1730, %v1728
        %v1789 = vpack.c.b16 %v1731, %v1729
        %v1790 = vpack.c.b16 %v1734, %v1732
        %v1791 = vpack.c.b16 %v1735, %v1733
        %v1792 = vpack.c.b16 %v1738, %v1736
        %v1793 = vpack.c.b16 %v1739, %v1737
        %v1794 = vpack.c.b16 %v1742, %v1740
        %v1795 = vpack.c.b16 %v1743, %v1741
        %v1796 = vpack.c.b16 %v1746, %v1744
        %v1797 = vpack.c.b16 %v1747, %v1745
        %v1798 = vpack.c.b16 %v1750, %v1748
        %v1799 = vpack.c.b16 %v1751, %v1749
        %v1800 = vpack.c.b16 %v1754, %v1752
        %v1801 = vpack.c.b16 %v1755, %v1753
        %v1802 = vpack.c.b16 %v1758, %v1756
        %v1803 = vpack.c.b16 %v1759, %v1757
        %v1804 = vpack.c.b16 %v1762, %v1760
        %v1805 = vpack.c.b16 %v1763, %v1761
        %v1806 = vpack.c.b16 %v1766, %v1764
        %v1807 = vpack.c.b16 %v1767, %v1765
        %v1808 = vpack.c.b16 %v1770, %v1768
        %v1809 = vpack.c.b16 %v1771, %v1769
        %v1810 = vpack.c.b16 %v1774, %v1772
        %v1811 = vpack.c.b16 %v1775, %v1773
        %v1812 = vpack.c.b16 %v1778, %v1776
        %v1813 = vpack.c.b16 %v1779, %v1777
        %v1814 = vpack.c.b16 %v1782, %v1780
        %v1815 = vpack.c.b16 %v1783, %v1781
        %1848 = vmatprep.subr.bf16.mxu0 %v1799
        %1849 = vmatpush1.bf16.msra.mxu0 %v1798
        %1850 = vmatprep.subr.bf16.mxu0 %v1797
        %1851 = vmatpush1.bf16.msra.mxu0 %v1796
        %1852 = vmatprep.subr.bf16.mxu0 %v1795
        %1853 = vmatpush1.bf16.msra.mxu0 %v1794
        %1854 = vmatprep.subr.bf16.mxu0 %v1793
        %1855 = vmatpush1.bf16.msra.mxu0 %v1792
        %1856 = vmatprep.subr.bf16.mxu0 %v1791
        %1857 = vmatpush1.bf16.msra.mxu0 %v1790
        %1858 = vmatprep.subr.bf16.mxu0 %v1789
        %1859 = vmatpush1.bf16.msra.mxu0 %v1788
        %1860 = vmatprep.subr.bf16.mxu0 %v1787
        %1861 = vmatpush1.bf16.msra.mxu0 %v1786
        %1862 = vmatprep.subr.bf16.mxu0 %v1785
        %1863 = vmatpush1.bf16.msra.mxu0 %v1784
        %1864 = vmatprep.subr.bf16.mxu0 %v1815
        %1865 = vmatpush2.bf16.msra.mxu0 %v1814
        %1866 = vmatprep.subr.bf16.mxu0 %v1813
        %1867 = vmatpush2.bf16.msra.mxu0 %v1812
        %1868 = vmatprep.subr.bf16.mxu0 %v1811
        %1869 = vmatpush2.bf16.msra.mxu0 %v1810
        %1870 = vmatprep.subr.bf16.mxu0 %v1809
        %1871 = vmatpush2.bf16.msra.mxu0 %v1808
        %1872 = vmatprep.subr.bf16.mxu0 %v1807
        %1873 = vmatpush2.bf16.msra.mxu0 %v1806
        %1874 = vmatprep.subr.bf16.mxu0 %v1805
        %1875 = vmatpush2.bf16.msra.mxu0 %v1804
        %1876 = vmatprep.subr.bf16.mxu0 %v1803
        %1877 = vmatpush2.bf16.msra.mxu0 %v1802
        %1878 = vmatprep.subr.bf16.mxu0 %v1801
        %1879 = vmatpush2.bf16.msra.mxu0 %v1800
        %1880 = vmatprep.mubr.bf16.mxu0 %v1597
        %1881 = vmatmul.mubr.bf16.gmra.mxu0 %v1596
        %v1882 = vpop.f32.mrf.mxu0
        %v1883 = vadd.f32 %v1681, %v1882
        %v1884 = vpop.f32.mrf.mxu0
        %v1885 = vadd.f32 %v1685, %v1884
        %v1886 = vpop.f32.mrf.mxu0
        %v1887 = vadd.f32 %v1681, %v1886
        %v1888 = vpop.f32.mrf.mxu0
        %v1889 = vadd.f32 %v1685, %v1888
        %1890 = vmatprep.mubr.bf16.mxu0 %v1599
        %1891 = vmatmul.mubr.bf16.gmra.mxu0 %v1598
        %v1892 = vpop.f32.mrf.mxu0
        %v1893 = vadd.f32 %v1681, %v1892
        %v1894 = vpop.f32.mrf.mxu0
        %v1895 = vadd.f32 %v1685, %v1894
        %v1896 = vpop.f32.mrf.mxu0
        %v1897 = vadd.f32 %v1681, %v1896
        %v1898 = vpop.f32.mrf.mxu0
        %v1899 = vadd.f32 %v1685, %v1898
        %1900 = vmatprep.mubr.bf16.mxu0 %v1601
        %1901 = vmatmul.mubr.bf16.gmra.mxu0 %v1600
        %v1902 = vpop.f32.mrf.mxu0
        %v1903 = vadd.f32 %v1681, %v1902
        %v1904 = vpop.f32.mrf.mxu0
        %v1905 = vadd.f32 %v1685, %v1904
        %v1906 = vpop.f32.mrf.mxu0
        %v1907 = vadd.f32 %v1681, %v1906
        %v1908 = vpop.f32.mrf.mxu0
        %v1909 = vadd.f32 %v1685, %v1908
        %1910 = vmatprep.mubr.bf16.mxu0 %v1603
        %1911 = vmatmul.mubr.bf16.gmra.mxu0 %v1602
        %v1912 = vpop.f32.mrf.mxu0
        %v1913 = vadd.f32 %v1681, %v1912
        %v1914 = vpop.f32.mrf.mxu0
        %v1915 = vadd.f32 %v1685, %v1914
        %v1916 = vpop.f32.mrf.mxu0
        %v1917 = vadd.f32 %v1681, %v1916
        %v1918 = vpop.f32.mrf.mxu0
        %v1919 = vadd.f32 %v1685, %v1918
        %1920 = vmatprep.mubr.bf16.mxu0 %v1605
        %1921 = vmatmul.mubr.bf16.gmra.mxu0 %v1604
        %v1922 = vpop.f32.mrf.mxu0
        %v1923 = vadd.f32 %v1681, %v1922
        %v1924 = vpop.f32.mrf.mxu0
        %v1925 = vadd.f32 %v1685, %v1924
        %v1926 = vpop.f32.mrf.mxu0
        %v1927 = vadd.f32 %v1681, %v1926
        %v1928 = vpop.f32.mrf.mxu0
        %v1929 = vadd.f32 %v1685, %v1928
        %1930 = vmatprep.mubr.bf16.mxu0 %v1607
        %1931 = vmatmul.mubr.bf16.gmra.mxu0 %v1606
        %v1932 = vpop.f32.mrf.mxu0
        %v1933 = vadd.f32 %v1681, %v1932
        %v1934 = vpop.f32.mrf.mxu0
        %v1935 = vadd.f32 %v1685, %v1934
        %v1936 = vpop.f32.mrf.mxu0
        %v1937 = vadd.f32 %v1681, %v1936
        %v1938 = vpop.f32.mrf.mxu0
        %v1939 = vadd.f32 %v1685, %v1938
        %1940 = vmatprep.mubr.bf16.mxu0 %v1609
        %1941 = vmatmul.mubr.bf16.gmra.mxu0 %v1608
        %v1942 = vpop.f32.mrf.mxu0
        %v1943 = vadd.f32 %v1681, %v1942
        %v1944 = vpop.f32.mrf.mxu0
        %v1945 = vadd.f32 %v1685, %v1944
        %v1946 = vpop.f32.mrf.mxu0
        %v1947 = vadd.f32 %v1681, %v1946
        %v1948 = vpop.f32.mrf.mxu0
        %v1949 = vadd.f32 %v1685, %v1948
        %1950 = vmatprep.mubr.bf16.mxu0 %v1611
        %1951 = vmatmul.mubr.bf16.gmra.mxu0 %v1610
        %v1952 = vpop.f32.mrf.mxu0
        %v1953 = vadd.f32 %v1681, %v1952
        %v1954 = vpop.f32.mrf.mxu0
        %v1955 = vadd.f32 %v1685, %v1954
        %v1956 = vpop.f32.mrf.mxu0
        %v1957 = vadd.f32 %v1681, %v1956
        %v1958 = vpop.f32.mrf.mxu0
        %v1959 = vadd.f32 %v1685, %v1958
        %1960 = vmatprep.mubr.bf16.mxu0 %v1613
        %1961 = vmatmul.mubr.bf16.gmra.mxu0 %v1612
        %v1962 = vpop.f32.mrf.mxu0
        %v1963 = vadd.f32 %v1681, %v1962
        %v1964 = vpop.f32.mrf.mxu0
        %v1965 = vadd.f32 %v1685, %v1964
        %v1966 = vpop.f32.mrf.mxu0
        %v1967 = vadd.f32 %v1681, %v1966
        %v1968 = vpop.f32.mrf.mxu0
        %v1969 = vadd.f32 %v1685, %v1968
        %1970 = vmatprep.mubr.bf16.mxu0 %v1615
        %1971 = vmatmul.mubr.bf16.gmra.mxu0 %v1614
        %v1972 = vpop.f32.mrf.mxu0
        %v1973 = vadd.f32 %v1681, %v1972
        %v1974 = vpop.f32.mrf.mxu0
        %v1975 = vadd.f32 %v1685, %v1974
        %v1976 = vpop.f32.mrf.mxu0
        %v1977 = vadd.f32 %v1681, %v1976
        %v1978 = vpop.f32.mrf.mxu0
        %v1979 = vadd.f32 %v1685, %v1978
        %1980 = vmatprep.mubr.bf16.mxu0 %v1617
        %1981 = vmatmul.mubr.bf16.gmra.mxu0 %v1616
        %v1982 = vpop.f32.mrf.mxu0
        %v1983 = vadd.f32 %v1681, %v1982
        %v1984 = vpop.f32.mrf.mxu0
        %v1985 = vadd.f32 %v1685, %v1984
        %v1986 = vpop.f32.mrf.mxu0
        %v1987 = vadd.f32 %v1681, %v1986
        %v1988 = vpop.f32.mrf.mxu0
        %v1989 = vadd.f32 %v1685, %v1988
        %1990 = vmatprep.mubr.bf16.mxu0 %v1619
        %1991 = vmatmul.mubr.bf16.gmra.mxu0 %v1618
        %v1992 = vpop.f32.mrf.mxu0
        %v1993 = vadd.f32 %v1681, %v1992
        %v1994 = vpop.f32.mrf.mxu0
        %v1995 = vadd.f32 %v1685, %v1994
        %v1996 = vpop.f32.mrf.mxu0
        %v1997 = vadd.f32 %v1681, %v1996
        %v1998 = vpop.f32.mrf.mxu0
        %v1999 = vadd.f32 %v1685, %v1998
        %2000 = vmatprep.mubr.bf16.mxu0 %v1621
        %2001 = vmatmul.mubr.bf16.gmra.mxu0 %v1620
        %v2002 = vpop.f32.mrf.mxu0
        %v2003 = vadd.f32 %v1681, %v2002
        %v2004 = vpop.f32.mrf.mxu0
        %v2005 = vadd.f32 %v1685, %v2004
        %v2006 = vpop.f32.mrf.mxu0
        %v2007 = vadd.f32 %v1681, %v2006
        %v2008 = vpop.f32.mrf.mxu0
        %v2009 = vadd.f32 %v1685, %v2008
        %2010 = vmatprep.mubr.bf16.mxu0 %v1623
        %2011 = vmatmul.mubr.bf16.gmra.mxu0 %v1622
        %v2012 = vpop.f32.mrf.mxu0
        %v2013 = vadd.f32 %v1681, %v2012
        %v2014 = vpop.f32.mrf.mxu0
        %v2015 = vadd.f32 %v1685, %v2014
        %v2016 = vpop.f32.mrf.mxu0
        %v2017 = vadd.f32 %v1681, %v2016
        %v2018 = vpop.f32.mrf.mxu0
        %v2019 = vadd.f32 %v1685, %v2018
        %2020 = vmatprep.mubr.bf16.mxu0 %v1625
        %2021 = vmatmul.mubr.bf16.gmra.mxu0 %v1624
        %v2022 = vpop.f32.mrf.mxu0
        %v2023 = vadd.f32 %v1681, %v2022
        %v2024 = vpop.f32.mrf.mxu0
        %v2025 = vadd.f32 %v1685, %v2024
        %v2026 = vpop.f32.mrf.mxu0
        %v2027 = vadd.f32 %v1681, %v2026
        %v2028 = vpop.f32.mrf.mxu0
        %v2029 = vadd.f32 %v1685, %v2028
        %2030 = vmatprep.mubr.bf16.mxu0 %v1627
        %2031 = vmatmul.mubr.bf16.gmra.mxu0 %v1626
        %v2032 = vpop.f32.mrf.mxu0
        %v2033 = vadd.f32 %v1681, %v2032
        %v2034 = vpop.f32.mrf.mxu0
        %v2035 = vadd.f32 %v1685, %v2034
        %v2036 = vpop.f32.mrf.mxu0
        %v2037 = vadd.f32 %v1681, %v2036
        %v2038 = vpop.f32.mrf.mxu0
        %v2039 = vadd.f32 %v1685, %v2038
        %2040 = vmatprep.mubr.bf16.mxu0 %v1629
        %2041 = vmatmul.mubr.bf16.gmra.mxu0 %v1628
        %v2042 = vpop.f32.mrf.mxu0
        %v2043 = vadd.f32 %v1681, %v2042
        %v2044 = vpop.f32.mrf.mxu0
        %v2045 = vadd.f32 %v1685, %v2044
        %v2046 = vpop.f32.mrf.mxu0
        %v2047 = vadd.f32 %v1681, %v2046
        %v2048 = vpop.f32.mrf.mxu0
        %v2049 = vadd.f32 %v1685, %v2048
        %2050 = vmatprep.mubr.bf16.mxu0 %v1631
        %2051 = vmatmul.mubr.bf16.gmra.mxu0 %v1630
        %v2052 = vpop.f32.mrf.mxu0
        %v2053 = vadd.f32 %v1681, %v2052
        %v2054 = vpop.f32.mrf.mxu0
        %v2055 = vadd.f32 %v1685, %v2054
        %v2056 = vpop.f32.mrf.mxu0
        %v2057 = vadd.f32 %v1681, %v2056
        %v2058 = vpop.f32.mrf.mxu0
        %v2059 = vadd.f32 %v1685, %v2058
        %2060 = vmatprep.mubr.bf16.mxu0 %v1633
        %2061 = vmatmul.mubr.bf16.gmra.mxu0 %v1632
        %v2062 = vpop.f32.mrf.mxu0
        %v2063 = vadd.f32 %v1681, %v2062
        %v2064 = vpop.f32.mrf.mxu0
        %v2065 = vadd.f32 %v1685, %v2064
        %v2066 = vpop.f32.mrf.mxu0
        %v2067 = vadd.f32 %v1681, %v2066
        %v2068 = vpop.f32.mrf.mxu0
        %v2069 = vadd.f32 %v1685, %v2068
        %2070 = vmatprep.mubr.bf16.mxu0 %v1635
        %2071 = vmatmul.mubr.bf16.gmra.mxu0 %v1634
        %v2072 = vpop.f32.mrf.mxu0
        %v2073 = vadd.f32 %v1681, %v2072
        %v2074 = vpop.f32.mrf.mxu0
        %v2075 = vadd.f32 %v1685, %v2074
        %v2076 = vpop.f32.mrf.mxu0
        %v2077 = vadd.f32 %v1681, %v2076
        %v2078 = vpop.f32.mrf.mxu0
        %v2079 = vadd.f32 %v1685, %v2078
        %2080 = vmatprep.mubr.bf16.mxu0 %v1637
        %2081 = vmatmul.mubr.bf16.gmra.mxu0 %v1636
        %v2082 = vpop.f32.mrf.mxu0
        %v2083 = vadd.f32 %v1681, %v2082
        %v2084 = vpop.f32.mrf.mxu0
        %v2085 = vadd.f32 %v1685, %v2084
        %v2086 = vpop.f32.mrf.mxu0
        %v2087 = vadd.f32 %v1681, %v2086
        %v2088 = vpop.f32.mrf.mxu0
        %v2089 = vadd.f32 %v1685, %v2088
        %2090 = vmatprep.mubr.bf16.mxu0 %v1639
        %2091 = vmatmul.mubr.bf16.gmra.mxu0 %v1638
        %v2092 = vpop.f32.mrf.mxu0
        %v2093 = vadd.f32 %v1681, %v2092
        %v2094 = vpop.f32.mrf.mxu0
        %v2095 = vadd.f32 %v1685, %v2094
        %v2096 = vpop.f32.mrf.mxu0
        %v2097 = vadd.f32 %v1681, %v2096
        %v2098 = vpop.f32.mrf.mxu0
        %v2099 = vadd.f32 %v1685, %v2098
        %2100 = vmatprep.mubr.bf16.mxu0 %v1641
        %2101 = vmatmul.mubr.bf16.gmra.mxu0 %v1640
        %v2102 = vpop.f32.mrf.mxu0
        %v2103 = vadd.f32 %v1681, %v2102
        %v2104 = vpop.f32.mrf.mxu0
        %v2105 = vadd.f32 %v1685, %v2104
        %v2106 = vpop.f32.mrf.mxu0
        %v2107 = vadd.f32 %v1681, %v2106
        %v2108 = vpop.f32.mrf.mxu0
        %v2109 = vadd.f32 %v1685, %v2108
        %2110 = vmatprep.mubr.bf16.mxu0 %v1643
        %2111 = vmatmul.mubr.bf16.gmra.mxu0 %v1642
        %v2112 = vpop.f32.mrf.mxu0
        %v2113 = vadd.f32 %v1681, %v2112
        %v2114 = vpop.f32.mrf.mxu0
        %v2115 = vadd.f32 %v1685, %v2114
        %v2116 = vpop.f32.mrf.mxu0
        %v2117 = vadd.f32 %v1681, %v2116
        %v2118 = vpop.f32.mrf.mxu0
        %v2119 = vadd.f32 %v1685, %v2118
        %2120 = vdwg.mxu0
        %v2121 = vpack.c.bf16 %v1887, %v1883
        %v2122 = vpack.c.bf16 %v1889, %v1885
        %v2123 = vpack.c.bf16 %v1897, %v1893
        %v2124 = vpack.c.bf16 %v1899, %v1895
        %v2125 = vpack.c.bf16 %v1907, %v1903
        %v2126 = vpack.c.bf16 %v1909, %v1905
        %v2127 = vpack.c.bf16 %v1917, %v1913
        %v2128 = vpack.c.bf16 %v1919, %v1915
        %v2129 = vpack.c.bf16 %v1927, %v1923
        %v2130 = vpack.c.bf16 %v1929, %v1925
        %v2131 = vpack.c.bf16 %v1937, %v1933
        %v2132 = vpack.c.bf16 %v1939, %v1935
        %v2133 = vpack.c.bf16 %v1947, %v1943
        %v2134 = vpack.c.bf16 %v1949, %v1945
        %v2135 = vpack.c.bf16 %v1957, %v1953
        %v2136 = vpack.c.bf16 %v1959, %v1955
        %v2137 = vpack.c.bf16 %v1967, %v1963
        %v2138 = vpack.c.bf16 %v1969, %v1965
        %v2139 = vpack.c.bf16 %v1977, %v1973
        %v2140 = vpack.c.bf16 %v1979, %v1975
        %v2141 = vpack.c.bf16 %v1987, %v1983
        %v2142 = vpack.c.bf16 %v1989, %v1985
        %v2143 = vpack.c.bf16 %v1997, %v1993
        %v2144 = vpack.c.bf16 %v1999, %v1995
        %v2145 = vpack.c.bf16 %v2007, %v2003
        %v2146 = vpack.c.bf16 %v2009, %v2005
        %v2147 = vpack.c.bf16 %v2017, %v2013
        %v2148 = vpack.c.bf16 %v2019, %v2015
        %v2149 = vpack.c.bf16 %v2027, %v2023
        %v2150 = vpack.c.bf16 %v2029, %v2025
        %v2151 = vpack.c.bf16 %v2037, %v2033
        %v2152 = vpack.c.bf16 %v2039, %v2035
        %v2153 = vpack.c.bf16 %v2047, %v2043
        %v2154 = vpack.c.bf16 %v2049, %v2045
        %v2155 = vpack.c.bf16 %v2057, %v2053
        %v2156 = vpack.c.bf16 %v2059, %v2055
        %v2157 = vpack.c.bf16 %v2067, %v2063
        %v2158 = vpack.c.bf16 %v2069, %v2065
        %v2159 = vpack.c.bf16 %v2077, %v2073
        %v2160 = vpack.c.bf16 %v2079, %v2075
        %v2161 = vpack.c.bf16 %v2087, %v2083
        %v2162 = vpack.c.bf16 %v2089, %v2085
        %v2163 = vpack.c.bf16 %v2097, %v2093
        %v2164 = vpack.c.bf16 %v2099, %v2095
        %v2165 = vpack.c.bf16 %v2107, %v2103
        %v2166 = vpack.c.bf16 %v2109, %v2105
        %v2167 = vpack.c.bf16 %v2117, %v2113
        %v2168 = vpack.c.bf16 %v2119, %v2115
        %v2169 = vmax.bf16 %v2121, 0
        %v2170 = vmax.bf16 %v2122, 0
        %v2171 = vmax.bf16 %v2123, 0
        %v2172 = vmax.bf16 %v2124, 0
        %v2173 = vmax.bf16 %v2125, 0
        %v2174 = vmax.bf16 %v2126, 0
        %v2175 = vmax.bf16 %v2127, 0
        %v2176 = vmax.bf16 %v2128, 0
        %v2177 = vmax.bf16 %v2129, 0
        %v2178 = vmax.bf16 %v2130, 0
        %v2179 = vmax.bf16 %v2131, 0
        %v2180 = vmax.bf16 %v2132, 0
        %v2181 = vmax.bf16 %v2133, 0
        %v2182 = vmax.bf16 %v2134, 0
        %v2183 = vmax.bf16 %v2135, 0
        %v2184 = vmax.bf16 %v2136, 0
        %v2185 = vmax.bf16 %v2137, 0
        %v2186 = vmax.bf16 %v2138, 0
        %v2187 = vmax.bf16 %v2139, 0
        %v2188 = vmax.bf16 %v2140, 0
        %v2189 = vmax.bf16 %v2141, 0
        %v2190 = vmax.bf16 %v2142, 0
        %v2191 = vmax.bf16 %v2143, 0
        %v2192 = vmax.bf16 %v2144, 0
        %v2193 = vmax.bf16 %v2145, 0
        %v2194 = vmax.bf16 %v2146, 0
        %v2195 = vmax.bf16 %v2147, 0
        %v2196 = vmax.bf16 %v2148, 0
        %v2197 = vmax.bf16 %v2149, 0
        %v2198 = vmax.bf16 %v2150, 0
        %v2199 = vmax.bf16 %v2151, 0
        %v2200 = vmax.bf16 %v2152, 0
        %v2201 = vmax.bf16 %v2153, 0
        %v2202 = vmax.bf16 %v2154, 0
        %v2203 = vmax.bf16 %v2155, 0
        %v2204 = vmax.bf16 %v2156, 0
        %v2205 = vmax.bf16 %v2157, 0
        %v2206 = vmax.bf16 %v2158, 0
        %v2207 = vmax.bf16 %v2159, 0
        %v2208 = vmax.bf16 %v2160, 0
        %v2209 = vmax.bf16 %v2161, 0
        %v2210 = vmax.bf16 %v2162, 0
        %v2211 = vmax.bf16 %v2163, 0
        %v2212 = vmax.bf16 %v2164, 0
        %v2213 = vmax.bf16 %v2165, 0
        %v2214 = vmax.bf16 %v2166, 0
        %v2215 = vmax.bf16 %v2167, 0
        %v2216 = vmax.bf16 %v2168, 0
        %v2217 = vld [vmem:[%s5] sm:$0xff]
        %v2218 = vld [vmem:[%s5 + $0x8] sm:$0xff]
        %v2219 = vld [vmem:[%s5 + $0x10] sm:$0xff]
        %v2220 = vld [vmem:[%s5 + $0x18] sm:$0xff]
        %v2221 = vld [vmem:[%s5 + $0x20] sm:$0xff]
        %v2222 = vld [vmem:[%s5 + $0x28] sm:$0xff]
        %v2223 = vld [vmem:[%s5 + $0x30] sm:$0xff]
        %v2224 = vld [vmem:[%s5 + $0x38] sm:$0xff]
        %v2225 = vld [vmem:[%s5 + $0x40] sm:$0xff]
        %v2226 = vld [vmem:[%s5 + $0x48] sm:$0xff]
        %v2227 = vld [vmem:[%s5 + $0x50] sm:$0xff]
        %v2228 = vld [vmem:[%s5 + $0x58] sm:$0xff]
        %v2229 = vld [vmem:[%s5 + $0x60] sm:$0xff]
        %v2230 = vld [vmem:[%s5 + $0x68] sm:$0xff]
        %v2231 = vld [vmem:[%s5 + $0x70] sm:$0xff]
        %v2232 = vld [vmem:[%s5 + $0x78] sm:$0xff]
        %v2233 = vld [vmem:[%s5 + $0x80] sm:$0xff]
        %v2234 = vld [vmem:[%s5 + $0x88] sm:$0xff]
        %v2235 = vld [vmem:[%s5 + $0x90] sm:$0xff]
        %v2236 = vld [vmem:[%s5 + $0x98] sm:$0xff]
        %v2237 = vld [vmem:[%s5 + $0xa0] sm:$0xff]
        %v2238 = vld [vmem:[%s5 + $0xa8] sm:$0xff]
        %v2239 = vld [vmem:[%s5 + $0xb0] sm:$0xff]
        %v2240 = vld [vmem:[%s5 + $0xb8] sm:$0xff]
        %v2241 = vld [vmem:[%s5 + $0xc0] sm:$0xff]
        %v2242 = vld [vmem:[%s5 + $0xc8] sm:$0xff]
        %v2243 = vld [vmem:[%s5 + $0xd0] sm:$0xff]
        %v2244 = vld [vmem:[%s5 + $0xd8] sm:$0xff]
        %v2245 = vld [vmem:[%s5 + $0xe0] sm:$0xff]
        %v2246 = vld [vmem:[%s5 + $0xe8] sm:$0xff]
        %v2247 = vld [vmem:[%s5 + $0xf0] sm:$0xff]
        %v2248 = vld [vmem:[%s5 + $0xf8] sm:$0xff]
        %v2249 = vld [vmem:[%s6] sm:$0x3]
        %v2251 = vlaneseq
        %v2252 = vshrl.u32 %v2251, 7
        %v2253 = vsub.s32 0, %v2252
        %v2254 = vrot.slane %v2249, %v2253
        %v2255 = vlaneseq
        %v2256 = vshrl.u32 %v2255, 7
        %v2257 = vsub.s32 1, %v2256
        %v2258 = vrot.slane %v2249, %v2257
        %v2293 = vunpack.c.l.b16 %v2217
        %v2294 = vunpack.c.h.b16 %v2217
        %v2295 = vunpack.c.l.b16 %v2218
        %v2296 = vunpack.c.h.b16 %v2218
        %v2297 = vunpack.c.l.b16 %v2219
        %v2298 = vunpack.c.h.b16 %v2219
        %v2299 = vunpack.c.l.b16 %v2220
        %v2300 = vunpack.c.h.b16 %v2220
        %v2301 = vunpack.c.l.b16 %v2221
        %v2302 = vunpack.c.h.b16 %v2221
        %v2303 = vunpack.c.l.b16 %v2222
        %v2304 = vunpack.c.h.b16 %v2222
        %v2305 = vunpack.c.l.b16 %v2223
        %v2306 = vunpack.c.h.b16 %v2223
        %v2307 = vunpack.c.l.b16 %v2224
        %v2308 = vunpack.c.h.b16 %v2224
        %v2309 = vunpack.c.l.b16 %v2225
        %v2310 = vunpack.c.h.b16 %v2225
        %v2311 = vunpack.c.l.b16 %v2226
        %v2312 = vunpack.c.h.b16 %v2226
        %v2313 = vunpack.c.l.b16 %v2227
        %v2314 = vunpack.c.h.b16 %v2227
        %v2315 = vunpack.c.l.b16 %v2228
        %v2316 = vunpack.c.h.b16 %v2228
        %v2317 = vunpack.c.l.b16 %v2229
        %v2318 = vunpack.c.h.b16 %v2229
        %v2319 = vunpack.c.l.b16 %v2230
        %v2320 = vunpack.c.h.b16 %v2230
        %v2321 = vunpack.c.l.b16 %v2231
        %v2322 = vunpack.c.h.b16 %v2231
        %v2323 = vunpack.c.l.b16 %v2232
        %v2324 = vunpack.c.h.b16 %v2232
        %v2325 = vunpack.c.l.b16 %v2233
        %v2326 = vunpack.c.h.b16 %v2233
        %v2327 = vunpack.c.l.b16 %v2234
        %v2328 = vunpack.c.h.b16 %v2234
        %v2329 = vunpack.c.l.b16 %v2235
        %v2330 = vunpack.c.h.b16 %v2235
        %v2331 = vunpack.c.l.b16 %v2236
        %v2332 = vunpack.c.h.b16 %v2236
        %v2333 = vunpack.c.l.b16 %v2237
        %v2334 = vunpack.c.h.b16 %v2237
        %v2335 = vunpack.c.l.b16 %v2238
        %v2336 = vunpack.c.h.b16 %v2238
        %v2337 = vunpack.c.l.b16 %v2239
        %v2338 = vunpack.c.h.b16 %v2239
        %v2339 = vunpack.c.l.b16 %v2240
        %v2340 = vunpack.c.h.b16 %v2240
        %v2341 = vunpack.c.l.b16 %v2241
        %v2342 = vunpack.c.h.b16 %v2241
        %v2343 = vunpack.c.l.b16 %v2242
        %v2344 = vunpack.c.h.b16 %v2242
        %v2345 = vunpack.c.l.b16 %v2243
        %v2346 = vunpack.c.h.b16 %v2243
        %v2347 = vunpack.c.l.b16 %v2244
        %v2348 = vunpack.c.h.b16 %v2244
        %v2349 = vunpack.c.l.b16 %v2245
        %v2350 = vunpack.c.h.b16 %v2245
        %v2351 = vunpack.c.l.b16 %v2246
        %v2352 = vunpack.c.h.b16 %v2246
        %v2353 = vunpack.c.l.b16 %v2247
        %v2354 = vunpack.c.h.b16 %v2247
        %v2355 = vunpack.c.l.b16 %v2248
        %v2356 = vunpack.c.h.b16 %v2248
        %v2357 = vpack.c.b16 %v2295, %v2293
        %v2358 = vpack.c.b16 %v2296, %v2294
        %v2359 = vpack.c.b16 %v2299, %v2297
        %v2360 = vpack.c.b16 %v2300, %v2298
        %v2361 = vpack.c.b16 %v2303, %v2301
        %v2362 = vpack.c.b16 %v2304, %v2302
        %v2363 = vpack.c.b16 %v2307, %v2305
        %v2364 = vpack.c.b16 %v2308, %v2306
        %v2365 = vpack.c.b16 %v2311, %v2309
        %v2366 = vpack.c.b16 %v2312, %v2310
        %v2367 = vpack.c.b16 %v2315, %v2313
        %v2368 = vpack.c.b16 %v2316, %v2314
        %v2369 = vpack.c.b16 %v2319, %v2317
        %v2370 = vpack.c.b16 %v2320, %v2318
        %v2371 = vpack.c.b16 %v2323, %v2321
        %v2372 = vpack.c.b16 %v2324, %v2322
        %v2373 = vpack.c.b16 %v2327, %v2325
        %v2374 = vpack.c.b16 %v2328, %v2326
        %v2375 = vpack.c.b16 %v2331, %v2329
        %v2376 = vpack.c.b16 %v2332, %v2330
        %v2377 = vpack.c.b16 %v2335, %v2333
        %v2378 = vpack.c.b16 %v2336, %v2334
        %v2379 = vpack.c.b16 %v2339, %v2337
        %v2380 = vpack.c.b16 %v2340, %v2338
        %v2381 = vpack.c.b16 %v2343, %v2341
        %v2382 = vpack.c.b16 %v2344, %v2342
        %v2383 = vpack.c.b16 %v2347, %v2345
        %v2384 = vpack.c.b16 %v2348, %v2346
        %v2385 = vpack.c.b16 %v2351, %v2349
        %v2386 = vpack.c.b16 %v2352, %v2350
        %v2387 = vpack.c.b16 %v2355, %v2353
        %v2388 = vpack.c.b16 %v2356, %v2354
        %2421 = vmatprep.subr.bf16.mxu0 %v2372
        %2422 = vmatpush1.bf16.msra.mxu0 %v2371
        %2423 = vmatprep.subr.bf16.mxu0 %v2370
        %2424 = vmatpush1.bf16.msra.mxu0 %v2369
        %2425 = vmatprep.subr.bf16.mxu0 %v2368
        %2426 = vmatpush1.bf16.msra.mxu0 %v2367
        %2427 = vmatprep.subr.bf16.mxu0 %v2366
        %2428 = vmatpush1.bf16.msra.mxu0 %v2365
        %2429 = vmatprep.subr.bf16.mxu0 %v2364
        %2430 = vmatpush1.bf16.msra.mxu0 %v2363
        %2431 = vmatprep.subr.bf16.mxu0 %v2362
        %2432 = vmatpush1.bf16.msra.mxu0 %v2361
        %2433 = vmatprep.subr.bf16.mxu0 %v2360
        %2434 = vmatpush1.bf16.msra.mxu0 %v2359
        %2435 = vmatprep.subr.bf16.mxu0 %v2358
        %2436 = vmatpush1.bf16.msra.mxu0 %v2357
        %2437 = vmatprep.subr.bf16.mxu0 %v2388
        %2438 = vmatpush2.bf16.msra.mxu0 %v2387
        %2439 = vmatprep.subr.bf16.mxu0 %v2386
        %2440 = vmatpush2.bf16.msra.mxu0 %v2385
        %2441 = vmatprep.subr.bf16.mxu0 %v2384
        %2442 = vmatpush2.bf16.msra.mxu0 %v2383
        %2443 = vmatprep.subr.bf16.mxu0 %v2382
        %2444 = vmatpush2.bf16.msra.mxu0 %v2381
        %2445 = vmatprep.subr.bf16.mxu0 %v2380
        %2446 = vmatpush2.bf16.msra.mxu0 %v2379
        %2447 = vmatprep.subr.bf16.mxu0 %v2378
        %2448 = vmatpush2.bf16.msra.mxu0 %v2377
        %2449 = vmatprep.subr.bf16.mxu0 %v2376
        %2450 = vmatpush2.bf16.msra.mxu0 %v2375
        %2451 = vmatprep.subr.bf16.mxu0 %v2374
        %2452 = vmatpush2.bf16.msra.mxu0 %v2373
        %2453 = vmatprep.mubr.bf16.mxu0 %v2170
        %2454 = vmatmul.mubr.bf16.gmra.mxu0 %v2169
        %v2455 = vpop.f32.mrf.mxu0
        %v2456 = vadd.f32 %v2254, %v2455
        %v2457 = vpop.f32.mrf.mxu0
        %v2458 = vadd.f32 %v2258, %v2457
        %v2459 = vpop.f32.mrf.mxu0
        %v2460 = vadd.f32 %v2254, %v2459
        %v2461 = vpop.f32.mrf.mxu0
        %v2462 = vadd.f32 %v2258, %v2461
        %2463 = vmatprep.mubr.bf16.mxu0 %v2172
        %2464 = vmatmul.mubr.bf16.gmra.mxu0 %v2171
        %v2465 = vpop.f32.mrf.mxu0
        %v2466 = vadd.f32 %v2254, %v2465
        %v2467 = vpop.f32.mrf.mxu0
        %v2468 = vadd.f32 %v2258, %v2467
        %v2469 = vpop.f32.mrf.mxu0
        %v2470 = vadd.f32 %v2254, %v2469
        %v2471 = vpop.f32.mrf.mxu0
        %v2472 = vadd.f32 %v2258, %v2471
        %2473 = vmatprep.mubr.bf16.mxu0 %v2174
        %2474 = vmatmul.mubr.bf16.gmra.mxu0 %v2173
        %v2475 = vpop.f32.mrf.mxu0
        %v2476 = vadd.f32 %v2254, %v2475
        %v2477 = vpop.f32.mrf.mxu0
        %v2478 = vadd.f32 %v2258, %v2477
        %v2479 = vpop.f32.mrf.mxu0
        %v2480 = vadd.f32 %v2254, %v2479
        %v2481 = vpop.f32.mrf.mxu0
        %v2482 = vadd.f32 %v2258, %v2481
        %2483 = vmatprep.mubr.bf16.mxu0 %v2176
        %2484 = vmatmul.mubr.bf16.gmra.mxu0 %v2175
        %v2485 = vpop.f32.mrf.mxu0
        %v2486 = vadd.f32 %v2254, %v2485
        %v2487 = vpop.f32.mrf.mxu0
        %v2488 = vadd.f32 %v2258, %v2487
        %v2489 = vpop.f32.mrf.mxu0
        %v2490 = vadd.f32 %v2254, %v2489
        %v2491 = vpop.f32.mrf.mxu0
        %v2492 = vadd.f32 %v2258, %v2491
        %2493 = vmatprep.mubr.bf16.mxu0 %v2178
        %2494 = vmatmul.mubr.bf16.gmra.mxu0 %v2177
        %v2495 = vpop.f32.mrf.mxu0
        %v2496 = vadd.f32 %v2254, %v2495
        %v2497 = vpop.f32.mrf.mxu0
        %v2498 = vadd.f32 %v2258, %v2497
        %v2499 = vpop.f32.mrf.mxu0
        %v2500 = vadd.f32 %v2254, %v2499
        %v2501 = vpop.f32.mrf.mxu0
        %v2502 = vadd.f32 %v2258, %v2501
        %2503 = vmatprep.mubr.bf16.mxu0 %v2180
        %2504 = vmatmul.mubr.bf16.gmra.mxu0 %v2179
        %v2505 = vpop.f32.mrf.mxu0
        %v2506 = vadd.f32 %v2254, %v2505
        %v2507 = vpop.f32.mrf.mxu0
        %v2508 = vadd.f32 %v2258, %v2507
        %v2509 = vpop.f32.mrf.mxu0
        %v2510 = vadd.f32 %v2254, %v2509
        %v2511 = vpop.f32.mrf.mxu0
        %v2512 = vadd.f32 %v2258, %v2511
        %2513 = vmatprep.mubr.bf16.mxu0 %v2182
        %2514 = vmatmul.mubr.bf16.gmra.mxu0 %v2181
        %v2515 = vpop.f32.mrf.mxu0
        %v2516 = vadd.f32 %v2254, %v2515
        %v2517 = vpop.f32.mrf.mxu0
        %v2518 = vadd.f32 %v2258, %v2517
        %v2519 = vpop.f32.mrf.mxu0
        %v2520 = vadd.f32 %v2254, %v2519
        %v2521 = vpop.f32.mrf.mxu0
        %v2522 = vadd.f32 %v2258, %v2521
        %2523 = vmatprep.mubr.bf16.mxu0 %v2184
        %2524 = vmatmul.mubr.bf16.gmra.mxu0 %v2183
        %v2525 = vpop.f32.mrf.mxu0
        %v2526 = vadd.f32 %v2254, %v2525
        %v2527 = vpop.f32.mrf.mxu0
        %v2528 = vadd.f32 %v2258, %v2527
        %v2529 = vpop.f32.mrf.mxu0
        %v2530 = vadd.f32 %v2254, %v2529
        %v2531 = vpop.f32.mrf.mxu0
        %v2532 = vadd.f32 %v2258, %v2531
        %2533 = vmatprep.mubr.bf16.mxu0 %v2186
        %2534 = vmatmul.mubr.bf16.gmra.mxu0 %v2185
        %v2535 = vpop.f32.mrf.mxu0
        %v2536 = vadd.f32 %v2254, %v2535
        %v2537 = vpop.f32.mrf.mxu0
        %v2538 = vadd.f32 %v2258, %v2537
        %v2539 = vpop.f32.mrf.mxu0
        %v2540 = vadd.f32 %v2254, %v2539
        %v2541 = vpop.f32.mrf.mxu0
        %v2542 = vadd.f32 %v2258, %v2541
        %2543 = vmatprep.mubr.bf16.mxu0 %v2188
        %2544 = vmatmul.mubr.bf16.gmra.mxu0 %v2187
        %v2545 = vpop.f32.mrf.mxu0
        %v2546 = vadd.f32 %v2254, %v2545
        %v2547 = vpop.f32.mrf.mxu0
        %v2548 = vadd.f32 %v2258, %v2547
        %v2549 = vpop.f32.mrf.mxu0
        %v2550 = vadd.f32 %v2254, %v2549
        %v2551 = vpop.f32.mrf.mxu0
        %v2552 = vadd.f32 %v2258, %v2551
        %2553 = vmatprep.mubr.bf16.mxu0 %v2190
        %2554 = vmatmul.mubr.bf16.gmra.mxu0 %v2189
        %v2555 = vpop.f32.mrf.mxu0
        %v2556 = vadd.f32 %v2254, %v2555
        %v2557 = vpop.f32.mrf.mxu0
        %v2558 = vadd.f32 %v2258, %v2557
        %v2559 = vpop.f32.mrf.mxu0
        %v2560 = vadd.f32 %v2254, %v2559
        %v2561 = vpop.f32.mrf.mxu0
        %v2562 = vadd.f32 %v2258, %v2561
        %2563 = vmatprep.mubr.bf16.mxu0 %v2192
        %2564 = vmatmul.mubr.bf16.gmra.mxu0 %v2191
        %v2565 = vpop.f32.mrf.mxu0
        %v2566 = vadd.f32 %v2254, %v2565
        %v2567 = vpop.f32.mrf.mxu0
        %v2568 = vadd.f32 %v2258, %v2567
        %v2569 = vpop.f32.mrf.mxu0
        %v2570 = vadd.f32 %v2254, %v2569
        %v2571 = vpop.f32.mrf.mxu0
        %v2572 = vadd.f32 %v2258, %v2571
        %2573 = vmatprep.mubr.bf16.mxu0 %v2194
        %2574 = vmatmul.mubr.bf16.gmra.mxu0 %v2193
        %v2575 = vpop.f32.mrf.mxu0
        %v2576 = vadd.f32 %v2254, %v2575
        %v2577 = vpop.f32.mrf.mxu0
        %v2578 = vadd.f32 %v2258, %v2577
        %v2579 = vpop.f32.mrf.mxu0
        %v2580 = vadd.f32 %v2254, %v2579
        %v2581 = vpop.f32.mrf.mxu0
        %v2582 = vadd.f32 %v2258, %v2581
        %2583 = vmatprep.mubr.bf16.mxu0 %v2196
        %2584 = vmatmul.mubr.bf16.gmra.mxu0 %v2195
        %v2585 = vpop.f32.mrf.mxu0
        %v2586 = vadd.f32 %v2254, %v2585
        %v2587 = vpop.f32.mrf.mxu0
        %v2588 = vadd.f32 %v2258, %v2587
        %v2589 = vpop.f32.mrf.mxu0
        %v2590 = vadd.f32 %v2254, %v2589
        %v2591 = vpop.f32.mrf.mxu0
        %v2592 = vadd.f32 %v2258, %v2591
        %2593 = vmatprep.mubr.bf16.mxu0 %v2198
        %2594 = vmatmul.mubr.bf16.gmra.mxu0 %v2197
        %v2595 = vpop.f32.mrf.mxu0
        %v2596 = vadd.f32 %v2254, %v2595
        %v2597 = vpop.f32.mrf.mxu0
        %v2598 = vadd.f32 %v2258, %v2597
        %v2599 = vpop.f32.mrf.mxu0
        %v2600 = vadd.f32 %v2254, %v2599
        %v2601 = vpop.f32.mrf.mxu0
        %v2602 = vadd.f32 %v2258, %v2601
        %2603 = vmatprep.mubr.bf16.mxu0 %v2200
        %2604 = vmatmul.mubr.bf16.gmra.mxu0 %v2199
        %v2605 = vpop.f32.mrf.mxu0
        %v2606 = vadd.f32 %v2254, %v2605
        %v2607 = vpop.f32.mrf.mxu0
        %v2608 = vadd.f32 %v2258, %v2607
        %v2609 = vpop.f32.mrf.mxu0
        %v2610 = vadd.f32 %v2254, %v2609
        %v2611 = vpop.f32.mrf.mxu0
        %v2612 = vadd.f32 %v2258, %v2611
        %2613 = vmatprep.mubr.bf16.mxu0 %v2202
        %2614 = vmatmul.mubr.bf16.gmra.mxu0 %v2201
        %v2615 = vpop.f32.mrf.mxu0
        %v2616 = vadd.f32 %v2254, %v2615
        %v2617 = vpop.f32.mrf.mxu0
        %v2618 = vadd.f32 %v2258, %v2617
        %v2619 = vpop.f32.mrf.mxu0
        %v2620 = vadd.f32 %v2254, %v2619
        %v2621 = vpop.f32.mrf.mxu0
        %v2622 = vadd.f32 %v2258, %v2621
        %2623 = vmatprep.mubr.bf16.mxu0 %v2204
        %2624 = vmatmul.mubr.bf16.gmra.mxu0 %v2203
        %v2625 = vpop.f32.mrf.mxu0
        %v2626 = vadd.f32 %v2254, %v2625
        %v2627 = vpop.f32.mrf.mxu0
        %v2628 = vadd.f32 %v2258, %v2627
        %v2629 = vpop.f32.mrf.mxu0
        %v2630 = vadd.f32 %v2254, %v2629
        %v2631 = vpop.f32.mrf.mxu0
        %v2632 = vadd.f32 %v2258, %v2631
        %2633 = vmatprep.mubr.bf16.mxu0 %v2206
        %2634 = vmatmul.mubr.bf16.gmra.mxu0 %v2205
        %v2635 = vpop.f32.mrf.mxu0
        %v2636 = vadd.f32 %v2254, %v2635
        %v2637 = vpop.f32.mrf.mxu0
        %v2638 = vadd.f32 %v2258, %v2637
        %v2639 = vpop.f32.mrf.mxu0
        %v2640 = vadd.f32 %v2254, %v2639
        %v2641 = vpop.f32.mrf.mxu0
        %v2642 = vadd.f32 %v2258, %v2641
        %2643 = vmatprep.mubr.bf16.mxu0 %v2208
        %2644 = vmatmul.mubr.bf16.gmra.mxu0 %v2207
        %v2645 = vpop.f32.mrf.mxu0
        %v2646 = vadd.f32 %v2254, %v2645
        %v2647 = vpop.f32.mrf.mxu0
        %v2648 = vadd.f32 %v2258, %v2647
        %v2649 = vpop.f32.mrf.mxu0
        %v2650 = vadd.f32 %v2254, %v2649
        %v2651 = vpop.f32.mrf.mxu0
        %v2652 = vadd.f32 %v2258, %v2651
        %2653 = vmatprep.mubr.bf16.mxu0 %v2210
        %2654 = vmatmul.mubr.bf16.gmra.mxu0 %v2209
        %v2655 = vpop.f32.mrf.mxu0
        %v2656 = vadd.f32 %v2254, %v2655
        %v2657 = vpop.f32.mrf.mxu0
        %v2658 = vadd.f32 %v2258, %v2657
        %v2659 = vpop.f32.mrf.mxu0
        %v2660 = vadd.f32 %v2254, %v2659
        %v2661 = vpop.f32.mrf.mxu0
        %v2662 = vadd.f32 %v2258, %v2661
        %2663 = vmatprep.mubr.bf16.mxu0 %v2212
        %2664 = vmatmul.mubr.bf16.gmra.mxu0 %v2211
        %v2665 = vpop.f32.mrf.mxu0
        %v2666 = vadd.f32 %v2254, %v2665
        %v2667 = vpop.f32.mrf.mxu0
        %v2668 = vadd.f32 %v2258, %v2667
        %v2669 = vpop.f32.mrf.mxu0
        %v2670 = vadd.f32 %v2254, %v2669
        %v2671 = vpop.f32.mrf.mxu0
        %v2672 = vadd.f32 %v2258, %v2671
        %2673 = vmatprep.mubr.bf16.mxu0 %v2214
        %2674 = vmatmul.mubr.bf16.gmra.mxu0 %v2213
        %v2675 = vpop.f32.mrf.mxu0
        %v2676 = vadd.f32 %v2254, %v2675
        %v2677 = vpop.f32.mrf.mxu0
        %v2678 = vadd.f32 %v2258, %v2677
        %v2679 = vpop.f32.mrf.mxu0
        %v2680 = vadd.f32 %v2254, %v2679
        %v2681 = vpop.f32.mrf.mxu0
        %v2682 = vadd.f32 %v2258, %v2681
        %2683 = vmatprep.mubr.bf16.mxu0 %v2216
        %2684 = vmatmul.mubr.bf16.gmra.mxu0 %v2215
        %v2685 = vpop.f32.mrf.mxu0
        %v2686 = vadd.f32 %v2254, %v2685
        %v2687 = vpop.f32.mrf.mxu0
        %v2688 = vadd.f32 %v2258, %v2687
        %v2689 = vpop.f32.mrf.mxu0
        %v2690 = vadd.f32 %v2254, %v2689
        %v2691 = vpop.f32.mrf.mxu0
        %v2692 = vadd.f32 %v2258, %v2691
        %2693 = vdwg.mxu0
        %v2694 = vpack.c.bf16 %v2460, %v2456
        %v2695 = vpack.c.bf16 %v2462, %v2458
        %v2696 = vpack.c.bf16 %v2470, %v2466
        %v2697 = vpack.c.bf16 %v2472, %v2468
        %v2698 = vpack.c.bf16 %v2480, %v2476
        %v2699 = vpack.c.bf16 %v2482, %v2478
        %v2700 = vpack.c.bf16 %v2490, %v2486
        %v2701 = vpack.c.bf16 %v2492, %v2488
        %v2702 = vpack.c.bf16 %v2500, %v2496
        %v2703 = vpack.c.bf16 %v2502, %v2498
        %v2704 = vpack.c.bf16 %v2510, %v2506
        %v2705 = vpack.c.bf16 %v2512, %v2508
        %v2706 = vpack.c.bf16 %v2520, %v2516
        %v2707 = vpack.c.bf16 %v2522, %v2518
        %v2708 = vpack.c.bf16 %v2530, %v2526
        %v2709 = vpack.c.bf16 %v2532, %v2528
        %v2710 = vpack.c.bf16 %v2540, %v2536
        %v2711 = vpack.c.bf16 %v2542, %v2538
        %v2712 = vpack.c.bf16 %v2550, %v2546
        %v2713 = vpack.c.bf16 %v2552, %v2548
        %v2714 = vpack.c.bf16 %v2560, %v2556
        %v2715 = vpack.c.bf16 %v2562, %v2558
        %v2716 = vpack.c.bf16 %v2570, %v2566
        %v2717 = vpack.c.bf16 %v2572, %v2568
        %v2718 = vpack.c.bf16 %v2580, %v2576
        %v2719 = vpack.c.bf16 %v2582, %v2578
        %v2720 = vpack.c.bf16 %v2590, %v2586
        %v2721 = vpack.c.bf16 %v2592, %v2588
        %v2722 = vpack.c.bf16 %v2600, %v2596
        %v2723 = vpack.c.bf16 %v2602, %v2598
        %v2724 = vpack.c.bf16 %v2610, %v2606
        %v2725 = vpack.c.bf16 %v2612, %v2608
        %v2726 = vpack.c.bf16 %v2620, %v2616
        %v2727 = vpack.c.bf16 %v2622, %v2618
        %v2728 = vpack.c.bf16 %v2630, %v2626
        %v2729 = vpack.c.bf16 %v2632, %v2628
        %v2730 = vpack.c.bf16 %v2640, %v2636
        %v2731 = vpack.c.bf16 %v2642, %v2638
        %v2732 = vpack.c.bf16 %v2650, %v2646
        %v2733 = vpack.c.bf16 %v2652, %v2648
        %v2734 = vpack.c.bf16 %v2660, %v2656
        %v2735 = vpack.c.bf16 %v2662, %v2658
        %v2736 = vpack.c.bf16 %v2670, %v2666
        %v2737 = vpack.c.bf16 %v2672, %v2668
        %v2738 = vpack.c.bf16 %v2680, %v2676
        %v2739 = vpack.c.bf16 %v2682, %v2678
        %v2740 = vpack.c.bf16 %v2690, %v2686
        %v2741 = vpack.c.bf16 %v2692, %v2688
        %v2742 = vmax.bf16 %v2694, 0
        %v2743 = vmax.bf16 %v2695, 0
        %v2744 = vmax.bf16 %v2696, 0
        %v2745 = vmax.bf16 %v2697, 0
        %v2746 = vmax.bf16 %v2698, 0
        %v2747 = vmax.bf16 %v2699, 0
        %v2748 = vmax.bf16 %v2700, 0
        %v2749 = vmax.bf16 %v2701, 0
        %v2750 = vmax.bf16 %v2702, 0
        %v2751 = vmax.bf16 %v2703, 0
        %v2752 = vmax.bf16 %v2704, 0
        %v2753 = vmax.bf16 %v2705, 0
        %v2754 = vmax.bf16 %v2706, 0
        %v2755 = vmax.bf16 %v2707, 0
        %v2756 = vmax.bf16 %v2708, 0
        %v2757 = vmax.bf16 %v2709, 0
        %v2758 = vmax.bf16 %v2710, 0
        %v2759 = vmax.bf16 %v2711, 0
        %v2760 = vmax.bf16 %v2712, 0
        %v2761 = vmax.bf16 %v2713, 0
        %v2762 = vmax.bf16 %v2714, 0
        %v2763 = vmax.bf16 %v2715, 0
        %v2764 = vmax.bf16 %v2716, 0
        %v2765 = vmax.bf16 %v2717, 0
        %v2766 = vmax.bf16 %v2718, 0
        %v2767 = vmax.bf16 %v2719, 0
        %v2768 = vmax.bf16 %v2720, 0
        %v2769 = vmax.bf16 %v2721, 0
        %v2770 = vmax.bf16 %v2722, 0
        %v2771 = vmax.bf16 %v2723, 0
        %v2772 = vmax.bf16 %v2724, 0
        %v2773 = vmax.bf16 %v2725, 0
        %v2774 = vmax.bf16 %v2726, 0
        %v2775 = vmax.bf16 %v2727, 0
        %v2776 = vmax.bf16 %v2728, 0
        %v2777 = vmax.bf16 %v2729, 0
        %v2778 = vmax.bf16 %v2730, 0
        %v2779 = vmax.bf16 %v2731, 0
        %v2780 = vmax.bf16 %v2732, 0
        %v2781 = vmax.bf16 %v2733, 0
        %v2782 = vmax.bf16 %v2734, 0
        %v2783 = vmax.bf16 %v2735, 0
        %v2784 = vmax.bf16 %v2736, 0
        %v2785 = vmax.bf16 %v2737, 0
        %v2786 = vmax.bf16 %v2738, 0
        %v2787 = vmax.bf16 %v2739, 0
        %v2788 = vmax.bf16 %v2740, 0
        %v2789 = vmax.bf16 %v2741, 0
        %v2790 = vld [vmem:[%s7] sm:$0xff]
        %v2791 = vld [vmem:[%s7 + $0x8] sm:$0xff]
        %v2792 = vld [vmem:[%s7 + $0x10] sm:$0xff]
        %v2793 = vld [vmem:[%s7 + $0x18] sm:$0xff]
        %v2794 = vld [vmem:[%s7 + $0x20] sm:$0xff]
        %v2795 = vld [vmem:[%s7 + $0x28] sm:$0xff]
        %v2796 = vld [vmem:[%s7 + $0x30] sm:$0xff]
        %v2797 = vld [vmem:[%s7 + $0x38] sm:$0xff]
        %v2798 = vld [vmem:[%s7 + $0x40] sm:$0xff]
        %v2799 = vld [vmem:[%s7 + $0x48] sm:$0xff]
        %v2800 = vld [vmem:[%s7 + $0x50] sm:$0xff]
        %v2801 = vld [vmem:[%s7 + $0x58] sm:$0xff]
        %v2802 = vld [vmem:[%s7 + $0x60] sm:$0xff]
        %v2803 = vld [vmem:[%s7 + $0x68] sm:$0xff]
        %v2804 = vld [vmem:[%s7 + $0x70] sm:$0xff]
        %v2805 = vld [vmem:[%s7 + $0x78] sm:$0xff]
        %v2806 = vld [vmem:[%s7 + $0x80] sm:$0xff]
        %v2807 = vld [vmem:[%s7 + $0x88] sm:$0xff]
        %v2808 = vld [vmem:[%s7 + $0x90] sm:$0xff]
        %v2809 = vld [vmem:[%s7 + $0x98] sm:$0xff]
        %v2810 = vld [vmem:[%s7 + $0xa0] sm:$0xff]
        %v2811 = vld [vmem:[%s7 + $0xa8] sm:$0xff]
        %v2812 = vld [vmem:[%s7 + $0xb0] sm:$0xff]
        %v2813 = vld [vmem:[%s7 + $0xb8] sm:$0xff]
        %v2814 = vld [vmem:[%s7 + $0xc0] sm:$0xff]
        %v2815 = vld [vmem:[%s7 + $0xc8] sm:$0xff]
        %v2816 = vld [vmem:[%s7 + $0xd0] sm:$0xff]
        %v2817 = vld [vmem:[%s7 + $0xd8] sm:$0xff]
        %v2818 = vld [vmem:[%s7 + $0xe0] sm:$0xff]
        %v2819 = vld [vmem:[%s7 + $0xe8] sm:$0xff]
        %v2820 = vld [vmem:[%s7 + $0xf0] sm:$0xff]
        %v2821 = vld [vmem:[%s7 + $0xf8] sm:$0xff]
        %v2822 = vld [vmem:[%s8] sm:$0x3]
        %v2824 = vlaneseq
        %v2825 = vshrl.u32 %v2824, 7
        %v2826 = vsub.s32 0, %v2825
        %v2827 = vrot.slane %v2822, %v2826
        %v2828 = vlaneseq
        %v2829 = vshrl.u32 %v2828, 7
        %v2830 = vsub.s32 1, %v2829
        %v2831 = vrot.slane %v2822, %v2830
        %v2866 = vunpack.c.l.b16 %v2790
        %v2867 = vunpack.c.h.b16 %v2790
        %v2868 = vunpack.c.l.b16 %v2791
        %v2869 = vunpack.c.h.b16 %v2791
        %v2870 = vunpack.c.l.b16 %v2792
        %v2871 = vunpack.c.h.b16 %v2792
        %v2872 = vunpack.c.l.b16 %v2793
        %v2873 = vunpack.c.h.b16 %v2793
        %v2874 = vunpack.c.l.b16 %v2794
        %v2875 = vunpack.c.h.b16 %v2794
        %v2876 = vunpack.c.l.b16 %v2795
        %v2877 = vunpack.c.h.b16 %v2795
        %v2878 = vunpack.c.l.b16 %v2796
        %v2879 = vunpack.c.h.b16 %v2796
        %v2880 = vunpack.c.l.b16 %v2797
        %v2881 = vunpack.c.h.b16 %v2797
        %v2882 = vunpack.c.l.b16 %v2798
        %v2883 = vunpack.c.h.b16 %v2798
        %v2884 = vunpack.c.l.b16 %v2799
        %v2885 = vunpack.c.h.b16 %v2799
        %v2886 = vunpack.c.l.b16 %v2800
        %v2887 = vunpack.c.h.b16 %v2800
        %v2888 = vunpack.c.l.b16 %v2801
        %v2889 = vunpack.c.h.b16 %v2801
        %v2890 = vunpack.c.l.b16 %v2802
        %v2891 = vunpack.c.h.b16 %v2802
        %v2892 = vunpack.c.l.b16 %v2803
        %v2893 = vunpack.c.h.b16 %v2803
        %v2894 = vunpack.c.l.b16 %v2804
        %v2895 = vunpack.c.h.b16 %v2804
        %v2896 = vunpack.c.l.b16 %v2805
        %v2897 = vunpack.c.h.b16 %v2805
        %v2898 = vunpack.c.l.b16 %v2806
        %v2899 = vunpack.c.h.b16 %v2806
        %v2900 = vunpack.c.l.b16 %v2807
        %v2901 = vunpack.c.h.b16 %v2807
        %v2902 = vunpack.c.l.b16 %v2808
        %v2903 = vunpack.c.h.b16 %v2808
        %v2904 = vunpack.c.l.b16 %v2809
        %v2905 = vunpack.c.h.b16 %v2809
        %v2906 = vunpack.c.l.b16 %v2810
        %v2907 = vunpack.c.h.b16 %v2810
        %v2908 = vunpack.c.l.b16 %v2811
        %v2909 = vunpack.c.h.b16 %v2811
        %v2910 = vunpack.c.l.b16 %v2812
        %v2911 = vunpack.c.h.b16 %v2812
        %v2912 = vunpack.c.l.b16 %v2813
        %v2913 = vunpack.c.h.b16 %v2813
        %v2914 = vunpack.c.l.b16 %v2814
        %v2915 = vunpack.c.h.b16 %v2814
        %v2916 = vunpack.c.l.b16 %v2815
        %v2917 = vunpack.c.h.b16 %v2815
        %v2918 = vunpack.c.l.b16 %v2816
        %v2919 = vunpack.c.h.b16 %v2816
        %v2920 = vunpack.c.l.b16 %v2817
        %v2921 = vunpack.c.h.b16 %v2817
        %v2922 = vunpack.c.l.b16 %v2818
        %v2923 = vunpack.c.h.b16 %v2818
        %v2924 = vunpack.c.l.b16 %v2819
        %v2925 = vunpack.c.h.b16 %v2819
        %v2926 = vunpack.c.l.b16 %v2820
        %v2927 = vunpack.c.h.b16 %v2820
        %v2928 = vunpack.c.l.b16 %v2821
        %v2929 = vunpack.c.h.b16 %v2821
        %v2930 = vpack.c.b16 %v2868, %v2866
        %v2931 = vpack.c.b16 %v2869, %v2867
        %v2932 = vpack.c.b16 %v2872, %v2870
        %v2933 = vpack.c.b16 %v2873, %v2871
        %v2934 = vpack.c.b16 %v2876, %v2874
        %v2935 = vpack.c.b16 %v2877, %v2875
        %v2936 = vpack.c.b16 %v2880, %v2878
        %v2937 = vpack.c.b16 %v2881, %v2879
        %v2938 = vpack.c.b16 %v2884, %v2882
        %v2939 = vpack.c.b16 %v2885, %v2883
        %v2940 = vpack.c.b16 %v2888, %v2886
        %v2941 = vpack.c.b16 %v2889, %v2887
        %v2942 = vpack.c.b16 %v2892, %v2890
        %v2943 = vpack.c.b16 %v2893, %v2891
        %v2944 = vpack.c.b16 %v2896, %v2894
        %v2945 = vpack.c.b16 %v2897, %v2895
        %v2946 = vpack.c.b16 %v2900, %v2898
        %v2947 = vpack.c.b16 %v2901, %v2899
        %v2948 = vpack.c.b16 %v2904, %v2902
        %v2949 = vpack.c.b16 %v2905, %v2903
        %v2950 = vpack.c.b16 %v2908, %v2906
        %v2951 = vpack.c.b16 %v2909, %v2907
        %v2952 = vpack.c.b16 %v2912, %v2910
        %v2953 = vpack.c.b16 %v2913, %v2911
        %v2954 = vpack.c.b16 %v2916, %v2914
        %v2955 = vpack.c.b16 %v2917, %v2915
        %v2956 = vpack.c.b16 %v2920, %v2918
        %v2957 = vpack.c.b16 %v2921, %v2919
        %v2958 = vpack.c.b16 %v2924, %v2922
        %v2959 = vpack.c.b16 %v2925, %v2923
        %v2960 = vpack.c.b16 %v2928, %v2926
        %v2961 = vpack.c.b16 %v2929, %v2927
        %2994 = vmatprep.subr.bf16.mxu0 %v2945
        %2995 = vmatpush1.bf16.msra.mxu0 %v2944
        %2996 = vmatprep.subr.bf16.mxu0 %v2943
        %2997 = vmatpush1.bf16.msra.mxu0 %v2942
        %2998 = vmatprep.subr.bf16.mxu0 %v2941
        %2999 = vmatpush1.bf16.msra.mxu0 %v2940
        %3000 = vmatprep.subr.bf16.mxu0 %v2939
        %3001 = vmatpush1.bf16.msra.mxu0 %v2938
        %3002 = vmatprep.subr.bf16.mxu0 %v2937
        %3003 = vmatpush1.bf16.msra.mxu0 %v2936
        %3004 = vmatprep.subr.bf16.mxu0 %v2935
        %3005 = vmatpush1.bf16.msra.mxu0 %v2934
        %3006 = vmatprep.subr.bf16.mxu0 %v2933
        %3007 = vmatpush1.bf16.msra.mxu0 %v2932
        %3008 = vmatprep.subr.bf16.mxu0 %v2931
        %3009 = vmatpush1.bf16.msra.mxu0 %v2930
        %3010 = vmatprep.subr.bf16.mxu0 %v2961
        %3011 = vmatpush2.bf16.msra.mxu0 %v2960
        %3012 = vmatprep.subr.bf16.mxu0 %v2959
        %3013 = vmatpush2.bf16.msra.mxu0 %v2958
        %3014 = vmatprep.subr.bf16.mxu0 %v2957
        %3015 = vmatpush2.bf16.msra.mxu0 %v2956
        %3016 = vmatprep.subr.bf16.mxu0 %v2955
        %3017 = vmatpush2.bf16.msra.mxu0 %v2954
        %3018 = vmatprep.subr.bf16.mxu0 %v2953
        %3019 = vmatpush2.bf16.msra.mxu0 %v2952
        %3020 = vmatprep.subr.bf16.mxu0 %v2951
        %3021 = vmatpush2.bf16.msra.mxu0 %v2950
        %3022 = vmatprep.subr.bf16.mxu0 %v2949
        %3023 = vmatpush2.bf16.msra.mxu0 %v2948
        %3024 = vmatprep.subr.bf16.mxu0 %v2947
        %3025 = vmatpush2.bf16.msra.mxu0 %v2946
        %3026 = vmatprep.mubr.bf16.mxu0 %v2743
        %3027 = vmatmul.mubr.bf16.gmra.mxu0 %v2742
        %v3028 = vpop.f32.mrf.mxu0
        %v3029 = vadd.f32 %v2827, %v3028
        %v3030 = vpop.f32.mrf.mxu0
        %v3031 = vadd.f32 %v2831, %v3030
        %v3032 = vpop.f32.mrf.mxu0
        %v3033 = vadd.f32 %v2827, %v3032
        %v3034 = vpop.f32.mrf.mxu0
        %v3035 = vadd.f32 %v2831, %v3034
        %3036 = vmatprep.mubr.bf16.mxu0 %v2745
        %3037 = vmatmul.mubr.bf16.gmra.mxu0 %v2744
        %v3038 = vpop.f32.mrf.mxu0
        %v3039 = vadd.f32 %v2827, %v3038
        %v3040 = vpop.f32.mrf.mxu0
        %v3041 = vadd.f32 %v2831, %v3040
        %v3042 = vpop.f32.mrf.mxu0
        %v3043 = vadd.f32 %v2827, %v3042
        %v3044 = vpop.f32.mrf.mxu0
        %v3045 = vadd.f32 %v2831, %v3044
        %3046 = vmatprep.mubr.bf16.mxu0 %v2747
        %3047 = vmatmul.mubr.bf16.gmra.mxu0 %v2746
        %v3048 = vpop.f32.mrf.mxu0
        %v3049 = vadd.f32 %v2827, %v3048
        %v3050 = vpop.f32.mrf.mxu0
        %v3051 = vadd.f32 %v2831, %v3050
        %v3052 = vpop.f32.mrf.mxu0
        %v3053 = vadd.f32 %v2827, %v3052
        %v3054 = vpop.f32.mrf.mxu0
        %v3055 = vadd.f32 %v2831, %v3054
        %3056 = vmatprep.mubr.bf16.mxu0 %v2749
        %3057 = vmatmul.mubr.bf16.gmra.mxu0 %v2748
        %v3058 = vpop.f32.mrf.mxu0
        %v3059 = vadd.f32 %v2827, %v3058
        %v3060 = vpop.f32.mrf.mxu0
        %v3061 = vadd.f32 %v2831, %v3060
        %v3062 = vpop.f32.mrf.mxu0
        %v3063 = vadd.f32 %v2827, %v3062
        %v3064 = vpop.f32.mrf.mxu0
        %v3065 = vadd.f32 %v2831, %v3064
        %3066 = vmatprep.mubr.bf16.mxu0 %v2751
        %3067 = vmatmul.mubr.bf16.gmra.mxu0 %v2750
        %v3068 = vpop.f32.mrf.mxu0
        %v3069 = vadd.f32 %v2827, %v3068
        %v3070 = vpop.f32.mrf.mxu0
        %v3071 = vadd.f32 %v2831, %v3070
        %v3072 = vpop.f32.mrf.mxu0
        %v3073 = vadd.f32 %v2827, %v3072
        %v3074 = vpop.f32.mrf.mxu0
        %v3075 = vadd.f32 %v2831, %v3074
        %3076 = vmatprep.mubr.bf16.mxu0 %v2753
        %3077 = vmatmul.mubr.bf16.gmra.mxu0 %v2752
        %v3078 = vpop.f32.mrf.mxu0
        %v3079 = vadd.f32 %v2827, %v3078
        %v3080 = vpop.f32.mrf.mxu0
        %v3081 = vadd.f32 %v2831, %v3080
        %v3082 = vpop.f32.mrf.mxu0
        %v3083 = vadd.f32 %v2827, %v3082
        %v3084 = vpop.f32.mrf.mxu0
        %v3085 = vadd.f32 %v2831, %v3084
        %3086 = vmatprep.mubr.bf16.mxu0 %v2755
        %3087 = vmatmul.mubr.bf16.gmra.mxu0 %v2754
        %v3088 = vpop.f32.mrf.mxu0
        %v3089 = vadd.f32 %v2827, %v3088
        %v3090 = vpop.f32.mrf.mxu0
        %v3091 = vadd.f32 %v2831, %v3090
        %v3092 = vpop.f32.mrf.mxu0
        %v3093 = vadd.f32 %v2827, %v3092
        %v3094 = vpop.f32.mrf.mxu0
        %v3095 = vadd.f32 %v2831, %v3094
        %3096 = vmatprep.mubr.bf16.mxu0 %v2757
        %3097 = vmatmul.mubr.bf16.gmra.mxu0 %v2756
        %v3098 = vpop.f32.mrf.mxu0
        %v3099 = vadd.f32 %v2827, %v3098
        %v3100 = vpop.f32.mrf.mxu0
        %v3101 = vadd.f32 %v2831, %v3100
        %v3102 = vpop.f32.mrf.mxu0
        %v3103 = vadd.f32 %v2827, %v3102
        %v3104 = vpop.f32.mrf.mxu0
        %v3105 = vadd.f32 %v2831, %v3104
        %3106 = vmatprep.mubr.bf16.mxu0 %v2759
        %3107 = vmatmul.mubr.bf16.gmra.mxu0 %v2758
        %v3108 = vpop.f32.mrf.mxu0
        %v3109 = vadd.f32 %v2827, %v3108
        %v3110 = vpop.f32.mrf.mxu0
        %v3111 = vadd.f32 %v2831, %v3110
        %v3112 = vpop.f32.mrf.mxu0
        %v3113 = vadd.f32 %v2827, %v3112
        %v3114 = vpop.f32.mrf.mxu0
        %v3115 = vadd.f32 %v2831, %v3114
        %3116 = vmatprep.mubr.bf16.mxu0 %v2761
        %3117 = vmatmul.mubr.bf16.gmra.mxu0 %v2760
        %v3118 = vpop.f32.mrf.mxu0
        %v3119 = vadd.f32 %v2827, %v3118
        %v3120 = vpop.f32.mrf.mxu0
        %v3121 = vadd.f32 %v2831, %v3120
        %v3122 = vpop.f32.mrf.mxu0
        %v3123 = vadd.f32 %v2827, %v3122
        %v3124 = vpop.f32.mrf.mxu0
        %v3125 = vadd.f32 %v2831, %v3124
        %3126 = vmatprep.mubr.bf16.mxu0 %v2763
        %3127 = vmatmul.mubr.bf16.gmra.mxu0 %v2762
        %v3128 = vpop.f32.mrf.mxu0
        %v3129 = vadd.f32 %v2827, %v3128
        %v3130 = vpop.f32.mrf.mxu0
        %v3131 = vadd.f32 %v2831, %v3130
        %v3132 = vpop.f32.mrf.mxu0
        %v3133 = vadd.f32 %v2827, %v3132
        %v3134 = vpop.f32.mrf.mxu0
        %v3135 = vadd.f32 %v2831, %v3134
        %3136 = vmatprep.mubr.bf16.mxu0 %v2765
        %3137 = vmatmul.mubr.bf16.gmra.mxu0 %v2764
        %v3138 = vpop.f32.mrf.mxu0
        %v3139 = vadd.f32 %v2827, %v3138
        %v3140 = vpop.f32.mrf.mxu0
        %v3141 = vadd.f32 %v2831, %v3140
        %v3142 = vpop.f32.mrf.mxu0
        %v3143 = vadd.f32 %v2827, %v3142
        %v3144 = vpop.f32.mrf.mxu0
        %v3145 = vadd.f32 %v2831, %v3144
        %3146 = vmatprep.mubr.bf16.mxu0 %v2767
        %3147 = vmatmul.mubr.bf16.gmra.mxu0 %v2766
        %v3148 = vpop.f32.mrf.mxu0
        %v3149 = vadd.f32 %v2827, %v3148
        %v3150 = vpop.f32.mrf.mxu0
        %v3151 = vadd.f32 %v2831, %v3150
        %v3152 = vpop.f32.mrf.mxu0
        %v3153 = vadd.f32 %v2827, %v3152
        %v3154 = vpop.f32.mrf.mxu0
        %v3155 = vadd.f32 %v2831, %v3154
        %3156 = vmatprep.mubr.bf16.mxu0 %v2769
        %3157 = vmatmul.mubr.bf16.gmra.mxu0 %v2768
        %v3158 = vpop.f32.mrf.mxu0
        %v3159 = vadd.f32 %v2827, %v3158
        %v3160 = vpop.f32.mrf.mxu0
        %v3161 = vadd.f32 %v2831, %v3160
        %v3162 = vpop.f32.mrf.mxu0
        %v3163 = vadd.f32 %v2827, %v3162
        %v3164 = vpop.f32.mrf.mxu0
        %v3165 = vadd.f32 %v2831, %v3164
        %3166 = vmatprep.mubr.bf16.mxu0 %v2771
        %3167 = vmatmul.mubr.bf16.gmra.mxu0 %v2770
        %v3168 = vpop.f32.mrf.mxu0
        %v3169 = vadd.f32 %v2827, %v3168
        %v3170 = vpop.f32.mrf.mxu0
        %v3171 = vadd.f32 %v2831, %v3170
        %v3172 = vpop.f32.mrf.mxu0
        %v3173 = vadd.f32 %v2827, %v3172
        %v3174 = vpop.f32.mrf.mxu0
        %v3175 = vadd.f32 %v2831, %v3174
        %3176 = vmatprep.mubr.bf16.mxu0 %v2773
        %3177 = vmatmul.mubr.bf16.gmra.mxu0 %v2772
        %v3178 = vpop.f32.mrf.mxu0
        %v3179 = vadd.f32 %v2827, %v3178
        %v3180 = vpop.f32.mrf.mxu0
        %v3181 = vadd.f32 %v2831, %v3180
        %v3182 = vpop.f32.mrf.mxu0
        %v3183 = vadd.f32 %v2827, %v3182
        %v3184 = vpop.f32.mrf.mxu0
        %v3185 = vadd.f32 %v2831, %v3184
        %3186 = vmatprep.mubr.bf16.mxu0 %v2775
        %3187 = vmatmul.mubr.bf16.gmra.mxu0 %v2774
        %v3188 = vpop.f32.mrf.mxu0
        %v3189 = vadd.f32 %v2827, %v3188
        %v3190 = vpop.f32.mrf.mxu0
        %v3191 = vadd.f32 %v2831, %v3190
        %v3192 = vpop.f32.mrf.mxu0
        %v3193 = vadd.f32 %v2827, %v3192
        %v3194 = vpop.f32.mrf.mxu0
        %v3195 = vadd.f32 %v2831, %v3194
        %3196 = vmatprep.mubr.bf16.mxu0 %v2777
        %3197 = vmatmul.mubr.bf16.gmra.mxu0 %v2776
        %v3198 = vpop.f32.mrf.mxu0
        %v3199 = vadd.f32 %v2827, %v3198
        %v3200 = vpop.f32.mrf.mxu0
        %v3201 = vadd.f32 %v2831, %v3200
        %v3202 = vpop.f32.mrf.mxu0
        %v3203 = vadd.f32 %v2827, %v3202
        %v3204 = vpop.f32.mrf.mxu0
        %v3205 = vadd.f32 %v2831, %v3204
        %3206 = vmatprep.mubr.bf16.mxu0 %v2779
        %3207 = vmatmul.mubr.bf16.gmra.mxu0 %v2778
        %v3208 = vpop.f32.mrf.mxu0
        %v3209 = vadd.f32 %v2827, %v3208
        %v3210 = vpop.f32.mrf.mxu0
        %v3211 = vadd.f32 %v2831, %v3210
        %v3212 = vpop.f32.mrf.mxu0
        %v3213 = vadd.f32 %v2827, %v3212
        %v3214 = vpop.f32.mrf.mxu0
        %v3215 = vadd.f32 %v2831, %v3214
        %3216 = vmatprep.mubr.bf16.mxu0 %v2781
        %3217 = vmatmul.mubr.bf16.gmra.mxu0 %v2780
        %v3218 = vpop.f32.mrf.mxu0
        %v3219 = vadd.f32 %v2827, %v3218
        %v3220 = vpop.f32.mrf.mxu0
        %v3221 = vadd.f32 %v2831, %v3220
        %v3222 = vpop.f32.mrf.mxu0
        %v3223 = vadd.f32 %v2827, %v3222
        %v3224 = vpop.f32.mrf.mxu0
        %v3225 = vadd.f32 %v2831, %v3224
        %3226 = vmatprep.mubr.bf16.mxu0 %v2783
        %3227 = vmatmul.mubr.bf16.gmra.mxu0 %v2782
        %v3228 = vpop.f32.mrf.mxu0
        %v3229 = vadd.f32 %v2827, %v3228
        %v3230 = vpop.f32.mrf.mxu0
        %v3231 = vadd.f32 %v2831, %v3230
        %v3232 = vpop.f32.mrf.mxu0
        %v3233 = vadd.f32 %v2827, %v3232
        %v3234 = vpop.f32.mrf.mxu0
        %v3235 = vadd.f32 %v2831, %v3234
        %3236 = vmatprep.mubr.bf16.mxu0 %v2785
        %3237 = vmatmul.mubr.bf16.gmra.mxu0 %v2784
        %v3238 = vpop.f32.mrf.mxu0
        %v3239 = vadd.f32 %v2827, %v3238
        %v3240 = vpop.f32.mrf.mxu0
        %v3241 = vadd.f32 %v2831, %v3240
        %v3242 = vpop.f32.mrf.mxu0
        %v3243 = vadd.f32 %v2827, %v3242
        %v3244 = vpop.f32.mrf.mxu0
        %v3245 = vadd.f32 %v2831, %v3244
        %3246 = vmatprep.mubr.bf16.mxu0 %v2787
        %3247 = vmatmul.mubr.bf16.gmra.mxu0 %v2786
        %v3248 = vpop.f32.mrf.mxu0
        %v3249 = vadd.f32 %v2827, %v3248
        %v3250 = vpop.f32.mrf.mxu0
        %v3251 = vadd.f32 %v2831, %v3250
        %v3252 = vpop.f32.mrf.mxu0
        %v3253 = vadd.f32 %v2827, %v3252
        %v3254 = vpop.f32.mrf.mxu0
        %v3255 = vadd.f32 %v2831, %v3254
        %3256 = vmatprep.mubr.bf16.mxu0 %v2789
        %3257 = vmatmul.mubr.bf16.gmra.mxu0 %v2788
        %v3258 = vpop.f32.mrf.mxu0
        %v3259 = vadd.f32 %v2827, %v3258
        %v3260 = vpop.f32.mrf.mxu0
        %v3261 = vadd.f32 %v2831, %v3260
        %v3262 = vpop.f32.mrf.mxu0
        %v3263 = vadd.f32 %v2827, %v3262
        %v3264 = vpop.f32.mrf.mxu0
        %v3265 = vadd.f32 %v2831, %v3264
        %3266 = vdwg.mxu0
        %v3267 = vpack.c.bf16 %v3033, %v3029
        %v3268 = vpack.c.bf16 %v3035, %v3031
        %v3269 = vpack.c.bf16 %v3043, %v3039
        %v3270 = vpack.c.bf16 %v3045, %v3041
        %v3271 = vpack.c.bf16 %v3053, %v3049
        %v3272 = vpack.c.bf16 %v3055, %v3051
        %v3273 = vpack.c.bf16 %v3063, %v3059
        %v3274 = vpack.c.bf16 %v3065, %v3061
        %v3275 = vpack.c.bf16 %v3073, %v3069
        %v3276 = vpack.c.bf16 %v3075, %v3071
        %v3277 = vpack.c.bf16 %v3083, %v3079
        %v3278 = vpack.c.bf16 %v3085, %v3081
        %v3279 = vpack.c.bf16 %v3093, %v3089
        %v3280 = vpack.c.bf16 %v3095, %v3091
        %v3281 = vpack.c.bf16 %v3103, %v3099
        %v3282 = vpack.c.bf16 %v3105, %v3101
        %v3283 = vpack.c.bf16 %v3113, %v3109
        %v3284 = vpack.c.bf16 %v3115, %v3111
        %v3285 = vpack.c.bf16 %v3123, %v3119
        %v3286 = vpack.c.bf16 %v3125, %v3121
        %v3287 = vpack.c.bf16 %v3133, %v3129
        %v3288 = vpack.c.bf16 %v3135, %v3131
        %v3289 = vpack.c.bf16 %v3143, %v3139
        %v3290 = vpack.c.bf16 %v3145, %v3141
        %v3291 = vpack.c.bf16 %v3153, %v3149
        %v3292 = vpack.c.bf16 %v3155, %v3151
        %v3293 = vpack.c.bf16 %v3163, %v3159
        %v3294 = vpack.c.bf16 %v3165, %v3161
        %v3295 = vpack.c.bf16 %v3173, %v3169
        %v3296 = vpack.c.bf16 %v3175, %v3171
        %v3297 = vpack.c.bf16 %v3183, %v3179
        %v3298 = vpack.c.bf16 %v3185, %v3181
        %v3299 = vpack.c.bf16 %v3193, %v3189
        %v3300 = vpack.c.bf16 %v3195, %v3191
        %v3301 = vpack.c.bf16 %v3203, %v3199
        %v3302 = vpack.c.bf16 %v3205, %v3201
        %v3303 = vpack.c.bf16 %v3213, %v3209
        %v3304 = vpack.c.bf16 %v3215, %v3211
        %v3305 = vpack.c.bf16 %v3223, %v3219
        %v3306 = vpack.c.bf16 %v3225, %v3221
        %v3307 = vpack.c.bf16 %v3233, %v3229
        %v3308 = vpack.c.bf16 %v3235, %v3231
        %v3309 = vpack.c.bf16 %v3243, %v3239
        %v3310 = vpack.c.bf16 %v3245, %v3241
        %v3311 = vpack.c.bf16 %v3253, %v3249
        %v3312 = vpack.c.bf16 %v3255, %v3251
        %v3313 = vpack.c.bf16 %v3263, %v3259
        %v3314 = vpack.c.bf16 %v3265, %v3261
        %v3315 = vmax.bf16 %v3267, 0
        %v3316 = vmax.bf16 %v3268, 0
        %v3317 = vmax.bf16 %v3269, 0
        %v3318 = vmax.bf16 %v3270, 0
        %v3319 = vmax.bf16 %v3271, 0
        %v3320 = vmax.bf16 %v3272, 0
        %v3321 = vmax.bf16 %v3273, 0
        %v3322 = vmax.bf16 %v3274, 0
        %v3323 = vmax.bf16 %v3275, 0
        %v3324 = vmax.bf16 %v3276, 0
        %v3325 = vmax.bf16 %v3277, 0
        %v3326 = vmax.bf16 %v3278, 0
        %v3327 = vmax.bf16 %v3279, 0
        %v3328 = vmax.bf16 %v3280, 0
        %v3329 = vmax.bf16 %v3281, 0
        %v3330 = vmax.bf16 %v3282, 0
        %v3331 = vmax.bf16 %v3283, 0
        %v3332 = vmax.bf16 %v3284, 0
        %v3333 = vmax.bf16 %v3285, 0
        %v3334 = vmax.bf16 %v3286, 0
        %v3335 = vmax.bf16 %v3287, 0
        %v3336 = vmax.bf16 %v3288, 0
        %v3337 = vmax.bf16 %v3289, 0
        %v3338 = vmax.bf16 %v3290, 0
        %v3339 = vmax.bf16 %v3291, 0
        %v3340 = vmax.bf16 %v3292, 0
        %v3341 = vmax.bf16 %v3293, 0
        %v3342 = vmax.bf16 %v3294, 0
        %v3343 = vmax.bf16 %v3295, 0
        %v3344 = vmax.bf16 %v3296, 0
        %v3345 = vmax.bf16 %v3297, 0
        %v3346 = vmax.bf16 %v3298, 0
        %v3347 = vmax.bf16 %v3299, 0
        %v3348 = vmax.bf16 %v3300, 0
        %v3349 = vmax.bf16 %v3301, 0
        %v3350 = vmax.bf16 %v3302, 0
        %v3351 = vmax.bf16 %v3303, 0
        %v3352 = vmax.bf16 %v3304, 0
        %v3353 = vmax.bf16 %v3305, 0
        %v3354 = vmax.bf16 %v3306, 0
        %v3355 = vmax.bf16 %v3307, 0
        %v3356 = vmax.bf16 %v3308, 0
        %v3357 = vmax.bf16 %v3309, 0
        %v3358 = vmax.bf16 %v3310, 0
        %v3359 = vmax.bf16 %v3311, 0
        %v3360 = vmax.bf16 %v3312, 0
        %v3361 = vmax.bf16 %v3313, 0
        %v3362 = vmax.bf16 %v3314, 0
        %v3363 = vld [vmem:[#allocation2] sm:$0xff]
        %v3364 = vld [vmem:[#allocation2 + $0x8] sm:$0xff]
        %v3365 = vld [vmem:[#allocation2 + $0x10] sm:$0xff]
        %v3366 = vld [vmem:[#allocation2 + $0x18] sm:$0xff]
        %v3367 = vld [vmem:[#allocation2 + $0x20] sm:$0xff]
        %v3368 = vld [vmem:[#allocation2 + $0x28] sm:$0xff]
        %v3369 = vld [vmem:[#allocation2 + $0x30] sm:$0xff]
        %v3370 = vld [vmem:[#allocation2 + $0x38] sm:$0xff]
        %v3371 = vld [vmem:[#allocation2 + $0x40] sm:$0xff]
        %v3372 = vld [vmem:[#allocation2 + $0x48] sm:$0xff]
        %v3373 = vld [vmem:[#allocation2 + $0x50] sm:$0xff]
        %v3374 = vld [vmem:[#allocation2 + $0x58] sm:$0xff]
        %v3375 = vld [vmem:[#allocation2 + $0x60] sm:$0xff]
        %v3376 = vld [vmem:[#allocation2 + $0x68] sm:$0xff]
        %v3377 = vld [vmem:[#allocation2 + $0x70] sm:$0xff]
        %v3378 = vld [vmem:[#allocation2 + $0x78] sm:$0xff]
        %v3379 = vld [vmem:[#allocation2 + $0x80] sm:$0xff]
        %v3380 = vld [vmem:[#allocation2 + $0x88] sm:$0xff]
        %v3381 = vld [vmem:[#allocation2 + $0x90] sm:$0xff]
        %v3382 = vld [vmem:[#allocation2 + $0x98] sm:$0xff]
        %v3383 = vld [vmem:[#allocation2 + $0xa0] sm:$0xff]
        %v3384 = vld [vmem:[#allocation2 + $0xa8] sm:$0xff]
        %v3385 = vld [vmem:[#allocation2 + $0xb0] sm:$0xff]
        %v3386 = vld [vmem:[#allocation2 + $0xb8] sm:$0xff]
        %v3387 = vld [vmem:[#allocation2 + $0xc0] sm:$0xff]
        %v3388 = vld [vmem:[#allocation2 + $0xc8] sm:$0xff]
        %v3389 = vld [vmem:[#allocation2 + $0xd0] sm:$0xff]
        %v3390 = vld [vmem:[#allocation2 + $0xd8] sm:$0xff]
        %v3391 = vld [vmem:[#allocation2 + $0xe0] sm:$0xff]
        %v3392 = vld [vmem:[#allocation2 + $0xe8] sm:$0xff]
        %v3393 = vld [vmem:[#allocation2 + $0xf0] sm:$0xff]
        %v3394 = vld [vmem:[#allocation2 + $0xf8] sm:$0xff]
        %v3395 = vld [vmem:[%s10] sm:$0x3]
        %v3397 = vlaneseq
        %v3398 = vshrl.u32 %v3397, 7
        %v3399 = vsub.s32 0, %v3398
        %v3400 = vrot.slane %v3395, %v3399
        %v3401 = vlaneseq
        %v3402 = vshrl.u32 %v3401, 7
        %v3403 = vsub.s32 1, %v3402
        %v3404 = vrot.slane %v3395, %v3403
        %v3439 = vunpack.c.l.b16 %v3363
        %v3440 = vunpack.c.h.b16 %v3363
        %v3441 = vunpack.c.l.b16 %v3364
        %v3442 = vunpack.c.h.b16 %v3364
        %v3443 = vunpack.c.l.b16 %v3365
        %v3444 = vunpack.c.h.b16 %v3365
        %v3445 = vunpack.c.l.b16 %v3366
        %v3446 = vunpack.c.h.b16 %v3366
        %v3447 = vunpack.c.l.b16 %v3367
        %v3448 = vunpack.c.h.b16 %v3367
        %v3449 = vunpack.c.l.b16 %v3368
        %v3450 = vunpack.c.h.b16 %v3368
        %v3451 = vunpack.c.l.b16 %v3369
        %v3452 = vunpack.c.h.b16 %v3369
        %v3453 = vunpack.c.l.b16 %v3370
        %v3454 = vunpack.c.h.b16 %v3370
        %v3455 = vunpack.c.l.b16 %v3371
        %v3456 = vunpack.c.h.b16 %v3371
        %v3457 = vunpack.c.l.b16 %v3372
        %v3458 = vunpack.c.h.b16 %v3372
        %v3459 = vunpack.c.l.b16 %v3373
        %v3460 = vunpack.c.h.b16 %v3373
        %v3461 = vunpack.c.l.b16 %v3374
        %v3462 = vunpack.c.h.b16 %v3374
        %v3463 = vunpack.c.l.b16 %v3375
        %v3464 = vunpack.c.h.b16 %v3375
        %v3465 = vunpack.c.l.b16 %v3376
        %v3466 = vunpack.c.h.b16 %v3376
        %v3467 = vunpack.c.l.b16 %v3377
        %v3468 = vunpack.c.h.b16 %v3377
        %v3469 = vunpack.c.l.b16 %v3378
        %v3470 = vunpack.c.h.b16 %v3378
        %v3471 = vunpack.c.l.b16 %v3379
        %v3472 = vunpack.c.h.b16 %v3379
        %v3473 = vunpack.c.l.b16 %v3380
        %v3474 = vunpack.c.h.b16 %v3380
        %v3475 = vunpack.c.l.b16 %v3381
        %v3476 = vunpack.c.h.b16 %v3381
        %v3477 = vunpack.c.l.b16 %v3382
        %v3478 = vunpack.c.h.b16 %v3382
        %v3479 = vunpack.c.l.b16 %v3383
        %v3480 = vunpack.c.h.b16 %v3383
        %v3481 = vunpack.c.l.b16 %v3384
        %v3482 = vunpack.c.h.b16 %v3384
        %v3483 = vunpack.c.l.b16 %v3385
        %v3484 = vunpack.c.h.b16 %v3385
        %v3485 = vunpack.c.l.b16 %v3386
        %v3486 = vunpack.c.h.b16 %v3386
        %v3487 = vunpack.c.l.b16 %v3387
        %v3488 = vunpack.c.h.b16 %v3387
        %v3489 = vunpack.c.l.b16 %v3388
        %v3490 = vunpack.c.h.b16 %v3388
        %v3491 = vunpack.c.l.b16 %v3389
        %v3492 = vunpack.c.h.b16 %v3389
        %v3493 = vunpack.c.l.b16 %v3390
        %v3494 = vunpack.c.h.b16 %v3390
        %v3495 = vunpack.c.l.b16 %v3391
        %v3496 = vunpack.c.h.b16 %v3391
        %v3497 = vunpack.c.l.b16 %v3392
        %v3498 = vunpack.c.h.b16 %v3392
        %v3499 = vunpack.c.l.b16 %v3393
        %v3500 = vunpack.c.h.b16 %v3393
        %v3501 = vunpack.c.l.b16 %v3394
        %v3502 = vunpack.c.h.b16 %v3394
        %v3503 = vpack.c.b16 %v3441, %v3439
        %v3504 = vpack.c.b16 %v3442, %v3440
        %v3505 = vpack.c.b16 %v3445, %v3443
        %v3506 = vpack.c.b16 %v3446, %v3444
        %v3507 = vpack.c.b16 %v3449, %v3447
        %v3508 = vpack.c.b16 %v3450, %v3448
        %v3509 = vpack.c.b16 %v3453, %v3451
        %v3510 = vpack.c.b16 %v3454, %v3452
        %v3511 = vpack.c.b16 %v3457, %v3455
        %v3512 = vpack.c.b16 %v3458, %v3456
        %v3513 = vpack.c.b16 %v3461, %v3459
        %v3514 = vpack.c.b16 %v3462, %v3460
        %v3515 = vpack.c.b16 %v3465, %v3463
        %v3516 = vpack.c.b16 %v3466, %v3464
        %v3517 = vpack.c.b16 %v3469, %v3467
        %v3518 = vpack.c.b16 %v3470, %v3468
        %v3519 = vpack.c.b16 %v3473, %v3471
        %v3520 = vpack.c.b16 %v3474, %v3472
        %v3521 = vpack.c.b16 %v3477, %v3475
        %v3522 = vpack.c.b16 %v3478, %v3476
        %v3523 = vpack.c.b16 %v3481, %v3479
        %v3524 = vpack.c.b16 %v3482, %v3480
        %v3525 = vpack.c.b16 %v3485, %v3483
        %v3526 = vpack.c.b16 %v3486, %v3484
        %v3527 = vpack.c.b16 %v3489, %v3487
        %v3528 = vpack.c.b16 %v3490, %v3488
        %v3529 = vpack.c.b16 %v3493, %v3491
        %v3530 = vpack.c.b16 %v3494, %v3492
        %v3531 = vpack.c.b16 %v3497, %v3495
        %v3532 = vpack.c.b16 %v3498, %v3496
        %v3533 = vpack.c.b16 %v3501, %v3499
        %v3534 = vpack.c.b16 %v3502, %v3500
        %3567 = vmatprep.subr.bf16.mxu0 %v3518
        %3568 = vmatpush1.bf16.msra.mxu0 %v3517
        %3569 = vmatprep.subr.bf16.mxu0 %v3516
        %3570 = vmatpush1.bf16.msra.mxu0 %v3515
        %3571 = vmatprep.subr.bf16.mxu0 %v3514
        %3572 = vmatpush1.bf16.msra.mxu0 %v3513
        %3573 = vmatprep.subr.bf16.mxu0 %v3512
        %3574 = vmatpush1.bf16.msra.mxu0 %v3511
        %3575 = vmatprep.subr.bf16.mxu0 %v3510
        %3576 = vmatpush1.bf16.msra.mxu0 %v3509
        %3577 = vmatprep.subr.bf16.mxu0 %v3508
        %3578 = vmatpush1.bf16.msra.mxu0 %v3507
        %3579 = vmatprep.subr.bf16.mxu0 %v3506
        %3580 = vmatpush1.bf16.msra.mxu0 %v3505
        %3581 = vmatprep.subr.bf16.mxu0 %v3504
        %3582 = vmatpush1.bf16.msra.mxu0 %v3503
        %3583 = vmatprep.subr.bf16.mxu0 %v3534
        %3584 = vmatpush2.bf16.msra.mxu0 %v3533
        %3585 = vmatprep.subr.bf16.mxu0 %v3532
        %3586 = vmatpush2.bf16.msra.mxu0 %v3531
        %3587 = vmatprep.subr.bf16.mxu0 %v3530
        %3588 = vmatpush2.bf16.msra.mxu0 %v3529
        %3589 = vmatprep.subr.bf16.mxu0 %v3528
        %3590 = vmatpush2.bf16.msra.mxu0 %v3527
        %3591 = vmatprep.subr.bf16.mxu0 %v3526
        %3592 = vmatpush2.bf16.msra.mxu0 %v3525
        %3593 = vmatprep.subr.bf16.mxu0 %v3524
        %3594 = vmatpush2.bf16.msra.mxu0 %v3523
        %3595 = vmatprep.subr.bf16.mxu0 %v3522
        %3596 = vmatpush2.bf16.msra.mxu0 %v3521
        %3597 = vmatprep.subr.bf16.mxu0 %v3520
        %3598 = vmatpush2.bf16.msra.mxu0 %v3519
        %3599 = vmatprep.mubr.bf16.mxu0 %v3316
        %3600 = vmatmul.mubr.bf16.gmra.mxu0 %v3315
        %v3601 = vpop.f32.mrf.mxu0
        %v3602 = vadd.f32 %v3400, %v3601
        %v3603 = vpop.f32.mrf.mxu0
        %v3604 = vadd.f32 %v3404, %v3603
        %v3605 = vpop.f32.mrf.mxu0
        %v3606 = vadd.f32 %v3400, %v3605
        %v3607 = vpop.f32.mrf.mxu0
        %v3608 = vadd.f32 %v3404, %v3607
        %3609 = vmatprep.mubr.bf16.mxu0 %v3318
        %3610 = vmatmul.mubr.bf16.gmra.mxu0 %v3317
        %v3611 = vpop.f32.mrf.mxu0
        %v3612 = vadd.f32 %v3400, %v3611
        %v3613 = vpop.f32.mrf.mxu0
        %v3614 = vadd.f32 %v3404, %v3613
        %v3615 = vpop.f32.mrf.mxu0
        %v3616 = vadd.f32 %v3400, %v3615
        %v3617 = vpop.f32.mrf.mxu0
        %v3618 = vadd.f32 %v3404, %v3617
        %3619 = vmatprep.mubr.bf16.mxu0 %v3320
        %3620 = vmatmul.mubr.bf16.gmra.mxu0 %v3319
        %v3621 = vpop.f32.mrf.mxu0
        %v3622 = vadd.f32 %v3400, %v3621
        %v3623 = vpop.f32.mrf.mxu0
        %v3624 = vadd.f32 %v3404, %v3623
        %v3625 = vpop.f32.mrf.mxu0
        %v3626 = vadd.f32 %v3400, %v3625
        %v3627 = vpop.f32.mrf.mxu0
        %v3628 = vadd.f32 %v3404, %v3627
        %3629 = vmatprep.mubr.bf16.mxu0 %v3322
        %3630 = vmatmul.mubr.bf16.gmra.mxu0 %v3321
        %v3631 = vpop.f32.mrf.mxu0
        %v3632 = vadd.f32 %v3400, %v3631
        %v3633 = vpop.f32.mrf.mxu0
        %v3634 = vadd.f32 %v3404, %v3633
        %v3635 = vpop.f32.mrf.mxu0
        %v3636 = vadd.f32 %v3400, %v3635
        %v3637 = vpop.f32.mrf.mxu0
        %v3638 = vadd.f32 %v3404, %v3637
        %3639 = vmatprep.mubr.bf16.mxu0 %v3324
        %3640 = vmatmul.mubr.bf16.gmra.mxu0 %v3323
        %v3641 = vpop.f32.mrf.mxu0
        %v3642 = vadd.f32 %v3400, %v3641
        %v3643 = vpop.f32.mrf.mxu0
        %v3644 = vadd.f32 %v3404, %v3643
        %v3645 = vpop.f32.mrf.mxu0
        %v3646 = vadd.f32 %v3400, %v3645
        %v3647 = vpop.f32.mrf.mxu0
        %v3648 = vadd.f32 %v3404, %v3647
        %3649 = vmatprep.mubr.bf16.mxu0 %v3326
        %3650 = vmatmul.mubr.bf16.gmra.mxu0 %v3325
        %v3651 = vpop.f32.mrf.mxu0
        %v3652 = vadd.f32 %v3400, %v3651
        %v3653 = vpop.f32.mrf.mxu0
        %v3654 = vadd.f32 %v3404, %v3653
        %v3655 = vpop.f32.mrf.mxu0
        %v3656 = vadd.f32 %v3400, %v3655
        %v3657 = vpop.f32.mrf.mxu0
        %v3658 = vadd.f32 %v3404, %v3657
        %3659 = vmatprep.mubr.bf16.mxu0 %v3328
        %3660 = vmatmul.mubr.bf16.gmra.mxu0 %v3327
        %v3661 = vpop.f32.mrf.mxu0
        %v3662 = vadd.f32 %v3400, %v3661
        %v3663 = vpop.f32.mrf.mxu0
        %v3664 = vadd.f32 %v3404, %v3663
        %v3665 = vpop.f32.mrf.mxu0
        %v3666 = vadd.f32 %v3400, %v3665
        %v3667 = vpop.f32.mrf.mxu0
        %v3668 = vadd.f32 %v3404, %v3667
        %3669 = vmatprep.mubr.bf16.mxu0 %v3330
        %3670 = vmatmul.mubr.bf16.gmra.mxu0 %v3329
        %v3671 = vpop.f32.mrf.mxu0
        %v3672 = vadd.f32 %v3400, %v3671
        %v3673 = vpop.f32.mrf.mxu0
        %v3674 = vadd.f32 %v3404, %v3673
        %v3675 = vpop.f32.mrf.mxu0
        %v3676 = vadd.f32 %v3400, %v3675
        %v3677 = vpop.f32.mrf.mxu0
        %v3678 = vadd.f32 %v3404, %v3677
        %3679 = vmatprep.mubr.bf16.mxu0 %v3332
        %3680 = vmatmul.mubr.bf16.gmra.mxu0 %v3331
        %v3681 = vpop.f32.mrf.mxu0
        %v3682 = vadd.f32 %v3400, %v3681
        %v3683 = vpop.f32.mrf.mxu0
        %v3684 = vadd.f32 %v3404, %v3683
        %v3685 = vpop.f32.mrf.mxu0
        %v3686 = vadd.f32 %v3400, %v3685
        %v3687 = vpop.f32.mrf.mxu0
        %v3688 = vadd.f32 %v3404, %v3687
        %3689 = vmatprep.mubr.bf16.mxu0 %v3334
        %3690 = vmatmul.mubr.bf16.gmra.mxu0 %v3333
        %v3691 = vpop.f32.mrf.mxu0
        %v3692 = vadd.f32 %v3400, %v3691
        %v3693 = vpop.f32.mrf.mxu0
        %v3694 = vadd.f32 %v3404, %v3693
        %v3695 = vpop.f32.mrf.mxu0
        %v3696 = vadd.f32 %v3400, %v3695
        %v3697 = vpop.f32.mrf.mxu0
        %v3698 = vadd.f32 %v3404, %v3697
        %3699 = vmatprep.mubr.bf16.mxu0 %v3336
        %3700 = vmatmul.mubr.bf16.gmra.mxu0 %v3335
        %v3701 = vpop.f32.mrf.mxu0
        %v3702 = vadd.f32 %v3400, %v3701
        %v3703 = vpop.f32.mrf.mxu0
        %v3704 = vadd.f32 %v3404, %v3703
        %v3705 = vpop.f32.mrf.mxu0
        %v3706 = vadd.f32 %v3400, %v3705
        %v3707 = vpop.f32.mrf.mxu0
        %v3708 = vadd.f32 %v3404, %v3707
        %3709 = vmatprep.mubr.bf16.mxu0 %v3338
        %3710 = vmatmul.mubr.bf16.gmra.mxu0 %v3337
        %v3711 = vpop.f32.mrf.mxu0
        %v3712 = vadd.f32 %v3400, %v3711
        %v3713 = vpop.f32.mrf.mxu0
        %v3714 = vadd.f32 %v3404, %v3713
        %v3715 = vpop.f32.mrf.mxu0
        %v3716 = vadd.f32 %v3400, %v3715
        %v3717 = vpop.f32.mrf.mxu0
        %v3718 = vadd.f32 %v3404, %v3717
        %3719 = vmatprep.mubr.bf16.mxu0 %v3340
        %3720 = vmatmul.mubr.bf16.gmra.mxu0 %v3339
        %v3721 = vpop.f32.mrf.mxu0
        %v3722 = vadd.f32 %v3400, %v3721
        %v3723 = vpop.f32.mrf.mxu0
        %v3724 = vadd.f32 %v3404, %v3723
        %v3725 = vpop.f32.mrf.mxu0
        %v3726 = vadd.f32 %v3400, %v3725
        %v3727 = vpop.f32.mrf.mxu0
        %v3728 = vadd.f32 %v3404, %v3727
        %3729 = vmatprep.mubr.bf16.mxu0 %v3342
        %3730 = vmatmul.mubr.bf16.gmra.mxu0 %v3341
        %v3731 = vpop.f32.mrf.mxu0
        %v3732 = vadd.f32 %v3400, %v3731
        %v3733 = vpop.f32.mrf.mxu0
        %v3734 = vadd.f32 %v3404, %v3733
        %v3735 = vpop.f32.mrf.mxu0
        %v3736 = vadd.f32 %v3400, %v3735
        %v3737 = vpop.f32.mrf.mxu0
        %v3738 = vadd.f32 %v3404, %v3737
        %3739 = vmatprep.mubr.bf16.mxu0 %v3344
        %3740 = vmatmul.mubr.bf16.gmra.mxu0 %v3343
        %v3741 = vpop.f32.mrf.mxu0
        %v3742 = vadd.f32 %v3400, %v3741
        %v3743 = vpop.f32.mrf.mxu0
        %v3744 = vadd.f32 %v3404, %v3743
        %v3745 = vpop.f32.mrf.mxu0
        %v3746 = vadd.f32 %v3400, %v3745
        %v3747 = vpop.f32.mrf.mxu0
        %v3748 = vadd.f32 %v3404, %v3747
        %3749 = vmatprep.mubr.bf16.mxu0 %v3346
        %3750 = vmatmul.mubr.bf16.gmra.mxu0 %v3345
        %v3751 = vpop.f32.mrf.mxu0
        %v3752 = vadd.f32 %v3400, %v3751
        %v3753 = vpop.f32.mrf.mxu0
        %v3754 = vadd.f32 %v3404, %v3753
        %v3755 = vpop.f32.mrf.mxu0
        %v3756 = vadd.f32 %v3400, %v3755
        %v3757 = vpop.f32.mrf.mxu0
        %v3758 = vadd.f32 %v3404, %v3757
        %3759 = vmatprep.mubr.bf16.mxu0 %v3348
        %3760 = vmatmul.mubr.bf16.gmra.mxu0 %v3347
        %v3761 = vpop.f32.mrf.mxu0
        %v3762 = vadd.f32 %v3400, %v3761
        %v3763 = vpop.f32.mrf.mxu0
        %v3764 = vadd.f32 %v3404, %v3763
        %v3765 = vpop.f32.mrf.mxu0
        %v3766 = vadd.f32 %v3400, %v3765
        %v3767 = vpop.f32.mrf.mxu0
        %v3768 = vadd.f32 %v3404, %v3767
        %3769 = vmatprep.mubr.bf16.mxu0 %v3350
        %3770 = vmatmul.mubr.bf16.gmra.mxu0 %v3349
        %v3771 = vpop.f32.mrf.mxu0
        %v3772 = vadd.f32 %v3400, %v3771
        %v3773 = vpop.f32.mrf.mxu0
        %v3774 = vadd.f32 %v3404, %v3773
        %v3775 = vpop.f32.mrf.mxu0
        %v3776 = vadd.f32 %v3400, %v3775
        %v3777 = vpop.f32.mrf.mxu0
        %v3778 = vadd.f32 %v3404, %v3777
        %3779 = vmatprep.mubr.bf16.mxu0 %v3352
        %3780 = vmatmul.mubr.bf16.gmra.mxu0 %v3351
        %v3781 = vpop.f32.mrf.mxu0
        %v3782 = vadd.f32 %v3400, %v3781
        %v3783 = vpop.f32.mrf.mxu0
        %v3784 = vadd.f32 %v3404, %v3783
        %v3785 = vpop.f32.mrf.mxu0
        %v3786 = vadd.f32 %v3400, %v3785
        %v3787 = vpop.f32.mrf.mxu0
        %v3788 = vadd.f32 %v3404, %v3787
        %3789 = vmatprep.mubr.bf16.mxu0 %v3354
        %3790 = vmatmul.mubr.bf16.gmra.mxu0 %v3353
        %v3791 = vpop.f32.mrf.mxu0
        %v3792 = vadd.f32 %v3400, %v3791
        %v3793 = vpop.f32.mrf.mxu0
        %v3794 = vadd.f32 %v3404, %v3793
        %v3795 = vpop.f32.mrf.mxu0
        %v3796 = vadd.f32 %v3400, %v3795
        %v3797 = vpop.f32.mrf.mxu0
        %v3798 = vadd.f32 %v3404, %v3797
        %3799 = vmatprep.mubr.bf16.mxu0 %v3356
        %3800 = vmatmul.mubr.bf16.gmra.mxu0 %v3355
        %v3801 = vpop.f32.mrf.mxu0
        %v3802 = vadd.f32 %v3400, %v3801
        %v3803 = vpop.f32.mrf.mxu0
        %v3804 = vadd.f32 %v3404, %v3803
        %v3805 = vpop.f32.mrf.mxu0
        %v3806 = vadd.f32 %v3400, %v3805
        %v3807 = vpop.f32.mrf.mxu0
        %v3808 = vadd.f32 %v3404, %v3807
        %3809 = vmatprep.mubr.bf16.mxu0 %v3358
        %3810 = vmatmul.mubr.bf16.gmra.mxu0 %v3357
        %v3811 = vpop.f32.mrf.mxu0
        %v3812 = vadd.f32 %v3400, %v3811
        %v3813 = vpop.f32.mrf.mxu0
        %v3814 = vadd.f32 %v3404, %v3813
        %v3815 = vpop.f32.mrf.mxu0
        %v3816 = vadd.f32 %v3400, %v3815
        %v3817 = vpop.f32.mrf.mxu0
        %v3818 = vadd.f32 %v3404, %v3817
        %3819 = vmatprep.mubr.bf16.mxu0 %v3360
        %3820 = vmatmul.mubr.bf16.gmra.mxu0 %v3359
        %v3821 = vpop.f32.mrf.mxu0
        %v3822 = vadd.f32 %v3400, %v3821
        %v3823 = vpop.f32.mrf.mxu0
        %v3824 = vadd.f32 %v3404, %v3823
        %v3825 = vpop.f32.mrf.mxu0
        %v3826 = vadd.f32 %v3400, %v3825
        %v3827 = vpop.f32.mrf.mxu0
        %v3828 = vadd.f32 %v3404, %v3827
        %3829 = vmatprep.mubr.bf16.mxu0 %v3362
        %3830 = vmatmul.mubr.bf16.gmra.mxu0 %v3361
        %v3831 = vpop.f32.mrf.mxu0
        %v3832 = vadd.f32 %v3400, %v3831
        %v3833 = vpop.f32.mrf.mxu0
        %v3834 = vadd.f32 %v3404, %v3833
        %v3835 = vpop.f32.mrf.mxu0
        %v3836 = vadd.f32 %v3400, %v3835
        %v3837 = vpop.f32.mrf.mxu0
        %v3838 = vadd.f32 %v3404, %v3837
        %3839 = vdwg.mxu0
        %v3840 = vpack.c.bf16 %v3606, %v3602
        %v3841 = vpack.c.bf16 %v3608, %v3604
        %v3842 = vpack.c.bf16 %v3616, %v3612
        %v3843 = vpack.c.bf16 %v3618, %v3614
        %v3844 = vpack.c.bf16 %v3626, %v3622
        %v3845 = vpack.c.bf16 %v3628, %v3624
        %v3846 = vpack.c.bf16 %v3636, %v3632
        %v3847 = vpack.c.bf16 %v3638, %v3634
        %v3848 = vpack.c.bf16 %v3646, %v3642
        %v3849 = vpack.c.bf16 %v3648, %v3644
        %v3850 = vpack.c.bf16 %v3656, %v3652
        %v3851 = vpack.c.bf16 %v3658, %v3654
        %v3852 = vpack.c.bf16 %v3666, %v3662
        %v3853 = vpack.c.bf16 %v3668, %v3664
        %v3854 = vpack.c.bf16 %v3676, %v3672
        %v3855 = vpack.c.bf16 %v3678, %v3674
        %v3856 = vpack.c.bf16 %v3686, %v3682
        %v3857 = vpack.c.bf16 %v3688, %v3684
        %v3858 = vpack.c.bf16 %v3696, %v3692
        %v3859 = vpack.c.bf16 %v3698, %v3694
        %v3860 = vpack.c.bf16 %v3706, %v3702
        %v3861 = vpack.c.bf16 %v3708, %v3704
        %v3862 = vpack.c.bf16 %v3716, %v3712
        %v3863 = vpack.c.bf16 %v3718, %v3714
        %v3864 = vpack.c.bf16 %v3726, %v3722
        %v3865 = vpack.c.bf16 %v3728, %v3724
        %v3866 = vpack.c.bf16 %v3736, %v3732
        %v3867 = vpack.c.bf16 %v3738, %v3734
        %v3868 = vpack.c.bf16 %v3746, %v3742
        %v3869 = vpack.c.bf16 %v3748, %v3744
        %v3870 = vpack.c.bf16 %v3756, %v3752
        %v3871 = vpack.c.bf16 %v3758, %v3754
        %v3872 = vpack.c.bf16 %v3766, %v3762
        %v3873 = vpack.c.bf16 %v3768, %v3764
        %v3874 = vpack.c.bf16 %v3776, %v3772
        %v3875 = vpack.c.bf16 %v3778, %v3774
        %v3876 = vpack.c.bf16 %v3786, %v3782
        %v3877 = vpack.c.bf16 %v3788, %v3784
        %v3878 = vpack.c.bf16 %v3796, %v3792
        %v3879 = vpack.c.bf16 %v3798, %v3794
        %v3880 = vpack.c.bf16 %v3806, %v3802
        %v3881 = vpack.c.bf16 %v3808, %v3804
        %v3882 = vpack.c.bf16 %v3816, %v3812
        %v3883 = vpack.c.bf16 %v3818, %v3814
        %v3884 = vpack.c.bf16 %v3826, %v3822
        %v3885 = vpack.c.bf16 %v3828, %v3824
        %v3886 = vpack.c.bf16 %v3836, %v3832
        %v3887 = vpack.c.bf16 %v3838, %v3834
        %v3888 = vmax.bf16 %v3840, 0
        %v3889 = vmax.bf16 %v3841, 0
        %v3890 = vmax.bf16 %v3842, 0
        %v3891 = vmax.bf16 %v3843, 0
        %v3892 = vmax.bf16 %v3844, 0
        %v3893 = vmax.bf16 %v3845, 0
        %v3894 = vmax.bf16 %v3846, 0
        %v3895 = vmax.bf16 %v3847, 0
        %v3896 = vmax.bf16 %v3848, 0
        %v3897 = vmax.bf16 %v3849, 0
        %v3898 = vmax.bf16 %v3850, 0
        %v3899 = vmax.bf16 %v3851, 0
        %v3900 = vmax.bf16 %v3852, 0
        %v3901 = vmax.bf16 %v3853, 0
        %v3902 = vmax.bf16 %v3854, 0
        %v3903 = vmax.bf16 %v3855, 0
        %v3904 = vmax.bf16 %v3856, 0
        %v3905 = vmax.bf16 %v3857, 0
        %v3906 = vmax.bf16 %v3858, 0
        %v3907 = vmax.bf16 %v3859, 0
        %v3908 = vmax.bf16 %v3860, 0
        %v3909 = vmax.bf16 %v3861, 0
        %v3910 = vmax.bf16 %v3862, 0
        %v3911 = vmax.bf16 %v3863, 0
        %v3912 = vmax.bf16 %v3864, 0
        %v3913 = vmax.bf16 %v3865, 0
        %v3914 = vmax.bf16 %v3866, 0
        %v3915 = vmax.bf16 %v3867, 0
        %v3916 = vmax.bf16 %v3868, 0
        %v3917 = vmax.bf16 %v3869, 0
        %v3918 = vmax.bf16 %v3870, 0
        %v3919 = vmax.bf16 %v3871, 0
        %v3920 = vmax.bf16 %v3872, 0
        %v3921 = vmax.bf16 %v3873, 0
        %v3922 = vmax.bf16 %v3874, 0
        %v3923 = vmax.bf16 %v3875, 0
        %v3924 = vmax.bf16 %v3876, 0
        %v3925 = vmax.bf16 %v3877, 0
        %v3926 = vmax.bf16 %v3878, 0
        %v3927 = vmax.bf16 %v3879, 0
        %v3928 = vmax.bf16 %v3880, 0
        %v3929 = vmax.bf16 %v3881, 0
        %v3930 = vmax.bf16 %v3882, 0
        %v3931 = vmax.bf16 %v3883, 0
        %v3932 = vmax.bf16 %v3884, 0
        %v3933 = vmax.bf16 %v3885, 0
        %v3934 = vmax.bf16 %v3886, 0
        %v3935 = vmax.bf16 %v3887, 0
        %v3936 = vld [vmem:[#allocation4] sm:$0xff]
        %v3937 = vld [vmem:[#allocation4 + $0x8] sm:$0xff]
        %v3938 = vld [vmem:[#allocation4 + $0x10] sm:$0xff]
        %v3939 = vld [vmem:[#allocation4 + $0x18] sm:$0xff]
        %v3940 = vld [vmem:[#allocation4 + $0x20] sm:$0xff]
        %v3941 = vld [vmem:[#allocation4 + $0x28] sm:$0xff]
        %v3942 = vld [vmem:[#allocation4 + $0x30] sm:$0xff]
        %v3943 = vld [vmem:[#allocation4 + $0x38] sm:$0xff]
        %v3944 = vld [vmem:[#allocation4 + $0x40] sm:$0xff]
        %v3945 = vld [vmem:[#allocation4 + $0x48] sm:$0xff]
        %v3946 = vld [vmem:[#allocation4 + $0x50] sm:$0xff]
        %v3947 = vld [vmem:[#allocation4 + $0x58] sm:$0xff]
        %v3948 = vld [vmem:[#allocation4 + $0x60] sm:$0xff]
        %v3949 = vld [vmem:[#allocation4 + $0x68] sm:$0xff]
        %v3950 = vld [vmem:[#allocation4 + $0x70] sm:$0xff]
        %v3951 = vld [vmem:[#allocation4 + $0x78] sm:$0xff]
        %v3952 = vld [vmem:[#allocation4 + $0x80] sm:$0xff]
        %v3953 = vld [vmem:[#allocation4 + $0x88] sm:$0xff]
        %v3954 = vld [vmem:[#allocation4 + $0x90] sm:$0xff]
        %v3955 = vld [vmem:[#allocation4 + $0x98] sm:$0xff]
        %v3956 = vld [vmem:[#allocation4 + $0xa0] sm:$0xff]
        %v3957 = vld [vmem:[#allocation4 + $0xa8] sm:$0xff]
        %v3958 = vld [vmem:[#allocation4 + $0xb0] sm:$0xff]
        %v3959 = vld [vmem:[#allocation4 + $0xb8] sm:$0xff]
        %v3960 = vld [vmem:[#allocation4 + $0xc0] sm:$0xff]
        %v3961 = vld [vmem:[#allocation4 + $0xc8] sm:$0xff]
        %v3962 = vld [vmem:[#allocation4 + $0xd0] sm:$0xff]
        %v3963 = vld [vmem:[#allocation4 + $0xd8] sm:$0xff]
        %v3964 = vld [vmem:[#allocation4 + $0xe0] sm:$0xff]
        %v3965 = vld [vmem:[#allocation4 + $0xe8] sm:$0xff]
        %v3966 = vld [vmem:[#allocation4 + $0xf0] sm:$0xff]
        %v3967 = vld [vmem:[#allocation4 + $0xf8] sm:$0xff]
        %v3968 = vunpack.c.l.bf16 %v1392
        %v3969 = vunpack.c.l.bf16 %v1393
        %v3970 = vunpack.c.h.bf16 %v1392
        %v3971 = vunpack.c.h.bf16 %v1393
        %v3972 = vunpack.c.l.bf16 %v1394
        %v3973 = vunpack.c.l.bf16 %v1395
        %v3974 = vunpack.c.h.bf16 %v1394
        %v3975 = vunpack.c.h.bf16 %v1395
        %v3976 = vunpack.c.l.bf16 %v1396
        %v3977 = vunpack.c.l.bf16 %v1397
        %v3978 = vunpack.c.h.bf16 %v1396
        %v3979 = vunpack.c.h.bf16 %v1397
        %v3980 = vunpack.c.l.bf16 %v1398
        %v3981 = vunpack.c.l.bf16 %v1399
        %v3982 = vunpack.c.h.bf16 %v1398
        %v3983 = vunpack.c.h.bf16 %v1399
        %v3984 = vunpack.c.l.bf16 %v1400
        %v3985 = vunpack.c.l.bf16 %v1401
        %v3986 = vunpack.c.h.bf16 %v1400
        %v3987 = vunpack.c.h.bf16 %v1401
        %v3988 = vunpack.c.l.bf16 %v1402
        %v3989 = vunpack.c.l.bf16 %v1403
        %v3990 = vunpack.c.h.bf16 %v1402
        %v3991 = vunpack.c.h.bf16 %v1403
        %v3992 = vunpack.c.l.bf16 %v1404
        %v3993 = vunpack.c.l.bf16 %v1405
        %v3994 = vunpack.c.h.bf16 %v1404
        %v3995 = vunpack.c.h.bf16 %v1405
        %v3996 = vunpack.c.l.bf16 %v1406
        %v3997 = vunpack.c.l.bf16 %v1407
        %v3998 = vunpack.c.h.bf16 %v1406
        %v3999 = vunpack.c.h.bf16 %v1407
        %v4000 = vunpack.c.l.bf16 %v1408
        %v4001 = vunpack.c.l.bf16 %v1409
        %v4002 = vunpack.c.h.bf16 %v1408
        %v4003 = vunpack.c.h.bf16 %v1409
        %v4004 = vunpack.c.l.bf16 %v1410
        %v4005 = vunpack.c.l.bf16 %v1411
        %v4006 = vunpack.c.h.bf16 %v1410
        %v4007 = vunpack.c.h.bf16 %v1411
        %v4008 = vunpack.c.l.bf16 %v1412
        %v4009 = vunpack.c.l.bf16 %v1413
        %v4010 = vunpack.c.h.bf16 %v1412
        %v4011 = vunpack.c.h.bf16 %v1413
        %v4012 = vunpack.c.l.bf16 %v1414
        %v4013 = vunpack.c.l.bf16 %v1415
        %v4014 = vunpack.c.h.bf16 %v1414
        %v4015 = vunpack.c.h.bf16 %v1415
        %v4016 = vunpack.c.l.bf16 %v1416
        %v4017 = vunpack.c.l.bf16 %v1417
        %v4018 = vunpack.c.h.bf16 %v1416
        %v4019 = vunpack.c.h.bf16 %v1417
        %v4020 = vunpack.c.l.bf16 %v1418
        %v4021 = vunpack.c.l.bf16 %v1419
        %v4022 = vunpack.c.h.bf16 %v1418
        %v4023 = vunpack.c.h.bf16 %v1419
        %v4024 = vunpack.c.l.bf16 %v1420
        %v4025 = vunpack.c.l.bf16 %v1421
        %v4026 = vunpack.c.h.bf16 %v1420
        %v4027 = vunpack.c.h.bf16 %v1421
        %v4028 = vunpack.c.l.bf16 %v1422
        %v4029 = vunpack.c.l.bf16 %v1423
        %v4030 = vunpack.c.h.bf16 %v1422
        %v4031 = vunpack.c.h.bf16 %v1423
        %v4032 = vunpack.c.l.bf16 %v1424
        %v4033 = vunpack.c.l.bf16 %v1425
        %v4034 = vunpack.c.h.bf16 %v1424
        %v4035 = vunpack.c.h.bf16 %v1425
        %v4036 = vunpack.c.l.bf16 %v1426
        %v4037 = vunpack.c.l.bf16 %v1427
        %v4038 = vunpack.c.h.bf16 %v1426
        %v4039 = vunpack.c.h.bf16 %v1427
        %v4040 = vunpack.c.l.bf16 %v1428
        %v4041 = vunpack.c.l.bf16 %v1429
        %v4042 = vunpack.c.h.bf16 %v1428
        %v4043 = vunpack.c.h.bf16 %v1429
        %v4044 = vunpack.c.l.bf16 %v1430
        %v4045 = vunpack.c.l.bf16 %v1431
        %v4046 = vunpack.c.h.bf16 %v1430
        %v4047 = vunpack.c.h.bf16 %v1431
        %v4048 = vunpack.c.l.bf16 %v1432
        %v4049 = vunpack.c.l.bf16 %v1433
        %v4050 = vunpack.c.h.bf16 %v1432
        %v4051 = vunpack.c.h.bf16 %v1433
        %v4052 = vunpack.c.l.bf16 %v1434
        %v4053 = vunpack.c.l.bf16 %v1435
        %v4054 = vunpack.c.h.bf16 %v1434
        %v4055 = vunpack.c.h.bf16 %v1435
        %v4056 = vunpack.c.l.bf16 %v1436
        %v4057 = vunpack.c.l.bf16 %v1437
        %v4058 = vunpack.c.h.bf16 %v1436
        %v4059 = vunpack.c.h.bf16 %v1437
        %v4060 = vunpack.c.l.bf16 %v1438
        %v4061 = vunpack.c.l.bf16 %v1439
        %v4062 = vunpack.c.h.bf16 %v1438
        %v4063 = vunpack.c.h.bf16 %v1439
        %v4096 = vunpack.c.l.b16 %v3936
        %v4097 = vunpack.c.h.b16 %v3936
        %v4098 = vunpack.c.l.b16 %v3937
        %v4099 = vunpack.c.h.b16 %v3937
        %v4100 = vunpack.c.l.b16 %v3938
        %v4101 = vunpack.c.h.b16 %v3938
        %v4102 = vunpack.c.l.b16 %v3939
        %v4103 = vunpack.c.h.b16 %v3939
        %v4104 = vunpack.c.l.b16 %v3940
        %v4105 = vunpack.c.h.b16 %v3940
        %v4106 = vunpack.c.l.b16 %v3941
        %v4107 = vunpack.c.h.b16 %v3941
        %v4108 = vunpack.c.l.b16 %v3942
        %v4109 = vunpack.c.h.b16 %v3942
        %v4110 = vunpack.c.l.b16 %v3943
        %v4111 = vunpack.c.h.b16 %v3943
        %v4112 = vunpack.c.l.b16 %v3944
        %v4113 = vunpack.c.h.b16 %v3944
        %v4114 = vunpack.c.l.b16 %v3945
        %v4115 = vunpack.c.h.b16 %v3945
        %v4116 = vunpack.c.l.b16 %v3946
        %v4117 = vunpack.c.h.b16 %v3946
        %v4118 = vunpack.c.l.b16 %v3947
        %v4119 = vunpack.c.h.b16 %v3947
        %v4120 = vunpack.c.l.b16 %v3948
        %v4121 = vunpack.c.h.b16 %v3948
        %v4122 = vunpack.c.l.b16 %v3949
        %v4123 = vunpack.c.h.b16 %v3949
        %v4124 = vunpack.c.l.b16 %v3950
        %v4125 = vunpack.c.h.b16 %v3950
        %v4126 = vunpack.c.l.b16 %v3951
        %v4127 = vunpack.c.h.b16 %v3951
        %v4128 = vunpack.c.l.b16 %v3952
        %v4129 = vunpack.c.h.b16 %v3952
        %v4130 = vunpack.c.l.b16 %v3953
        %v4131 = vunpack.c.h.b16 %v3953
        %v4132 = vunpack.c.l.b16 %v3954
        %v4133 = vunpack.c.h.b16 %v3954
        %v4134 = vunpack.c.l.b16 %v3955
        %v4135 = vunpack.c.h.b16 %v3955
        %v4136 = vunpack.c.l.b16 %v3956
        %v4137 = vunpack.c.h.b16 %v3956
        %v4138 = vunpack.c.l.b16 %v3957
        %v4139 = vunpack.c.h.b16 %v3957
        %v4140 = vunpack.c.l.b16 %v3958
        %v4141 = vunpack.c.h.b16 %v3958
        %v4142 = vunpack.c.l.b16 %v3959
        %v4143 = vunpack.c.h.b16 %v3959
        %v4144 = vunpack.c.l.b16 %v3960
        %v4145 = vunpack.c.h.b16 %v3960
        %v4146 = vunpack.c.l.b16 %v3961
        %v4147 = vunpack.c.h.b16 %v3961
        %v4148 = vunpack.c.l.b16 %v3962
        %v4149 = vunpack.c.h.b16 %v3962
        %v4150 = vunpack.c.l.b16 %v3963
        %v4151 = vunpack.c.h.b16 %v3963
        %v4152 = vunpack.c.l.b16 %v3964
        %v4153 = vunpack.c.h.b16 %v3964
        %v4154 = vunpack.c.l.b16 %v3965
        %v4155 = vunpack.c.h.b16 %v3965
        %v4156 = vunpack.c.l.b16 %v3966
        %v4157 = vunpack.c.h.b16 %v3966
        %v4158 = vunpack.c.l.b16 %v3967
        %v4159 = vunpack.c.h.b16 %v3967
        %v4160 = vpack.c.b16 %v4098, %v4096
        %v4161 = vpack.c.b16 %v4099, %v4097
        %v4162 = vpack.c.b16 %v4102, %v4100
        %v4163 = vpack.c.b16 %v4103, %v4101
        %v4164 = vpack.c.b16 %v4106, %v4104
        %v4165 = vpack.c.b16 %v4107, %v4105
        %v4166 = vpack.c.b16 %v4110, %v4108
        %v4167 = vpack.c.b16 %v4111, %v4109
        %v4168 = vpack.c.b16 %v4114, %v4112
        %v4169 = vpack.c.b16 %v4115, %v4113
        %v4170 = vpack.c.b16 %v4118, %v4116
        %v4171 = vpack.c.b16 %v4119, %v4117
        %v4172 = vpack.c.b16 %v4122, %v4120
        %v4173 = vpack.c.b16 %v4123, %v4121
        %v4174 = vpack.c.b16 %v4126, %v4124
        %v4175 = vpack.c.b16 %v4127, %v4125
        %v4176 = vpack.c.b16 %v4130, %v4128
        %v4177 = vpack.c.b16 %v4131, %v4129
        %v4178 = vpack.c.b16 %v4134, %v4132
        %v4179 = vpack.c.b16 %v4135, %v4133
        %v4180 = vpack.c.b16 %v4138, %v4136
        %v4181 = vpack.c.b16 %v4139, %v4137
        %v4182 = vpack.c.b16 %v4142, %v4140
        %v4183 = vpack.c.b16 %v4143, %v4141
        %v4184 = vpack.c.b16 %v4146, %v4144
        %v4185 = vpack.c.b16 %v4147, %v4145
        %v4186 = vpack.c.b16 %v4150, %v4148
        %v4187 = vpack.c.b16 %v4151, %v4149
        %v4188 = vpack.c.b16 %v4154, %v4152
        %v4189 = vpack.c.b16 %v4155, %v4153
        %v4190 = vpack.c.b16 %v4158, %v4156
        %v4191 = vpack.c.b16 %v4159, %v4157
        %4224 = vmatprep.subr.bf16.mxu0 %v4175
        %4225 = vmatpush1.bf16.msra.mxu0 %v4174
        %4226 = vmatprep.subr.bf16.mxu0 %v4173
        %4227 = vmatpush1.bf16.msra.mxu0 %v4172
        %4228 = vmatprep.subr.bf16.mxu0 %v4171
        %4229 = vmatpush1.bf16.msra.mxu0 %v4170
        %4230 = vmatprep.subr.bf16.mxu0 %v4169
        %4231 = vmatpush1.bf16.msra.mxu0 %v4168
        %4232 = vmatprep.subr.bf16.mxu0 %v4167
        %4233 = vmatpush1.bf16.msra.mxu0 %v4166
        %4234 = vmatprep.subr.bf16.mxu0 %v4165
        %4235 = vmatpush1.bf16.msra.mxu0 %v4164
        %4236 = vmatprep.subr.bf16.mxu0 %v4163
        %4237 = vmatpush1.bf16.msra.mxu0 %v4162
        %4238 = vmatprep.subr.bf16.mxu0 %v4161
        %4239 = vmatpush1.bf16.msra.mxu0 %v4160
        %4240 = vmatprep.subr.bf16.mxu0 %v4191
        %4241 = vmatpush2.bf16.msra.mxu0 %v4190
        %4242 = vmatprep.subr.bf16.mxu0 %v4189
        %4243 = vmatpush2.bf16.msra.mxu0 %v4188
        %4244 = vmatprep.subr.bf16.mxu0 %v4187
        %4245 = vmatpush2.bf16.msra.mxu0 %v4186
        %4246 = vmatprep.subr.bf16.mxu0 %v4185
        %4247 = vmatpush2.bf16.msra.mxu0 %v4184
        %4248 = vmatprep.subr.bf16.mxu0 %v4183
        %4249 = vmatpush2.bf16.msra.mxu0 %v4182
        %4250 = vmatprep.subr.bf16.mxu0 %v4181
        %4251 = vmatpush2.bf16.msra.mxu0 %v4180
        %4252 = vmatprep.subr.bf16.mxu0 %v4179
        %4253 = vmatpush2.bf16.msra.mxu0 %v4178
        %4254 = vmatprep.subr.bf16.mxu0 %v4177
        %4255 = vmatpush2.bf16.msra.mxu0 %v4176
        %4256 = vmatprep.mubr.bf16.mxu0 %v3889
        %4257 = vmatmul.mubr.bf16.gmra.mxu0 %v3888
        %v4258 = vpop.f32.mrf.mxu0
        %v4259 = vadd.f32 %v3968, %v4258
        %v4260 = vpop.f32.mrf.mxu0
        %v4261 = vadd.f32 %v3969, %v4260
        %v4262 = vpop.f32.mrf.mxu0
        %v4263 = vadd.f32 %v3970, %v4262
        %v4264 = vpop.f32.mrf.mxu0
        %v4265 = vadd.f32 %v3971, %v4264
        %4266 = vmatprep.mubr.bf16.mxu0 %v3891
        %4267 = vmatmul.mubr.bf16.gmra.mxu0 %v3890
        %v4268 = vpop.f32.mrf.mxu0
        %v4269 = vadd.f32 %v3972, %v4268
        %v4270 = vpop.f32.mrf.mxu0
        %v4271 = vadd.f32 %v3973, %v4270
        %v4272 = vpop.f32.mrf.mxu0
        %v4273 = vadd.f32 %v3974, %v4272
        %v4274 = vpop.f32.mrf.mxu0
        %v4275 = vadd.f32 %v3975, %v4274
        %4276 = vmatprep.mubr.bf16.mxu0 %v3893
        %4277 = vmatmul.mubr.bf16.gmra.mxu0 %v3892
        %v4278 = vpop.f32.mrf.mxu0
        %v4279 = vadd.f32 %v3976, %v4278
        %v4280 = vpop.f32.mrf.mxu0
        %v4281 = vadd.f32 %v3977, %v4280
        %v4282 = vpop.f32.mrf.mxu0
        %v4283 = vadd.f32 %v3978, %v4282
        %v4284 = vpop.f32.mrf.mxu0
        %v4285 = vadd.f32 %v3979, %v4284
        %4286 = vmatprep.mubr.bf16.mxu0 %v3895
        %4287 = vmatmul.mubr.bf16.gmra.mxu0 %v3894
        %v4288 = vpop.f32.mrf.mxu0
        %v4289 = vadd.f32 %v3980, %v4288
        %v4290 = vpop.f32.mrf.mxu0
        %v4291 = vadd.f32 %v3981, %v4290
        %v4292 = vpop.f32.mrf.mxu0
        %v4293 = vadd.f32 %v3982, %v4292
        %v4294 = vpop.f32.mrf.mxu0
        %v4295 = vadd.f32 %v3983, %v4294
        %4296 = vmatprep.mubr.bf16.mxu0 %v3897
        %4297 = vmatmul.mubr.bf16.gmra.mxu0 %v3896
        %v4298 = vpop.f32.mrf.mxu0
        %v4299 = vadd.f32 %v3984, %v4298
        %v4300 = vpop.f32.mrf.mxu0
        %v4301 = vadd.f32 %v3985, %v4300
        %v4302 = vpop.f32.mrf.mxu0
        %v4303 = vadd.f32 %v3986, %v4302
        %v4304 = vpop.f32.mrf.mxu0
        %v4305 = vadd.f32 %v3987, %v4304
        %4306 = vmatprep.mubr.bf16.mxu0 %v3899
        %4307 = vmatmul.mubr.bf16.gmra.mxu0 %v3898
        %v4308 = vpop.f32.mrf.mxu0
        %v4309 = vadd.f32 %v3988, %v4308
        %v4310 = vpop.f32.mrf.mxu0
        %v4311 = vadd.f32 %v3989, %v4310
        %v4312 = vpop.f32.mrf.mxu0
        %v4313 = vadd.f32 %v3990, %v4312
        %v4314 = vpop.f32.mrf.mxu0
        %v4315 = vadd.f32 %v3991, %v4314
        %4316 = vmatprep.mubr.bf16.mxu0 %v3901
        %4317 = vmatmul.mubr.bf16.gmra.mxu0 %v3900
        %v4318 = vpop.f32.mrf.mxu0
        %v4319 = vadd.f32 %v3992, %v4318
        %v4320 = vpop.f32.mrf.mxu0
        %v4321 = vadd.f32 %v3993, %v4320
        %v4322 = vpop.f32.mrf.mxu0
        %v4323 = vadd.f32 %v3994, %v4322
        %v4324 = vpop.f32.mrf.mxu0
        %v4325 = vadd.f32 %v3995, %v4324
        %4326 = vmatprep.mubr.bf16.mxu0 %v3903
        %4327 = vmatmul.mubr.bf16.gmra.mxu0 %v3902
        %v4328 = vpop.f32.mrf.mxu0
        %v4329 = vadd.f32 %v3996, %v4328
        %v4330 = vpop.f32.mrf.mxu0
        %v4331 = vadd.f32 %v3997, %v4330
        %v4332 = vpop.f32.mrf.mxu0
        %v4333 = vadd.f32 %v3998, %v4332
        %v4334 = vpop.f32.mrf.mxu0
        %v4335 = vadd.f32 %v3999, %v4334
        %4336 = vmatprep.mubr.bf16.mxu0 %v3905
        %4337 = vmatmul.mubr.bf16.gmra.mxu0 %v3904
        %v4338 = vpop.f32.mrf.mxu0
        %v4339 = vadd.f32 %v4000, %v4338
        %v4340 = vpop.f32.mrf.mxu0
        %v4341 = vadd.f32 %v4001, %v4340
        %v4342 = vpop.f32.mrf.mxu0
        %v4343 = vadd.f32 %v4002, %v4342
        %v4344 = vpop.f32.mrf.mxu0
        %v4345 = vadd.f32 %v4003, %v4344
        %4346 = vmatprep.mubr.bf16.mxu0 %v3907
        %4347 = vmatmul.mubr.bf16.gmra.mxu0 %v3906
        %v4348 = vpop.f32.mrf.mxu0
        %v4349 = vadd.f32 %v4004, %v4348
        %v4350 = vpop.f32.mrf.mxu0
        %v4351 = vadd.f32 %v4005, %v4350
        %v4352 = vpop.f32.mrf.mxu0
        %v4353 = vadd.f32 %v4006, %v4352
        %v4354 = vpop.f32.mrf.mxu0
        %v4355 = vadd.f32 %v4007, %v4354
        %4356 = vmatprep.mubr.bf16.mxu0 %v3909
        %4357 = vmatmul.mubr.bf16.gmra.mxu0 %v3908
        %v4358 = vpop.f32.mrf.mxu0
        %v4359 = vadd.f32 %v4008, %v4358
        %v4360 = vpop.f32.mrf.mxu0
        %v4361 = vadd.f32 %v4009, %v4360
        %v4362 = vpop.f32.mrf.mxu0
        %v4363 = vadd.f32 %v4010, %v4362
        %v4364 = vpop.f32.mrf.mxu0
        %v4365 = vadd.f32 %v4011, %v4364
        %4366 = vmatprep.mubr.bf16.mxu0 %v3911
        %4367 = vmatmul.mubr.bf16.gmra.mxu0 %v3910
        %v4368 = vpop.f32.mrf.mxu0
        %v4369 = vadd.f32 %v4012, %v4368
        %v4370 = vpop.f32.mrf.mxu0
        %v4371 = vadd.f32 %v4013, %v4370
        %v4372 = vpop.f32.mrf.mxu0
        %v4373 = vadd.f32 %v4014, %v4372
        %v4374 = vpop.f32.mrf.mxu0
        %v4375 = vadd.f32 %v4015, %v4374
        %4376 = vmatprep.mubr.bf16.mxu0 %v3913
        %4377 = vmatmul.mubr.bf16.gmra.mxu0 %v3912
        %v4378 = vpop.f32.mrf.mxu0
        %v4379 = vadd.f32 %v4016, %v4378
        %v4380 = vpop.f32.mrf.mxu0
        %v4381 = vadd.f32 %v4017, %v4380
        %v4382 = vpop.f32.mrf.mxu0
        %v4383 = vadd.f32 %v4018, %v4382
        %v4384 = vpop.f32.mrf.mxu0
        %v4385 = vadd.f32 %v4019, %v4384
        %4386 = vmatprep.mubr.bf16.mxu0 %v3915
        %4387 = vmatmul.mubr.bf16.gmra.mxu0 %v3914
        %v4388 = vpop.f32.mrf.mxu0
        %v4389 = vadd.f32 %v4020, %v4388
        %v4390 = vpop.f32.mrf.mxu0
        %v4391 = vadd.f32 %v4021, %v4390
        %v4392 = vpop.f32.mrf.mxu0
        %v4393 = vadd.f32 %v4022, %v4392
        %v4394 = vpop.f32.mrf.mxu0
        %v4395 = vadd.f32 %v4023, %v4394
        %4396 = vmatprep.mubr.bf16.mxu0 %v3917
        %4397 = vmatmul.mubr.bf16.gmra.mxu0 %v3916
        %v4398 = vpop.f32.mrf.mxu0
        %v4399 = vadd.f32 %v4024, %v4398
        %v4400 = vpop.f32.mrf.mxu0
        %v4401 = vadd.f32 %v4025, %v4400
        %v4402 = vpop.f32.mrf.mxu0
        %v4403 = vadd.f32 %v4026, %v4402
        %v4404 = vpop.f32.mrf.mxu0
        %v4405 = vadd.f32 %v4027, %v4404
        %4406 = vmatprep.mubr.bf16.mxu0 %v3919
        %4407 = vmatmul.mubr.bf16.gmra.mxu0 %v3918
        %v4408 = vpop.f32.mrf.mxu0
        %v4409 = vadd.f32 %v4028, %v4408
        %v4410 = vpop.f32.mrf.mxu0
        %v4411 = vadd.f32 %v4029, %v4410
        %v4412 = vpop.f32.mrf.mxu0
        %v4413 = vadd.f32 %v4030, %v4412
        %v4414 = vpop.f32.mrf.mxu0
        %v4415 = vadd.f32 %v4031, %v4414
        %4416 = vmatprep.mubr.bf16.mxu0 %v3921
        %4417 = vmatmul.mubr.bf16.gmra.mxu0 %v3920
        %v4418 = vpop.f32.mrf.mxu0
        %v4419 = vadd.f32 %v4032, %v4418
        %v4420 = vpop.f32.mrf.mxu0
        %v4421 = vadd.f32 %v4033, %v4420
        %v4422 = vpop.f32.mrf.mxu0
        %v4423 = vadd.f32 %v4034, %v4422
        %v4424 = vpop.f32.mrf.mxu0
        %v4425 = vadd.f32 %v4035, %v4424
        %4426 = vmatprep.mubr.bf16.mxu0 %v3923
        %4427 = vmatmul.mubr.bf16.gmra.mxu0 %v3922
        %v4428 = vpop.f32.mrf.mxu0
        %v4429 = vadd.f32 %v4036, %v4428
        %v4430 = vpop.f32.mrf.mxu0
        %v4431 = vadd.f32 %v4037, %v4430
        %v4432 = vpop.f32.mrf.mxu0
        %v4433 = vadd.f32 %v4038, %v4432
        %v4434 = vpop.f32.mrf.mxu0
        %v4435 = vadd.f32 %v4039, %v4434
        %4436 = vmatprep.mubr.bf16.mxu0 %v3925
        %4437 = vmatmul.mubr.bf16.gmra.mxu0 %v3924
        %v4438 = vpop.f32.mrf.mxu0
        %v4439 = vadd.f32 %v4040, %v4438
        %v4440 = vpop.f32.mrf.mxu0
        %v4441 = vadd.f32 %v4041, %v4440
        %v4442 = vpop.f32.mrf.mxu0
        %v4443 = vadd.f32 %v4042, %v4442
        %v4444 = vpop.f32.mrf.mxu0
        %v4445 = vadd.f32 %v4043, %v4444
        %4446 = vmatprep.mubr.bf16.mxu0 %v3927
        %4447 = vmatmul.mubr.bf16.gmra.mxu0 %v3926
        %v4448 = vpop.f32.mrf.mxu0
        %v4449 = vadd.f32 %v4044, %v4448
        %v4450 = vpop.f32.mrf.mxu0
        %v4451 = vadd.f32 %v4045, %v4450
        %v4452 = vpop.f32.mrf.mxu0
        %v4453 = vadd.f32 %v4046, %v4452
        %v4454 = vpop.f32.mrf.mxu0
        %v4455 = vadd.f32 %v4047, %v4454
        %4456 = vmatprep.mubr.bf16.mxu0 %v3929
        %4457 = vmatmul.mubr.bf16.gmra.mxu0 %v3928
        %v4458 = vpop.f32.mrf.mxu0
        %v4459 = vadd.f32 %v4048, %v4458
        %v4460 = vpop.f32.mrf.mxu0
        %v4461 = vadd.f32 %v4049, %v4460
        %v4462 = vpop.f32.mrf.mxu0
        %v4463 = vadd.f32 %v4050, %v4462
        %v4464 = vpop.f32.mrf.mxu0
        %v4465 = vadd.f32 %v4051, %v4464
        %4466 = vmatprep.mubr.bf16.mxu0 %v3931
        %4467 = vmatmul.mubr.bf16.gmra.mxu0 %v3930
        %v4468 = vpop.f32.mrf.mxu0
        %v4469 = vadd.f32 %v4052, %v4468
        %v4470 = vpop.f32.mrf.mxu0
        %v4471 = vadd.f32 %v4053, %v4470
        %v4472 = vpop.f32.mrf.mxu0
        %v4473 = vadd.f32 %v4054, %v4472
        %v4474 = vpop.f32.mrf.mxu0
        %v4475 = vadd.f32 %v4055, %v4474
        %4476 = vmatprep.mubr.bf16.mxu0 %v3933
        %4477 = vmatmul.mubr.bf16.gmra.mxu0 %v3932
        %v4478 = vpop.f32.mrf.mxu0
        %v4479 = vadd.f32 %v4056, %v4478
        %v4480 = vpop.f32.mrf.mxu0
        %v4481 = vadd.f32 %v4057, %v4480
        %v4482 = vpop.f32.mrf.mxu0
        %v4483 = vadd.f32 %v4058, %v4482
        %v4484 = vpop.f32.mrf.mxu0
        %v4485 = vadd.f32 %v4059, %v4484
        %4486 = vmatprep.mubr.bf16.mxu0 %v3935
        %4487 = vmatmul.mubr.bf16.gmra.mxu0 %v3934
        %v4488 = vpop.f32.mrf.mxu0
        %v4489 = vadd.f32 %v4060, %v4488
        %v4490 = vpop.f32.mrf.mxu0
        %v4491 = vadd.f32 %v4061, %v4490
        %v4492 = vpop.f32.mrf.mxu0
        %v4493 = vadd.f32 %v4062, %v4492
        %v4494 = vpop.f32.mrf.mxu0
        %v4495 = vadd.f32 %v4063, %v4494
        %4496 = vdwg.mxu0
        %v4497 = vld [vmem:[%s12] sm:$0x3]
        %v4499 = vlaneseq
        %v4500 = vshrl.u32 %v4499, 7
        %v4501 = vsub.s32 0, %v4500
        %v4502 = vrot.slane %v4497, %v4501
        %v4503 = vlaneseq
        %v4504 = vshrl.u32 %v4503, 7
        %v4505 = vsub.s32 1, %v4504
        %v4506 = vrot.slane %v4497, %v4505
        %v4509 = vadd.f32 %v4259, %v4502
        %v4510 = vadd.f32 %v4261, %v4506
        %v4511 = vadd.f32 %v4263, %v4502
        %v4512 = vadd.f32 %v4265, %v4506
        %v4513 = vadd.f32 %v4269, %v4502
        %v4514 = vadd.f32 %v4271, %v4506
        %v4515 = vadd.f32 %v4273, %v4502
        %v4516 = vadd.f32 %v4275, %v4506
        %v4517 = vadd.f32 %v4279, %v4502
        %v4518 = vadd.f32 %v4281, %v4506
        %v4519 = vadd.f32 %v4283, %v4502
        %v4520 = vadd.f32 %v4285, %v4506
        %v4521 = vadd.f32 %v4289, %v4502
        %v4522 = vadd.f32 %v4291, %v4506
        %v4523 = vadd.f32 %v4293, %v4502
        %v4524 = vadd.f32 %v4295, %v4506
        %v4525 = vadd.f32 %v4299, %v4502
        %v4526 = vadd.f32 %v4301, %v4506
        %v4527 = vadd.f32 %v4303, %v4502
        %v4528 = vadd.f32 %v4305, %v4506
        %v4529 = vadd.f32 %v4309, %v4502
        %v4530 = vadd.f32 %v4311, %v4506
        %v4531 = vadd.f32 %v4313, %v4502
        %v4532 = vadd.f32 %v4315, %v4506
        %v4533 = vadd.f32 %v4319, %v4502
        %v4534 = vadd.f32 %v4321, %v4506
        %v4535 = vadd.f32 %v4323, %v4502
        %v4536 = vadd.f32 %v4325, %v4506
        %v4537 = vadd.f32 %v4329, %v4502
        %v4538 = vadd.f32 %v4331, %v4506
        %v4539 = vadd.f32 %v4333, %v4502
        %v4540 = vadd.f32 %v4335, %v4506
        %v4541 = vadd.f32 %v4339, %v4502
        %v4542 = vadd.f32 %v4341, %v4506
        %v4543 = vadd.f32 %v4343, %v4502
        %v4544 = vadd.f32 %v4345, %v4506
        %v4545 = vadd.f32 %v4349, %v4502
        %v4546 = vadd.f32 %v4351, %v4506
        %v4547 = vadd.f32 %v4353, %v4502
        %v4548 = vadd.f32 %v4355, %v4506
        %v4549 = vadd.f32 %v4359, %v4502
        %v4550 = vadd.f32 %v4361, %v4506
        %v4551 = vadd.f32 %v4363, %v4502
        %v4552 = vadd.f32 %v4365, %v4506
        %v4553 = vadd.f32 %v4369, %v4502
        %v4554 = vadd.f32 %v4371, %v4506
        %v4555 = vadd.f32 %v4373, %v4502
        %v4556 = vadd.f32 %v4375, %v4506
        %v4557 = vadd.f32 %v4379, %v4502
        %v4558 = vadd.f32 %v4381, %v4506
        %v4559 = vadd.f32 %v4383, %v4502
        %v4560 = vadd.f32 %v4385, %v4506
        %v4561 = vadd.f32 %v4389, %v4502
        %v4562 = vadd.f32 %v4391, %v4506
        %v4563 = vadd.f32 %v4393, %v4502
        %v4564 = vadd.f32 %v4395, %v4506
        %v4565 = vadd.f32 %v4399, %v4502
        %v4566 = vadd.f32 %v4401, %v4506
        %v4567 = vadd.f32 %v4403, %v4502
        %v4568 = vadd.f32 %v4405, %v4506
        %v4569 = vadd.f32 %v4409, %v4502
        %v4570 = vadd.f32 %v4411, %v4506
        %v4571 = vadd.f32 %v4413, %v4502
        %v4572 = vadd.f32 %v4415, %v4506
        %v4573 = vadd.f32 %v4419, %v4502
        %v4574 = vadd.f32 %v4421, %v4506
        %v4575 = vadd.f32 %v4423, %v4502
        %v4576 = vadd.f32 %v4425, %v4506
        %v4577 = vadd.f32 %v4429, %v4502
        %v4578 = vadd.f32 %v4431, %v4506
        %v4579 = vadd.f32 %v4433, %v4502
        %v4580 = vadd.f32 %v4435, %v4506
        %v4581 = vadd.f32 %v4439, %v4502
        %v4582 = vadd.f32 %v4441, %v4506
        %v4583 = vadd.f32 %v4443, %v4502
        %v4584 = vadd.f32 %v4445, %v4506
        %v4585 = vadd.f32 %v4449, %v4502
        %v4586 = vadd.f32 %v4451, %v4506
        %v4587 = vadd.f32 %v4453, %v4502
        %v4588 = vadd.f32 %v4455, %v4506
        %v4589 = vadd.f32 %v4459, %v4502
        %v4590 = vadd.f32 %v4461, %v4506
        %v4591 = vadd.f32 %v4463, %v4502
        %v4592 = vadd.f32 %v4465, %v4506
        %v4593 = vadd.f32 %v4469, %v4502
        %v4594 = vadd.f32 %v4471, %v4506
        %v4595 = vadd.f32 %v4473, %v4502
        %v4596 = vadd.f32 %v4475, %v4506
        %v4597 = vadd.f32 %v4479, %v4502
        %v4598 = vadd.f32 %v4481, %v4506
        %v4599 = vadd.f32 %v4483, %v4502
        %v4600 = vadd.f32 %v4485, %v4506
        %v4601 = vadd.f32 %v4489, %v4502
        %v4602 = vadd.f32 %v4491, %v4506
        %v4603 = vadd.f32 %v4493, %v4502
        %v4604 = vadd.f32 %v4495, %v4506
        %v4605 = vpack.c.bf16 %v4511, %v4509
        %v4606 = vpack.c.bf16 %v4512, %v4510
        %v4607 = vpack.c.bf16 %v4515, %v4513
        %v4608 = vpack.c.bf16 %v4516, %v4514
        %v4609 = vpack.c.bf16 %v4519, %v4517
        %v4610 = vpack.c.bf16 %v4520, %v4518
        %v4611 = vpack.c.bf16 %v4523, %v4521
        %v4612 = vpack.c.bf16 %v4524, %v4522
        %v4613 = vpack.c.bf16 %v4527, %v4525
        %v4614 = vpack.c.bf16 %v4528, %v4526
        %v4615 = vpack.c.bf16 %v4531, %v4529
        %v4616 = vpack.c.bf16 %v4532, %v4530
        %v4617 = vpack.c.bf16 %v4535, %v4533
        %v4618 = vpack.c.bf16 %v4536, %v4534
        %v4619 = vpack.c.bf16 %v4539, %v4537
        %v4620 = vpack.c.bf16 %v4540, %v4538
        %v4621 = vpack.c.bf16 %v4543, %v4541
        %v4622 = vpack.c.bf16 %v4544, %v4542
        %v4623 = vpack.c.bf16 %v4547, %v4545
        %v4624 = vpack.c.bf16 %v4548, %v4546
        %v4625 = vpack.c.bf16 %v4551, %v4549
        %v4626 = vpack.c.bf16 %v4552, %v4550
        %v4627 = vpack.c.bf16 %v4555, %v4553
        %v4628 = vpack.c.bf16 %v4556, %v4554
        %v4629 = vpack.c.bf16 %v4559, %v4557
        %v4630 = vpack.c.bf16 %v4560, %v4558
        %v4631 = vpack.c.bf16 %v4563, %v4561
        %v4632 = vpack.c.bf16 %v4564, %v4562
        %v4633 = vpack.c.bf16 %v4567, %v4565
        %v4634 = vpack.c.bf16 %v4568, %v4566
        %v4635 = vpack.c.bf16 %v4571, %v4569
        %v4636 = vpack.c.bf16 %v4572, %v4570
        %v4637 = vpack.c.bf16 %v4575, %v4573
        %v4638 = vpack.c.bf16 %v4576, %v4574
        %v4639 = vpack.c.bf16 %v4579, %v4577
        %v4640 = vpack.c.bf16 %v4580, %v4578
        %v4641 = vpack.c.bf16 %v4583, %v4581
        %v4642 = vpack.c.bf16 %v4584, %v4582
        %v4643 = vpack.c.bf16 %v4587, %v4585
        %v4644 = vpack.c.bf16 %v4588, %v4586
        %v4645 = vpack.c.bf16 %v4591, %v4589
        %v4646 = vpack.c.bf16 %v4592, %v4590
        %v4647 = vpack.c.bf16 %v4595, %v4593
        %v4648 = vpack.c.bf16 %v4596, %v4594
        %v4649 = vpack.c.bf16 %v4599, %v4597
        %v4650 = vpack.c.bf16 %v4600, %v4598
        %v4651 = vpack.c.bf16 %v4603, %v4601
        %v4652 = vpack.c.bf16 %v4604, %v4602
        %v4653 = vmax.bf16 %v4605, 0
        %v4654 = vmax.bf16 %v4606, 0
        %v4655 = vmax.bf16 %v4607, 0
        %v4656 = vmax.bf16 %v4608, 0
        %v4657 = vmax.bf16 %v4609, 0
        %v4658 = vmax.bf16 %v4610, 0
        %v4659 = vmax.bf16 %v4611, 0
        %v4660 = vmax.bf16 %v4612, 0
        %v4661 = vmax.bf16 %v4613, 0
        %v4662 = vmax.bf16 %v4614, 0
        %v4663 = vmax.bf16 %v4615, 0
        %v4664 = vmax.bf16 %v4616, 0
        %v4665 = vmax.bf16 %v4617, 0
        %v4666 = vmax.bf16 %v4618, 0
        %v4667 = vmax.bf16 %v4619, 0
        %v4668 = vmax.bf16 %v4620, 0
        %v4669 = vmax.bf16 %v4621, 0
        %v4670 = vmax.bf16 %v4622, 0
        %v4671 = vmax.bf16 %v4623, 0
        %v4672 = vmax.bf16 %v4624, 0
        %v4673 = vmax.bf16 %v4625, 0
        %v4674 = vmax.bf16 %v4626, 0
        %v4675 = vmax.bf16 %v4627, 0
        %v4676 = vmax.bf16 %v4628, 0
        %v4677 = vmax.bf16 %v4629, 0
        %v4678 = vmax.bf16 %v4630, 0
        %v4679 = vmax.bf16 %v4631, 0
        %v4680 = vmax.bf16 %v4632, 0
        %v4681 = vmax.bf16 %v4633, 0
        %v4682 = vmax.bf16 %v4634, 0
        %v4683 = vmax.bf16 %v4635, 0
        %v4684 = vmax.bf16 %v4636, 0
        %v4685 = vmax.bf16 %v4637, 0
        %v4686 = vmax.bf16 %v4638, 0
        %v4687 = vmax.bf16 %v4639, 0
        %v4688 = vmax.bf16 %v4640, 0
        %v4689 = vmax.bf16 %v4641, 0
        %v4690 = vmax.bf16 %v4642, 0
        %v4691 = vmax.bf16 %v4643, 0
        %v4692 = vmax.bf16 %v4644, 0
        %v4693 = vmax.bf16 %v4645, 0
        %v4694 = vmax.bf16 %v4646, 0
        %v4695 = vmax.bf16 %v4647, 0
        %v4696 = vmax.bf16 %v4648, 0
        %v4697 = vmax.bf16 %v4649, 0
        %v4698 = vmax.bf16 %v4650, 0
        %v4699 = vmax.bf16 %v4651, 0
        %v4700 = vmax.bf16 %v4652, 0
        %v4701 = vld [vmem:[#allocation6] sm:$0xff]
        %v4702 = vld [vmem:[#allocation6 + $0x8] sm:$0xff]
        %v4703 = vld [vmem:[#allocation6 + $0x10] sm:$0xff]
        %v4704 = vld [vmem:[#allocation6 + $0x18] sm:$0xff]
        %v4705 = vld [vmem:[#allocation6 + $0x20] sm:$0xff]
        %v4706 = vld [vmem:[#allocation6 + $0x28] sm:$0xff]
        %v4707 = vld [vmem:[#allocation6 + $0x30] sm:$0xff]
        %v4708 = vld [vmem:[#allocation6 + $0x38] sm:$0xff]
        %v4709 = vld [vmem:[#allocation6 + $0x40] sm:$0xff]
        %v4710 = vld [vmem:[#allocation6 + $0x48] sm:$0xff]
        %v4711 = vld [vmem:[#allocation6 + $0x50] sm:$0xff]
        %v4712 = vld [vmem:[#allocation6 + $0x58] sm:$0xff]
        %v4713 = vld [vmem:[#allocation6 + $0x60] sm:$0xff]
        %v4714 = vld [vmem:[#allocation6 + $0x68] sm:$0xff]
        %v4715 = vld [vmem:[#allocation6 + $0x70] sm:$0xff]
        %v4716 = vld [vmem:[#allocation6 + $0x78] sm:$0xff]
        %v4717 = vld [vmem:[#allocation6 + $0x80] sm:$0xff]
        %v4718 = vld [vmem:[#allocation6 + $0x88] sm:$0xff]
        %v4719 = vld [vmem:[#allocation6 + $0x90] sm:$0xff]
        %v4720 = vld [vmem:[#allocation6 + $0x98] sm:$0xff]
        %v4721 = vld [vmem:[#allocation6 + $0xa0] sm:$0xff]
        %v4722 = vld [vmem:[#allocation6 + $0xa8] sm:$0xff]
        %v4723 = vld [vmem:[#allocation6 + $0xb0] sm:$0xff]
        %v4724 = vld [vmem:[#allocation6 + $0xb8] sm:$0xff]
        %v4725 = vld [vmem:[#allocation6 + $0xc0] sm:$0xff]
        %v4726 = vld [vmem:[#allocation6 + $0xc8] sm:$0xff]
        %v4727 = vld [vmem:[#allocation6 + $0xd0] sm:$0xff]
        %v4728 = vld [vmem:[#allocation6 + $0xd8] sm:$0xff]
        %v4729 = vld [vmem:[#allocation6 + $0xe0] sm:$0xff]
        %v4730 = vld [vmem:[#allocation6 + $0xe8] sm:$0xff]
        %v4731 = vld [vmem:[#allocation6 + $0xf0] sm:$0xff]
        %v4732 = vld [vmem:[#allocation6 + $0xf8] sm:$0xff]
        %v4733 = vld [vmem:[%s14] sm:$0x3]
        %v4735 = vlaneseq
        %v4736 = vshrl.u32 %v4735, 7
        %v4737 = vsub.s32 0, %v4736
        %v4738 = vrot.slane %v4733, %v4737
        %v4739 = vlaneseq
        %v4740 = vshrl.u32 %v4739, 7
        %v4741 = vsub.s32 1, %v4740
        %v4742 = vrot.slane %v4733, %v4741
        %v4777 = vunpack.c.l.b16 %v4701
        %v4778 = vunpack.c.h.b16 %v4701
        %v4779 = vunpack.c.l.b16 %v4702
        %v4780 = vunpack.c.h.b16 %v4702
        %v4781 = vunpack.c.l.b16 %v4703
        %v4782 = vunpack.c.h.b16 %v4703
        %v4783 = vunpack.c.l.b16 %v4704
        %v4784 = vunpack.c.h.b16 %v4704
        %v4785 = vunpack.c.l.b16 %v4705
        %v4786 = vunpack.c.h.b16 %v4705
        %v4787 = vunpack.c.l.b16 %v4706
        %v4788 = vunpack.c.h.b16 %v4706
        %v4789 = vunpack.c.l.b16 %v4707
        %v4790 = vunpack.c.h.b16 %v4707
        %v4791 = vunpack.c.l.b16 %v4708
        %v4792 = vunpack.c.h.b16 %v4708
        %v4793 = vunpack.c.l.b16 %v4709
        %v4794 = vunpack.c.h.b16 %v4709
        %v4795 = vunpack.c.l.b16 %v4710
        %v4796 = vunpack.c.h.b16 %v4710
        %v4797 = vunpack.c.l.b16 %v4711
        %v4798 = vunpack.c.h.b16 %v4711
        %v4799 = vunpack.c.l.b16 %v4712
        %v4800 = vunpack.c.h.b16 %v4712
        %v4801 = vunpack.c.l.b16 %v4713
        %v4802 = vunpack.c.h.b16 %v4713
        %v4803 = vunpack.c.l.b16 %v4714
        %v4804 = vunpack.c.h.b16 %v4714
        %v4805 = vunpack.c.l.b16 %v4715
        %v4806 = vunpack.c.h.b16 %v4715
        %v4807 = vunpack.c.l.b16 %v4716
        %v4808 = vunpack.c.h.b16 %v4716
        %v4809 = vunpack.c.l.b16 %v4717
        %v4810 = vunpack.c.h.b16 %v4717
        %v4811 = vunpack.c.l.b16 %v4718
        %v4812 = vunpack.c.h.b16 %v4718
        %v4813 = vunpack.c.l.b16 %v4719
        %v4814 = vunpack.c.h.b16 %v4719
        %v4815 = vunpack.c.l.b16 %v4720
        %v4816 = vunpack.c.h.b16 %v4720
        %v4817 = vunpack.c.l.b16 %v4721
        %v4818 = vunpack.c.h.b16 %v4721
        %v4819 = vunpack.c.l.b16 %v4722
        %v4820 = vunpack.c.h.b16 %v4722
        %v4821 = vunpack.c.l.b16 %v4723
        %v4822 = vunpack.c.h.b16 %v4723
        %v4823 = vunpack.c.l.b16 %v4724
        %v4824 = vunpack.c.h.b16 %v4724
        %v4825 = vunpack.c.l.b16 %v4725
        %v4826 = vunpack.c.h.b16 %v4725
        %v4827 = vunpack.c.l.b16 %v4726
        %v4828 = vunpack.c.h.b16 %v4726
        %v4829 = vunpack.c.l.b16 %v4727
        %v4830 = vunpack.c.h.b16 %v4727
        %v4831 = vunpack.c.l.b16 %v4728
        %v4832 = vunpack.c.h.b16 %v4728
        %v4833 = vunpack.c.l.b16 %v4729
        %v4834 = vunpack.c.h.b16 %v4729
        %v4835 = vunpack.c.l.b16 %v4730
        %v4836 = vunpack.c.h.b16 %v4730
        %v4837 = vunpack.c.l.b16 %v4731
        %v4838 = vunpack.c.h.b16 %v4731
        %v4839 = vunpack.c.l.b16 %v4732
        %v4840 = vunpack.c.h.b16 %v4732
        %v4841 = vpack.c.b16 %v4779, %v4777
        %v4842 = vpack.c.b16 %v4780, %v4778
        %v4843 = vpack.c.b16 %v4783, %v4781
        %v4844 = vpack.c.b16 %v4784, %v4782
        %v4845 = vpack.c.b16 %v4787, %v4785
        %v4846 = vpack.c.b16 %v4788, %v4786
        %v4847 = vpack.c.b16 %v4791, %v4789
        %v4848 = vpack.c.b16 %v4792, %v4790
        %v4849 = vpack.c.b16 %v4795, %v4793
        %v4850 = vpack.c.b16 %v4796, %v4794
        %v4851 = vpack.c.b16 %v4799, %v4797
        %v4852 = vpack.c.b16 %v4800, %v4798
        %v4853 = vpack.c.b16 %v4803, %v4801
        %v4854 = vpack.c.b16 %v4804, %v4802
        %v4855 = vpack.c.b16 %v4807, %v4805
        %v4856 = vpack.c.b16 %v4808, %v4806
        %v4857 = vpack.c.b16 %v4811, %v4809
        %v4858 = vpack.c.b16 %v4812, %v4810
        %v4859 = vpack.c.b16 %v4815, %v4813
        %v4860 = vpack.c.b16 %v4816, %v4814
        %v4861 = vpack.c.b16 %v4819, %v4817
        %v4862 = vpack.c.b16 %v4820, %v4818
        %v4863 = vpack.c.b16 %v4823, %v4821
        %v4864 = vpack.c.b16 %v4824, %v4822
        %v4865 = vpack.c.b16 %v4827, %v4825
        %v4866 = vpack.c.b16 %v4828, %v4826
        %v4867 = vpack.c.b16 %v4831, %v4829
        %v4868 = vpack.c.b16 %v4832, %v4830
        %v4869 = vpack.c.b16 %v4835, %v4833
        %v4870 = vpack.c.b16 %v4836, %v4834
        %v4871 = vpack.c.b16 %v4839, %v4837
        %v4872 = vpack.c.b16 %v4840, %v4838
        %4905 = vmatprep.subr.bf16.mxu0 %v4856
        %4906 = vmatpush1.bf16.msra.mxu0 %v4855
        %4907 = vmatprep.subr.bf16.mxu0 %v4854
        %4908 = vmatpush1.bf16.msra.mxu0 %v4853
        %4909 = vmatprep.subr.bf16.mxu0 %v4852
        %4910 = vmatpush1.bf16.msra.mxu0 %v4851
        %4911 = vmatprep.subr.bf16.mxu0 %v4850
        %4912 = vmatpush1.bf16.msra.mxu0 %v4849
        %4913 = vmatprep.subr.bf16.mxu0 %v4848
        %4914 = vmatpush1.bf16.msra.mxu0 %v4847
        %4915 = vmatprep.subr.bf16.mxu0 %v4846
        %4916 = vmatpush1.bf16.msra.mxu0 %v4845
        %4917 = vmatprep.subr.bf16.mxu0 %v4844
        %4918 = vmatpush1.bf16.msra.mxu0 %v4843
        %4919 = vmatprep.subr.bf16.mxu0 %v4842
        %4920 = vmatpush1.bf16.msra.mxu0 %v4841
        %4921 = vmatprep.subr.bf16.mxu0 %v4872
        %4922 = vmatpush2.bf16.msra.mxu0 %v4871
        %4923 = vmatprep.subr.bf16.mxu0 %v4870
        %4924 = vmatpush2.bf16.msra.mxu0 %v4869
        %4925 = vmatprep.subr.bf16.mxu0 %v4868
        %4926 = vmatpush2.bf16.msra.mxu0 %v4867
        %4927 = vmatprep.subr.bf16.mxu0 %v4866
        %4928 = vmatpush2.bf16.msra.mxu0 %v4865
        %4929 = vmatprep.subr.bf16.mxu0 %v4864
        %4930 = vmatpush2.bf16.msra.mxu0 %v4863
        %4931 = vmatprep.subr.bf16.mxu0 %v4862
        %4932 = vmatpush2.bf16.msra.mxu0 %v4861
        %4933 = vmatprep.subr.bf16.mxu0 %v4860
        %4934 = vmatpush2.bf16.msra.mxu0 %v4859
        %4935 = vmatprep.subr.bf16.mxu0 %v4858
        %4936 = vmatpush2.bf16.msra.mxu0 %v4857
        %4937 = vmatprep.mubr.bf16.mxu0 %v4654
        %4938 = vmatmul.mubr.bf16.gmra.mxu0 %v4653
        %v4939 = vpop.f32.mrf.mxu0
        %v4940 = vadd.f32 %v4738, %v4939
        %v4941 = vpop.f32.mrf.mxu0
        %v4942 = vadd.f32 %v4742, %v4941
        %v4943 = vpop.f32.mrf.mxu0
        %v4944 = vadd.f32 %v4738, %v4943
        %v4945 = vpop.f32.mrf.mxu0
        %v4946 = vadd.f32 %v4742, %v4945
        %4947 = vmatprep.mubr.bf16.mxu0 %v4656
        %4948 = vmatmul.mubr.bf16.gmra.mxu0 %v4655
        %v4949 = vpop.f32.mrf.mxu0
        %v4950 = vadd.f32 %v4738, %v4949
        %v4951 = vpop.f32.mrf.mxu0
        %v4952 = vadd.f32 %v4742, %v4951
        %v4953 = vpop.f32.mrf.mxu0
        %v4954 = vadd.f32 %v4738, %v4953
        %v4955 = vpop.f32.mrf.mxu0
        %v4956 = vadd.f32 %v4742, %v4955
        %4957 = vmatprep.mubr.bf16.mxu0 %v4658
        %4958 = vmatmul.mubr.bf16.gmra.mxu0 %v4657
        %v4959 = vpop.f32.mrf.mxu0
        %v4960 = vadd.f32 %v4738, %v4959
        %v4961 = vpop.f32.mrf.mxu0
        %v4962 = vadd.f32 %v4742, %v4961
        %v4963 = vpop.f32.mrf.mxu0
        %v4964 = vadd.f32 %v4738, %v4963
        %v4965 = vpop.f32.mrf.mxu0
        %v4966 = vadd.f32 %v4742, %v4965
        %4967 = vmatprep.mubr.bf16.mxu0 %v4660
        %4968 = vmatmul.mubr.bf16.gmra.mxu0 %v4659
        %v4969 = vpop.f32.mrf.mxu0
        %v4970 = vadd.f32 %v4738, %v4969
        %v4971 = vpop.f32.mrf.mxu0
        %v4972 = vadd.f32 %v4742, %v4971
        %v4973 = vpop.f32.mrf.mxu0
        %v4974 = vadd.f32 %v4738, %v4973
        %v4975 = vpop.f32.mrf.mxu0
        %v4976 = vadd.f32 %v4742, %v4975
        %4977 = vmatprep.mubr.bf16.mxu0 %v4662
        %4978 = vmatmul.mubr.bf16.gmra.mxu0 %v4661
        %v4979 = vpop.f32.mrf.mxu0
        %v4980 = vadd.f32 %v4738, %v4979
        %v4981 = vpop.f32.mrf.mxu0
        %v4982 = vadd.f32 %v4742, %v4981
        %v4983 = vpop.f32.mrf.mxu0
        %v4984 = vadd.f32 %v4738, %v4983
        %v4985 = vpop.f32.mrf.mxu0
        %v4986 = vadd.f32 %v4742, %v4985
        %4987 = vmatprep.mubr.bf16.mxu0 %v4664
        %4988 = vmatmul.mubr.bf16.gmra.mxu0 %v4663
        %v4989 = vpop.f32.mrf.mxu0
        %v4990 = vadd.f32 %v4738, %v4989
        %v4991 = vpop.f32.mrf.mxu0
        %v4992 = vadd.f32 %v4742, %v4991
        %v4993 = vpop.f32.mrf.mxu0
        %v4994 = vadd.f32 %v4738, %v4993
        %v4995 = vpop.f32.mrf.mxu0
        %v4996 = vadd.f32 %v4742, %v4995
        %4997 = vmatprep.mubr.bf16.mxu0 %v4666
        %4998 = vmatmul.mubr.bf16.gmra.mxu0 %v4665
        %v4999 = vpop.f32.mrf.mxu0
        %v5000 = vadd.f32 %v4738, %v4999
        %v5001 = vpop.f32.mrf.mxu0
        %v5002 = vadd.f32 %v4742, %v5001
        %v5003 = vpop.f32.mrf.mxu0
        %v5004 = vadd.f32 %v4738, %v5003
        %v5005 = vpop.f32.mrf.mxu0
        %v5006 = vadd.f32 %v4742, %v5005
        %5007 = vmatprep.mubr.bf16.mxu0 %v4668
        %5008 = vmatmul.mubr.bf16.gmra.mxu0 %v4667
        %v5009 = vpop.f32.mrf.mxu0
        %v5010 = vadd.f32 %v4738, %v5009
        %v5011 = vpop.f32.mrf.mxu0
        %v5012 = vadd.f32 %v4742, %v5011
        %v5013 = vpop.f32.mrf.mxu0
        %v5014 = vadd.f32 %v4738, %v5013
        %v5015 = vpop.f32.mrf.mxu0
        %v5016 = vadd.f32 %v4742, %v5015
        %5017 = vmatprep.mubr.bf16.mxu0 %v4670
        %5018 = vmatmul.mubr.bf16.gmra.mxu0 %v4669
        %v5019 = vpop.f32.mrf.mxu0
        %v5020 = vadd.f32 %v4738, %v5019
        %v5021 = vpop.f32.mrf.mxu0
        %v5022 = vadd.f32 %v4742, %v5021
        %v5023 = vpop.f32.mrf.mxu0
        %v5024 = vadd.f32 %v4738, %v5023
        %v5025 = vpop.f32.mrf.mxu0
        %v5026 = vadd.f32 %v4742, %v5025
        %5027 = vmatprep.mubr.bf16.mxu0 %v4672
        %5028 = vmatmul.mubr.bf16.gmra.mxu0 %v4671
        %v5029 = vpop.f32.mrf.mxu0
        %v5030 = vadd.f32 %v4738, %v5029
        %v5031 = vpop.f32.mrf.mxu0
        %v5032 = vadd.f32 %v4742, %v5031
        %v5033 = vpop.f32.mrf.mxu0
        %v5034 = vadd.f32 %v4738, %v5033
        %v5035 = vpop.f32.mrf.mxu0
        %v5036 = vadd.f32 %v4742, %v5035
        %5037 = vmatprep.mubr.bf16.mxu0 %v4674
        %5038 = vmatmul.mubr.bf16.gmra.mxu0 %v4673
        %v5039 = vpop.f32.mrf.mxu0
        %v5040 = vadd.f32 %v4738, %v5039
        %v5041 = vpop.f32.mrf.mxu0
        %v5042 = vadd.f32 %v4742, %v5041
        %v5043 = vpop.f32.mrf.mxu0
        %v5044 = vadd.f32 %v4738, %v5043
        %v5045 = vpop.f32.mrf.mxu0
        %v5046 = vadd.f32 %v4742, %v5045
        %5047 = vmatprep.mubr.bf16.mxu0 %v4676
        %5048 = vmatmul.mubr.bf16.gmra.mxu0 %v4675
        %v5049 = vpop.f32.mrf.mxu0
        %v5050 = vadd.f32 %v4738, %v5049
        %v5051 = vpop.f32.mrf.mxu0
        %v5052 = vadd.f32 %v4742, %v5051
        %v5053 = vpop.f32.mrf.mxu0
        %v5054 = vadd.f32 %v4738, %v5053
        %v5055 = vpop.f32.mrf.mxu0
        %v5056 = vadd.f32 %v4742, %v5055
        %5057 = vmatprep.mubr.bf16.mxu0 %v4678
        %5058 = vmatmul.mubr.bf16.gmra.mxu0 %v4677
        %v5059 = vpop.f32.mrf.mxu0
        %v5060 = vadd.f32 %v4738, %v5059
        %v5061 = vpop.f32.mrf.mxu0
        %v5062 = vadd.f32 %v4742, %v5061
        %v5063 = vpop.f32.mrf.mxu0
        %v5064 = vadd.f32 %v4738, %v5063
        %v5065 = vpop.f32.mrf.mxu0
        %v5066 = vadd.f32 %v4742, %v5065
        %5067 = vmatprep.mubr.bf16.mxu0 %v4680
        %5068 = vmatmul.mubr.bf16.gmra.mxu0 %v4679
        %v5069 = vpop.f32.mrf.mxu0
        %v5070 = vadd.f32 %v4738, %v5069
        %v5071 = vpop.f32.mrf.mxu0
        %v5072 = vadd.f32 %v4742, %v5071
        %v5073 = vpop.f32.mrf.mxu0
        %v5074 = vadd.f32 %v4738, %v5073
        %v5075 = vpop.f32.mrf.mxu0
        %v5076 = vadd.f32 %v4742, %v5075
        %5077 = vmatprep.mubr.bf16.mxu0 %v4682
        %5078 = vmatmul.mubr.bf16.gmra.mxu0 %v4681
        %v5079 = vpop.f32.mrf.mxu0
        %v5080 = vadd.f32 %v4738, %v5079
        %v5081 = vpop.f32.mrf.mxu0
        %v5082 = vadd.f32 %v4742, %v5081
        %v5083 = vpop.f32.mrf.mxu0
        %v5084 = vadd.f32 %v4738, %v5083
        %v5085 = vpop.f32.mrf.mxu0
        %v5086 = vadd.f32 %v4742, %v5085
        %5087 = vmatprep.mubr.bf16.mxu0 %v4684
        %5088 = vmatmul.mubr.bf16.gmra.mxu0 %v4683
        %v5089 = vpop.f32.mrf.mxu0
        %v5090 = vadd.f32 %v4738, %v5089
        %v5091 = vpop.f32.mrf.mxu0
        %v5092 = vadd.f32 %v4742, %v5091
        %v5093 = vpop.f32.mrf.mxu0
        %v5094 = vadd.f32 %v4738, %v5093
        %v5095 = vpop.f32.mrf.mxu0
        %v5096 = vadd.f32 %v4742, %v5095
        %5097 = vmatprep.mubr.bf16.mxu0 %v4686
        %5098 = vmatmul.mubr.bf16.gmra.mxu0 %v4685
        %v5099 = vpop.f32.mrf.mxu0
        %v5100 = vadd.f32 %v4738, %v5099
        %v5101 = vpop.f32.mrf.mxu0
        %v5102 = vadd.f32 %v4742, %v5101
        %v5103 = vpop.f32.mrf.mxu0
        %v5104 = vadd.f32 %v4738, %v5103
        %v5105 = vpop.f32.mrf.mxu0
        %v5106 = vadd.f32 %v4742, %v5105
        %5107 = vmatprep.mubr.bf16.mxu0 %v4688
        %5108 = vmatmul.mubr.bf16.gmra.mxu0 %v4687
        %v5109 = vpop.f32.mrf.mxu0
        %v5110 = vadd.f32 %v4738, %v5109
        %v5111 = vpop.f32.mrf.mxu0
        %v5112 = vadd.f32 %v4742, %v5111
        %v5113 = vpop.f32.mrf.mxu0
        %v5114 = vadd.f32 %v4738, %v5113
        %v5115 = vpop.f32.mrf.mxu0
        %v5116 = vadd.f32 %v4742, %v5115
        %5117 = vmatprep.mubr.bf16.mxu0 %v4690
        %5118 = vmatmul.mubr.bf16.gmra.mxu0 %v4689
        %v5119 = vpop.f32.mrf.mxu0
        %v5120 = vadd.f32 %v4738, %v5119
        %v5121 = vpop.f32.mrf.mxu0
        %v5122 = vadd.f32 %v4742, %v5121
        %v5123 = vpop.f32.mrf.mxu0
        %v5124 = vadd.f32 %v4738, %v5123
        %v5125 = vpop.f32.mrf.mxu0
        %v5126 = vadd.f32 %v4742, %v5125
        %5127 = vmatprep.mubr.bf16.mxu0 %v4692
        %5128 = vmatmul.mubr.bf16.gmra.mxu0 %v4691
        %v5129 = vpop.f32.mrf.mxu0
        %v5130 = vadd.f32 %v4738, %v5129
        %v5131 = vpop.f32.mrf.mxu0
        %v5132 = vadd.f32 %v4742, %v5131
        %v5133 = vpop.f32.mrf.mxu0
        %v5134 = vadd.f32 %v4738, %v5133
        %v5135 = vpop.f32.mrf.mxu0
        %v5136 = vadd.f32 %v4742, %v5135
        %5137 = vmatprep.mubr.bf16.mxu0 %v4694
        %5138 = vmatmul.mubr.bf16.gmra.mxu0 %v4693
        %v5139 = vpop.f32.mrf.mxu0
        %v5140 = vadd.f32 %v4738, %v5139
        %v5141 = vpop.f32.mrf.mxu0
        %v5142 = vadd.f32 %v4742, %v5141
        %v5143 = vpop.f32.mrf.mxu0
        %v5144 = vadd.f32 %v4738, %v5143
        %v5145 = vpop.f32.mrf.mxu0
        %v5146 = vadd.f32 %v4742, %v5145
        %5147 = vmatprep.mubr.bf16.mxu0 %v4696
        %5148 = vmatmul.mubr.bf16.gmra.mxu0 %v4695
        %v5149 = vpop.f32.mrf.mxu0
        %v5150 = vadd.f32 %v4738, %v5149
        %v5151 = vpop.f32.mrf.mxu0
        %v5152 = vadd.f32 %v4742, %v5151
        %v5153 = vpop.f32.mrf.mxu0
        %v5154 = vadd.f32 %v4738, %v5153
        %v5155 = vpop.f32.mrf.mxu0
        %v5156 = vadd.f32 %v4742, %v5155
        %5157 = vmatprep.mubr.bf16.mxu0 %v4698
        %5158 = vmatmul.mubr.bf16.gmra.mxu0 %v4697
        %v5159 = vpop.f32.mrf.mxu0
        %v5160 = vadd.f32 %v4738, %v5159
        %v5161 = vpop.f32.mrf.mxu0
        %v5162 = vadd.f32 %v4742, %v5161
        %v5163 = vpop.f32.mrf.mxu0
        %v5164 = vadd.f32 %v4738, %v5163
        %v5165 = vpop.f32.mrf.mxu0
        %v5166 = vadd.f32 %v4742, %v5165
        %5167 = vmatprep.mubr.bf16.mxu0 %v4700
        %5168 = vmatmul.mubr.bf16.gmra.mxu0 %v4699
        %v5169 = vpop.f32.mrf.mxu0
        %v5170 = vadd.f32 %v4738, %v5169
        %v5171 = vpop.f32.mrf.mxu0
        %v5172 = vadd.f32 %v4742, %v5171
        %v5173 = vpop.f32.mrf.mxu0
        %v5174 = vadd.f32 %v4738, %v5173
        %v5175 = vpop.f32.mrf.mxu0
        %v5176 = vadd.f32 %v4742, %v5175
        %5177 = vdwg.mxu0
        %v5178 = vpack.c.bf16 %v4944, %v4940
        %v5179 = vpack.c.bf16 %v4946, %v4942
        %v5180 = vpack.c.bf16 %v4954, %v4950
        %v5181 = vpack.c.bf16 %v4956, %v4952
        %v5182 = vpack.c.bf16 %v4964, %v4960
        %v5183 = vpack.c.bf16 %v4966, %v4962
        %v5184 = vpack.c.bf16 %v4974, %v4970
        %v5185 = vpack.c.bf16 %v4976, %v4972
        %v5186 = vpack.c.bf16 %v4984, %v4980
        %v5187 = vpack.c.bf16 %v4986, %v4982
        %v5188 = vpack.c.bf16 %v4994, %v4990
        %v5189 = vpack.c.bf16 %v4996, %v4992
        %v5190 = vpack.c.bf16 %v5004, %v5000
        %v5191 = vpack.c.bf16 %v5006, %v5002
        %v5192 = vpack.c.bf16 %v5014, %v5010
        %v5193 = vpack.c.bf16 %v5016, %v5012
        %v5194 = vpack.c.bf16 %v5024, %v5020
        %v5195 = vpack.c.bf16 %v5026, %v5022
        %v5196 = vpack.c.bf16 %v5034, %v5030
        %v5197 = vpack.c.bf16 %v5036, %v5032
        %v5198 = vpack.c.bf16 %v5044, %v5040
        %v5199 = vpack.c.bf16 %v5046, %v5042
        %v5200 = vpack.c.bf16 %v5054, %v5050
        %v5201 = vpack.c.bf16 %v5056, %v5052
        %v5202 = vpack.c.bf16 %v5064, %v5060
        %v5203 = vpack.c.bf16 %v5066, %v5062
        %v5204 = vpack.c.bf16 %v5074, %v5070
        %v5205 = vpack.c.bf16 %v5076, %v5072
        %v5206 = vpack.c.bf16 %v5084, %v5080
        %v5207 = vpack.c.bf16 %v5086, %v5082
        %v5208 = vpack.c.bf16 %v5094, %v5090
        %v5209 = vpack.c.bf16 %v5096, %v5092
        %v5210 = vpack.c.bf16 %v5104, %v5100
        %v5211 = vpack.c.bf16 %v5106, %v5102
        %v5212 = vpack.c.bf16 %v5114, %v5110
        %v5213 = vpack.c.bf16 %v5116, %v5112
        %v5214 = vpack.c.bf16 %v5124, %v5120
        %v5215 = vpack.c.bf16 %v5126, %v5122
        %v5216 = vpack.c.bf16 %v5134, %v5130
        %v5217 = vpack.c.bf16 %v5136, %v5132
        %v5218 = vpack.c.bf16 %v5144, %v5140
        %v5219 = vpack.c.bf16 %v5146, %v5142
        %v5220 = vpack.c.bf16 %v5154, %v5150
        %v5221 = vpack.c.bf16 %v5156, %v5152
        %v5222 = vpack.c.bf16 %v5164, %v5160
        %v5223 = vpack.c.bf16 %v5166, %v5162
        %v5224 = vpack.c.bf16 %v5174, %v5170
        %v5225 = vpack.c.bf16 %v5176, %v5172
        %v5226 = vmax.bf16 %v5178, 0
        %v5227 = vmax.bf16 %v5179, 0
        %v5228 = vmax.bf16 %v5180, 0
        %v5229 = vmax.bf16 %v5181, 0
        %v5230 = vmax.bf16 %v5182, 0
        %v5231 = vmax.bf16 %v5183, 0
        %v5232 = vmax.bf16 %v5184, 0
        %v5233 = vmax.bf16 %v5185, 0
        %v5234 = vmax.bf16 %v5186, 0
        %v5235 = vmax.bf16 %v5187, 0
        %v5236 = vmax.bf16 %v5188, 0
        %v5237 = vmax.bf16 %v5189, 0
        %v5238 = vmax.bf16 %v5190, 0
        %v5239 = vmax.bf16 %v5191, 0
        %v5240 = vmax.bf16 %v5192, 0
        %v5241 = vmax.bf16 %v5193, 0
        %v5242 = vmax.bf16 %v5194, 0
        %v5243 = vmax.bf16 %v5195, 0
        %v5244 = vmax.bf16 %v5196, 0
        %v5245 = vmax.bf16 %v5197, 0
        %v5246 = vmax.bf16 %v5198, 0
        %v5247 = vmax.bf16 %v5199, 0
        %v5248 = vmax.bf16 %v5200, 0
        %v5249 = vmax.bf16 %v5201, 0
        %v5250 = vmax.bf16 %v5202, 0
        %v5251 = vmax.bf16 %v5203, 0
        %v5252 = vmax.bf16 %v5204, 0
        %v5253 = vmax.bf16 %v5205, 0
        %v5254 = vmax.bf16 %v5206, 0
        %v5255 = vmax.bf16 %v5207, 0
        %v5256 = vmax.bf16 %v5208, 0
        %v5257 = vmax.bf16 %v5209, 0
        %v5258 = vmax.bf16 %v5210, 0
        %v5259 = vmax.bf16 %v5211, 0
        %v5260 = vmax.bf16 %v5212, 0
        %v5261 = vmax.bf16 %v5213, 0
        %v5262 = vmax.bf16 %v5214, 0
        %v5263 = vmax.bf16 %v5215, 0
        %v5264 = vmax.bf16 %v5216, 0
        %v5265 = vmax.bf16 %v5217, 0
        %v5266 = vmax.bf16 %v5218, 0
        %v5267 = vmax.bf16 %v5219, 0
        %v5268 = vmax.bf16 %v5220, 0
        %v5269 = vmax.bf16 %v5221, 0
        %v5270 = vmax.bf16 %v5222, 0
        %v5271 = vmax.bf16 %v5223, 0
        %v5272 = vmax.bf16 %v5224, 0
        %v5273 = vmax.bf16 %v5225, 0
        %v5274 = vld [vmem:[#allocation7] sm:$0xff]
        %v5275 = vld [vmem:[#allocation7 + $0x8] sm:$0xff]
        %v5276 = vld [vmem:[#allocation7 + $0x10] sm:$0xff]
        %v5277 = vld [vmem:[#allocation7 + $0x18] sm:$0xff]
        %v5278 = vld [vmem:[#allocation7 + $0x20] sm:$0xff]
        %v5279 = vld [vmem:[#allocation7 + $0x28] sm:$0xff]
        %v5280 = vld [vmem:[#allocation7 + $0x30] sm:$0xff]
        %v5281 = vld [vmem:[#allocation7 + $0x38] sm:$0xff]
        %v5282 = vld [vmem:[#allocation7 + $0x40] sm:$0xff]
        %v5283 = vld [vmem:[#allocation7 + $0x48] sm:$0xff]
        %v5284 = vld [vmem:[#allocation7 + $0x50] sm:$0xff]
        %v5285 = vld [vmem:[#allocation7 + $0x58] sm:$0xff]
        %v5286 = vld [vmem:[#allocation7 + $0x60] sm:$0xff]
        %v5287 = vld [vmem:[#allocation7 + $0x68] sm:$0xff]
        %v5288 = vld [vmem:[#allocation7 + $0x70] sm:$0xff]
        %v5289 = vld [vmem:[#allocation7 + $0x78] sm:$0xff]
        %v5290 = vld [vmem:[#allocation7 + $0x80] sm:$0xff]
        %v5291 = vld [vmem:[#allocation7 + $0x88] sm:$0xff]
        %v5292 = vld [vmem:[#allocation7 + $0x90] sm:$0xff]
        %v5293 = vld [vmem:[#allocation7 + $0x98] sm:$0xff]
        %v5294 = vld [vmem:[#allocation7 + $0xa0] sm:$0xff]
        %v5295 = vld [vmem:[#allocation7 + $0xa8] sm:$0xff]
        %v5296 = vld [vmem:[#allocation7 + $0xb0] sm:$0xff]
        %v5297 = vld [vmem:[#allocation7 + $0xb8] sm:$0xff]
        %v5298 = vld [vmem:[#allocation7 + $0xc0] sm:$0xff]
        %v5299 = vld [vmem:[#allocation7 + $0xc8] sm:$0xff]
        %v5300 = vld [vmem:[#allocation7 + $0xd0] sm:$0xff]
        %v5301 = vld [vmem:[#allocation7 + $0xd8] sm:$0xff]
        %v5302 = vld [vmem:[#allocation7 + $0xe0] sm:$0xff]
        %v5303 = vld [vmem:[#allocation7 + $0xe8] sm:$0xff]
        %v5304 = vld [vmem:[#allocation7 + $0xf0] sm:$0xff]
        %v5305 = vld [vmem:[#allocation7 + $0xf8] sm:$0xff]
        %v5306 = vld [vmem:[%s16] sm:$0x3]
        %v5308 = vlaneseq
        %v5309 = vshrl.u32 %v5308, 7
        %v5310 = vsub.s32 0, %v5309
        %v5311 = vrot.slane %v5306, %v5310
        %v5312 = vlaneseq
        %v5313 = vshrl.u32 %v5312, 7
        %v5314 = vsub.s32 1, %v5313
        %v5315 = vrot.slane %v5306, %v5314
        %v5350 = vunpack.c.l.b16 %v5274
        %v5351 = vunpack.c.h.b16 %v5274
        %v5352 = vunpack.c.l.b16 %v5275
        %v5353 = vunpack.c.h.b16 %v5275
        %v5354 = vunpack.c.l.b16 %v5276
        %v5355 = vunpack.c.h.b16 %v5276
        %v5356 = vunpack.c.l.b16 %v5277
        %v5357 = vunpack.c.h.b16 %v5277
        %v5358 = vunpack.c.l.b16 %v5278
        %v5359 = vunpack.c.h.b16 %v5278
        %v5360 = vunpack.c.l.b16 %v5279
        %v5361 = vunpack.c.h.b16 %v5279
        %v5362 = vunpack.c.l.b16 %v5280
        %v5363 = vunpack.c.h.b16 %v5280
        %v5364 = vunpack.c.l.b16 %v5281
        %v5365 = vunpack.c.h.b16 %v5281
        %v5366 = vunpack.c.l.b16 %v5282
        %v5367 = vunpack.c.h.b16 %v5282
        %v5368 = vunpack.c.l.b16 %v5283
        %v5369 = vunpack.c.h.b16 %v5283
        %v5370 = vunpack.c.l.b16 %v5284
        %v5371 = vunpack.c.h.b16 %v5284
        %v5372 = vunpack.c.l.b16 %v5285
        %v5373 = vunpack.c.h.b16 %v5285
        %v5374 = vunpack.c.l.b16 %v5286
        %v5375 = vunpack.c.h.b16 %v5286
        %v5376 = vunpack.c.l.b16 %v5287
        %v5377 = vunpack.c.h.b16 %v5287
        %v5378 = vunpack.c.l.b16 %v5288
        %v5379 = vunpack.c.h.b16 %v5288
        %v5380 = vunpack.c.l.b16 %v5289
        %v5381 = vunpack.c.h.b16 %v5289
        %v5382 = vunpack.c.l.b16 %v5290
        %v5383 = vunpack.c.h.b16 %v5290
        %v5384 = vunpack.c.l.b16 %v5291
        %v5385 = vunpack.c.h.b16 %v5291
        %v5386 = vunpack.c.l.b16 %v5292
        %v5387 = vunpack.c.h.b16 %v5292
        %v5388 = vunpack.c.l.b16 %v5293
        %v5389 = vunpack.c.h.b16 %v5293
        %v5390 = vunpack.c.l.b16 %v5294
        %v5391 = vunpack.c.h.b16 %v5294
        %v5392 = vunpack.c.l.b16 %v5295
        %v5393 = vunpack.c.h.b16 %v5295
        %v5394 = vunpack.c.l.b16 %v5296
        %v5395 = vunpack.c.h.b16 %v5296
        %v5396 = vunpack.c.l.b16 %v5297
        %v5397 = vunpack.c.h.b16 %v5297
        %v5398 = vunpack.c.l.b16 %v5298
        %v5399 = vunpack.c.h.b16 %v5298
        %v5400 = vunpack.c.l.b16 %v5299
        %v5401 = vunpack.c.h.b16 %v5299
        %v5402 = vunpack.c.l.b16 %v5300
        %v5403 = vunpack.c.h.b16 %v5300
        %v5404 = vunpack.c.l.b16 %v5301
        %v5405 = vunpack.c.h.b16 %v5301
        %v5406 = vunpack.c.l.b16 %v5302
        %v5407 = vunpack.c.h.b16 %v5302
        %v5408 = vunpack.c.l.b16 %v5303
        %v5409 = vunpack.c.h.b16 %v5303
        %v5410 = vunpack.c.l.b16 %v5304
        %v5411 = vunpack.c.h.b16 %v5304
        %v5412 = vunpack.c.l.b16 %v5305
        %v5413 = vunpack.c.h.b16 %v5305
        %v5414 = vpack.c.b16 %v5352, %v5350
        %v5415 = vpack.c.b16 %v5353, %v5351
        %v5416 = vpack.c.b16 %v5356, %v5354
        %v5417 = vpack.c.b16 %v5357, %v5355
        %v5418 = vpack.c.b16 %v5360, %v5358
        %v5419 = vpack.c.b16 %v5361, %v5359
        %v5420 = vpack.c.b16 %v5364, %v5362
        %v5421 = vpack.c.b16 %v5365, %v5363
        %v5422 = vpack.c.b16 %v5368, %v5366
        %v5423 = vpack.c.b16 %v5369, %v5367
        %v5424 = vpack.c.b16 %v5372, %v5370
        %v5425 = vpack.c.b16 %v5373, %v5371
        %v5426 = vpack.c.b16 %v5376, %v5374
        %v5427 = vpack.c.b16 %v5377, %v5375
        %v5428 = vpack.c.b16 %v5380, %v5378
        %v5429 = vpack.c.b16 %v5381, %v5379
        %v5430 = vpack.c.b16 %v5384, %v5382
        %v5431 = vpack.c.b16 %v5385, %v5383
        %v5432 = vpack.c.b16 %v5388, %v5386
        %v5433 = vpack.c.b16 %v5389, %v5387
        %v5434 = vpack.c.b16 %v5392, %v5390
        %v5435 = vpack.c.b16 %v5393, %v5391
        %v5436 = vpack.c.b16 %v5396, %v5394
        %v5437 = vpack.c.b16 %v5397, %v5395
        %v5438 = vpack.c.b16 %v5400, %v5398
        %v5439 = vpack.c.b16 %v5401, %v5399
        %v5440 = vpack.c.b16 %v5404, %v5402
        %v5441 = vpack.c.b16 %v5405, %v5403
        %v5442 = vpack.c.b16 %v5408, %v5406
        %v5443 = vpack.c.b16 %v5409, %v5407
        %v5444 = vpack.c.b16 %v5412, %v5410
        %v5445 = vpack.c.b16 %v5413, %v5411
        %5478 = vmatprep.subr.bf16.mxu0 %v5429
        %5479 = vmatpush1.bf16.msra.mxu0 %v5428
        %5480 = vmatprep.subr.bf16.mxu0 %v5427
        %5481 = vmatpush1.bf16.msra.mxu0 %v5426
        %5482 = vmatprep.subr.bf16.mxu0 %v5425
        %5483 = vmatpush1.bf16.msra.mxu0 %v5424
        %5484 = vmatprep.subr.bf16.mxu0 %v5423
        %5485 = vmatpush1.bf16.msra.mxu0 %v5422
        %5486 = vmatprep.subr.bf16.mxu0 %v5421
        %5487 = vmatpush1.bf16.msra.mxu0 %v5420
        %5488 = vmatprep.subr.bf16.mxu0 %v5419
        %5489 = vmatpush1.bf16.msra.mxu0 %v5418
        %5490 = vmatprep.subr.bf16.mxu0 %v5417
        %5491 = vmatpush1.bf16.msra.mxu0 %v5416
        %5492 = vmatprep.subr.bf16.mxu0 %v5415
        %5493 = vmatpush1.bf16.msra.mxu0 %v5414
        %5494 = vmatprep.subr.bf16.mxu0 %v5445
        %5495 = vmatpush2.bf16.msra.mxu0 %v5444
        %5496 = vmatprep.subr.bf16.mxu0 %v5443
        %5497 = vmatpush2.bf16.msra.mxu0 %v5442
        %5498 = vmatprep.subr.bf16.mxu0 %v5441
        %5499 = vmatpush2.bf16.msra.mxu0 %v5440
        %5500 = vmatprep.subr.bf16.mxu0 %v5439
        %5501 = vmatpush2.bf16.msra.mxu0 %v5438
        %5502 = vmatprep.subr.bf16.mxu0 %v5437
        %5503 = vmatpush2.bf16.msra.mxu0 %v5436
        %5504 = vmatprep.subr.bf16.mxu0 %v5435
        %5505 = vmatpush2.bf16.msra.mxu0 %v5434
        %5506 = vmatprep.subr.bf16.mxu0 %v5433
        %5507 = vmatpush2.bf16.msra.mxu0 %v5432
        %5508 = vmatprep.subr.bf16.mxu0 %v5431
        %5509 = vmatpush2.bf16.msra.mxu0 %v5430
        %5510 = vmatprep.mubr.bf16.mxu0 %v5227
        %5511 = vmatmul.mubr.bf16.gmra.mxu0 %v5226
        %v5512 = vpop.f32.mrf.mxu0
        %v5513 = vadd.f32 %v5311, %v5512
        %v5514 = vpop.f32.mrf.mxu0
        %v5515 = vadd.f32 %v5315, %v5514
        %v5516 = vpop.f32.mrf.mxu0
        %v5517 = vadd.f32 %v5311, %v5516
        %v5518 = vpop.f32.mrf.mxu0
        %v5519 = vadd.f32 %v5315, %v5518
        %5520 = vmatprep.mubr.bf16.mxu0 %v5229
        %5521 = vmatmul.mubr.bf16.gmra.mxu0 %v5228
        %v5522 = vpop.f32.mrf.mxu0
        %v5523 = vadd.f32 %v5311, %v5522
        %v5524 = vpop.f32.mrf.mxu0
        %v5525 = vadd.f32 %v5315, %v5524
        %v5526 = vpop.f32.mrf.mxu0
        %v5527 = vadd.f32 %v5311, %v5526
        %v5528 = vpop.f32.mrf.mxu0
        %v5529 = vadd.f32 %v5315, %v5528
        %5530 = vmatprep.mubr.bf16.mxu0 %v5231
        %5531 = vmatmul.mubr.bf16.gmra.mxu0 %v5230
        %v5532 = vpop.f32.mrf.mxu0
        %v5533 = vadd.f32 %v5311, %v5532
        %v5534 = vpop.f32.mrf.mxu0
        %v5535 = vadd.f32 %v5315, %v5534
        %v5536 = vpop.f32.mrf.mxu0
        %v5537 = vadd.f32 %v5311, %v5536
        %v5538 = vpop.f32.mrf.mxu0
        %v5539 = vadd.f32 %v5315, %v5538
        %5540 = vmatprep.mubr.bf16.mxu0 %v5233
        %5541 = vmatmul.mubr.bf16.gmra.mxu0 %v5232
        %v5542 = vpop.f32.mrf.mxu0
        %v5543 = vadd.f32 %v5311, %v5542
        %v5544 = vpop.f32.mrf.mxu0
        %v5545 = vadd.f32 %v5315, %v5544
        %v5546 = vpop.f32.mrf.mxu0
        %v5547 = vadd.f32 %v5311, %v5546
        %v5548 = vpop.f32.mrf.mxu0
        %v5549 = vadd.f32 %v5315, %v5548
        %5550 = vmatprep.mubr.bf16.mxu0 %v5235
        %5551 = vmatmul.mubr.bf16.gmra.mxu0 %v5234
        %v5552 = vpop.f32.mrf.mxu0
        %v5553 = vadd.f32 %v5311, %v5552
        %v5554 = vpop.f32.mrf.mxu0
        %v5555 = vadd.f32 %v5315, %v5554
        %v5556 = vpop.f32.mrf.mxu0
        %v5557 = vadd.f32 %v5311, %v5556
        %v5558 = vpop.f32.mrf.mxu0
        %v5559 = vadd.f32 %v5315, %v5558
        %5560 = vmatprep.mubr.bf16.mxu0 %v5237
        %5561 = vmatmul.mubr.bf16.gmra.mxu0 %v5236
        %v5562 = vpop.f32.mrf.mxu0
        %v5563 = vadd.f32 %v5311, %v5562
        %v5564 = vpop.f32.mrf.mxu0
        %v5565 = vadd.f32 %v5315, %v5564
        %v5566 = vpop.f32.mrf.mxu0
        %v5567 = vadd.f32 %v5311, %v5566
        %v5568 = vpop.f32.mrf.mxu0
        %v5569 = vadd.f32 %v5315, %v5568
        %5570 = vmatprep.mubr.bf16.mxu0 %v5239
        %5571 = vmatmul.mubr.bf16.gmra.mxu0 %v5238
        %v5572 = vpop.f32.mrf.mxu0
        %v5573 = vadd.f32 %v5311, %v5572
        %v5574 = vpop.f32.mrf.mxu0
        %v5575 = vadd.f32 %v5315, %v5574
        %v5576 = vpop.f32.mrf.mxu0
        %v5577 = vadd.f32 %v5311, %v5576
        %v5578 = vpop.f32.mrf.mxu0
        %v5579 = vadd.f32 %v5315, %v5578
        %5580 = vmatprep.mubr.bf16.mxu0 %v5241
        %5581 = vmatmul.mubr.bf16.gmra.mxu0 %v5240
        %v5582 = vpop.f32.mrf.mxu0
        %v5583 = vadd.f32 %v5311, %v5582
        %v5584 = vpop.f32.mrf.mxu0
        %v5585 = vadd.f32 %v5315, %v5584
        %v5586 = vpop.f32.mrf.mxu0
        %v5587 = vadd.f32 %v5311, %v5586
        %v5588 = vpop.f32.mrf.mxu0
        %v5589 = vadd.f32 %v5315, %v5588
        %5590 = vmatprep.mubr.bf16.mxu0 %v5243
        %5591 = vmatmul.mubr.bf16.gmra.mxu0 %v5242
        %v5592 = vpop.f32.mrf.mxu0
        %v5593 = vadd.f32 %v5311, %v5592
        %v5594 = vpop.f32.mrf.mxu0
        %v5595 = vadd.f32 %v5315, %v5594
        %v5596 = vpop.f32.mrf.mxu0
        %v5597 = vadd.f32 %v5311, %v5596
        %v5598 = vpop.f32.mrf.mxu0
        %v5599 = vadd.f32 %v5315, %v5598
        %5600 = vmatprep.mubr.bf16.mxu0 %v5245
        %5601 = vmatmul.mubr.bf16.gmra.mxu0 %v5244
        %v5602 = vpop.f32.mrf.mxu0
        %v5603 = vadd.f32 %v5311, %v5602
        %v5604 = vpop.f32.mrf.mxu0
        %v5605 = vadd.f32 %v5315, %v5604
        %v5606 = vpop.f32.mrf.mxu0
        %v5607 = vadd.f32 %v5311, %v5606
        %v5608 = vpop.f32.mrf.mxu0
        %v5609 = vadd.f32 %v5315, %v5608
        %5610 = vmatprep.mubr.bf16.mxu0 %v5247
        %5611 = vmatmul.mubr.bf16.gmra.mxu0 %v5246
        %v5612 = vpop.f32.mrf.mxu0
        %v5613 = vadd.f32 %v5311, %v5612
        %v5614 = vpop.f32.mrf.mxu0
        %v5615 = vadd.f32 %v5315, %v5614
        %v5616 = vpop.f32.mrf.mxu0
        %v5617 = vadd.f32 %v5311, %v5616
        %v5618 = vpop.f32.mrf.mxu0
        %v5619 = vadd.f32 %v5315, %v5618
        %5620 = vmatprep.mubr.bf16.mxu0 %v5249
        %5621 = vmatmul.mubr.bf16.gmra.mxu0 %v5248
        %v5622 = vpop.f32.mrf.mxu0
        %v5623 = vadd.f32 %v5311, %v5622
        %v5624 = vpop.f32.mrf.mxu0
        %v5625 = vadd.f32 %v5315, %v5624
        %v5626 = vpop.f32.mrf.mxu0
        %v5627 = vadd.f32 %v5311, %v5626
        %v5628 = vpop.f32.mrf.mxu0
        %v5629 = vadd.f32 %v5315, %v5628
        %5630 = vmatprep.mubr.bf16.mxu0 %v5251
        %5631 = vmatmul.mubr.bf16.gmra.mxu0 %v5250
        %v5632 = vpop.f32.mrf.mxu0
        %v5633 = vadd.f32 %v5311, %v5632
        %v5634 = vpop.f32.mrf.mxu0
        %v5635 = vadd.f32 %v5315, %v5634
        %v5636 = vpop.f32.mrf.mxu0
        %v5637 = vadd.f32 %v5311, %v5636
        %v5638 = vpop.f32.mrf.mxu0
        %v5639 = vadd.f32 %v5315, %v5638
        %5640 = vmatprep.mubr.bf16.mxu0 %v5253
        %5641 = vmatmul.mubr.bf16.gmra.mxu0 %v5252
        %v5642 = vpop.f32.mrf.mxu0
        %v5643 = vadd.f32 %v5311, %v5642
        %v5644 = vpop.f32.mrf.mxu0
        %v5645 = vadd.f32 %v5315, %v5644
        %v5646 = vpop.f32.mrf.mxu0
        %v5647 = vadd.f32 %v5311, %v5646
        %v5648 = vpop.f32.mrf.mxu0
        %v5649 = vadd.f32 %v5315, %v5648
        %5650 = vmatprep.mubr.bf16.mxu0 %v5255
        %5651 = vmatmul.mubr.bf16.gmra.mxu0 %v5254
        %v5652 = vpop.f32.mrf.mxu0
        %v5653 = vadd.f32 %v5311, %v5652
        %v5654 = vpop.f32.mrf.mxu0
        %v5655 = vadd.f32 %v5315, %v5654
        %v5656 = vpop.f32.mrf.mxu0
        %v5657 = vadd.f32 %v5311, %v5656
        %v5658 = vpop.f32.mrf.mxu0
        %v5659 = vadd.f32 %v5315, %v5658
        %5660 = vmatprep.mubr.bf16.mxu0 %v5257
        %5661 = vmatmul.mubr.bf16.gmra.mxu0 %v5256
        %v5662 = vpop.f32.mrf.mxu0
        %v5663 = vadd.f32 %v5311, %v5662
        %v5664 = vpop.f32.mrf.mxu0
        %v5665 = vadd.f32 %v5315, %v5664
        %v5666 = vpop.f32.mrf.mxu0
        %v5667 = vadd.f32 %v5311, %v5666
        %v5668 = vpop.f32.mrf.mxu0
        %v5669 = vadd.f32 %v5315, %v5668
        %5670 = vmatprep.mubr.bf16.mxu0 %v5259
        %5671 = vmatmul.mubr.bf16.gmra.mxu0 %v5258
        %v5672 = vpop.f32.mrf.mxu0
        %v5673 = vadd.f32 %v5311, %v5672
        %v5674 = vpop.f32.mrf.mxu0
        %v5675 = vadd.f32 %v5315, %v5674
        %v5676 = vpop.f32.mrf.mxu0
        %v5677 = vadd.f32 %v5311, %v5676
        %v5678 = vpop.f32.mrf.mxu0
        %v5679 = vadd.f32 %v5315, %v5678
        %5680 = vmatprep.mubr.bf16.mxu0 %v5261
        %5681 = vmatmul.mubr.bf16.gmra.mxu0 %v5260
        %v5682 = vpop.f32.mrf.mxu0
        %v5683 = vadd.f32 %v5311, %v5682
        %v5684 = vpop.f32.mrf.mxu0
        %v5685 = vadd.f32 %v5315, %v5684
        %v5686 = vpop.f32.mrf.mxu0
        %v5687 = vadd.f32 %v5311, %v5686
        %v5688 = vpop.f32.mrf.mxu0
        %v5689 = vadd.f32 %v5315, %v5688
        %5690 = vmatprep.mubr.bf16.mxu0 %v5263
        %5691 = vmatmul.mubr.bf16.gmra.mxu0 %v5262
        %v5692 = vpop.f32.mrf.mxu0
        %v5693 = vadd.f32 %v5311, %v5692
        %v5694 = vpop.f32.mrf.mxu0
        %v5695 = vadd.f32 %v5315, %v5694
        %v5696 = vpop.f32.mrf.mxu0
        %v5697 = vadd.f32 %v5311, %v5696
        %v5698 = vpop.f32.mrf.mxu0
        %v5699 = vadd.f32 %v5315, %v5698
        %5700 = vmatprep.mubr.bf16.mxu0 %v5265
        %5701 = vmatmul.mubr.bf16.gmra.mxu0 %v5264
        %v5702 = vpop.f32.mrf.mxu0
        %v5703 = vadd.f32 %v5311, %v5702
        %v5704 = vpop.f32.mrf.mxu0
        %v5705 = vadd.f32 %v5315, %v5704
        %v5706 = vpop.f32.mrf.mxu0
        %v5707 = vadd.f32 %v5311, %v5706
        %v5708 = vpop.f32.mrf.mxu0
        %v5709 = vadd.f32 %v5315, %v5708
        %5710 = vmatprep.mubr.bf16.mxu0 %v5267
        %5711 = vmatmul.mubr.bf16.gmra.mxu0 %v5266
        %v5712 = vpop.f32.mrf.mxu0
        %v5713 = vadd.f32 %v5311, %v5712
        %v5714 = vpop.f32.mrf.mxu0
        %v5715 = vadd.f32 %v5315, %v5714
        %v5716 = vpop.f32.mrf.mxu0
        %v5717 = vadd.f32 %v5311, %v5716
        %v5718 = vpop.f32.mrf.mxu0
        %v5719 = vadd.f32 %v5315, %v5718
        %5720 = vmatprep.mubr.bf16.mxu0 %v5269
        %5721 = vmatmul.mubr.bf16.gmra.mxu0 %v5268
        %v5722 = vpop.f32.mrf.mxu0
        %v5723 = vadd.f32 %v5311, %v5722
        %v5724 = vpop.f32.mrf.mxu0
        %v5725 = vadd.f32 %v5315, %v5724
        %v5726 = vpop.f32.mrf.mxu0
        %v5727 = vadd.f32 %v5311, %v5726
        %v5728 = vpop.f32.mrf.mxu0
        %v5729 = vadd.f32 %v5315, %v5728
        %5730 = vmatprep.mubr.bf16.mxu0 %v5271
        %5731 = vmatmul.mubr.bf16.gmra.mxu0 %v5270
        %v5732 = vpop.f32.mrf.mxu0
        %v5733 = vadd.f32 %v5311, %v5732
        %v5734 = vpop.f32.mrf.mxu0
        %v5735 = vadd.f32 %v5315, %v5734
        %v5736 = vpop.f32.mrf.mxu0
        %v5737 = vadd.f32 %v5311, %v5736
        %v5738 = vpop.f32.mrf.mxu0
        %v5739 = vadd.f32 %v5315, %v5738
        %5740 = vmatprep.mubr.bf16.mxu0 %v5273
        %5741 = vmatmul.mubr.bf16.gmra.mxu0 %v5272
        %v5742 = vpop.f32.mrf.mxu0
        %v5743 = vadd.f32 %v5311, %v5742
        %v5744 = vpop.f32.mrf.mxu0
        %v5745 = vadd.f32 %v5315, %v5744
        %v5746 = vpop.f32.mrf.mxu0
        %v5747 = vadd.f32 %v5311, %v5746
        %v5748 = vpop.f32.mrf.mxu0
        %v5749 = vadd.f32 %v5315, %v5748
        %5750 = vdwg.mxu0
        %v5751 = vpack.c.bf16 %v5517, %v5513
        %v5752 = vpack.c.bf16 %v5519, %v5515
        %v5753 = vpack.c.bf16 %v5527, %v5523
        %v5754 = vpack.c.bf16 %v5529, %v5525
        %v5755 = vpack.c.bf16 %v5537, %v5533
        %v5756 = vpack.c.bf16 %v5539, %v5535
        %v5757 = vpack.c.bf16 %v5547, %v5543
        %v5758 = vpack.c.bf16 %v5549, %v5545
        %v5759 = vpack.c.bf16 %v5557, %v5553
        %v5760 = vpack.c.bf16 %v5559, %v5555
        %v5761 = vpack.c.bf16 %v5567, %v5563
        %v5762 = vpack.c.bf16 %v5569, %v5565
        %v5763 = vpack.c.bf16 %v5577, %v5573
        %v5764 = vpack.c.bf16 %v5579, %v5575
        %v5765 = vpack.c.bf16 %v5587, %v5583
        %v5766 = vpack.c.bf16 %v5589, %v5585
        %v5767 = vpack.c.bf16 %v5597, %v5593
        %v5768 = vpack.c.bf16 %v5599, %v5595
        %v5769 = vpack.c.bf16 %v5607, %v5603
        %v5770 = vpack.c.bf16 %v5609, %v5605
        %v5771 = vpack.c.bf16 %v5617, %v5613
        %v5772 = vpack.c.bf16 %v5619, %v5615
        %v5773 = vpack.c.bf16 %v5627, %v5623
        %v5774 = vpack.c.bf16 %v5629, %v5625
        %v5775 = vpack.c.bf16 %v5637, %v5633
        %v5776 = vpack.c.bf16 %v5639, %v5635
        %v5777 = vpack.c.bf16 %v5647, %v5643
        %v5778 = vpack.c.bf16 %v5649, %v5645
        %v5779 = vpack.c.bf16 %v5657, %v5653
        %v5780 = vpack.c.bf16 %v5659, %v5655
        %v5781 = vpack.c.bf16 %v5667, %v5663
        %v5782 = vpack.c.bf16 %v5669, %v5665
        %v5783 = vpack.c.bf16 %v5677, %v5673
        %v5784 = vpack.c.bf16 %v5679, %v5675
        %v5785 = vpack.c.bf16 %v5687, %v5683
        %v5786 = vpack.c.bf16 %v5689, %v5685
        %v5787 = vpack.c.bf16 %v5697, %v5693
        %v5788 = vpack.c.bf16 %v5699, %v5695
        %v5789 = vpack.c.bf16 %v5707, %v5703
        %v5790 = vpack.c.bf16 %v5709, %v5705
        %v5791 = vpack.c.bf16 %v5717, %v5713
        %v5792 = vpack.c.bf16 %v5719, %v5715
        %v5793 = vpack.c.bf16 %v5727, %v5723
        %v5794 = vpack.c.bf16 %v5729, %v5725
        %v5795 = vpack.c.bf16 %v5737, %v5733
        %v5796 = vpack.c.bf16 %v5739, %v5735
        %v5797 = vpack.c.bf16 %v5747, %v5743
        %v5798 = vpack.c.bf16 %v5749, %v5745
        %v5799 = vmax.bf16 %v5751, 0
        %v5800 = vmax.bf16 %v5752, 0
        %v5801 = vmax.bf16 %v5753, 0
        %v5802 = vmax.bf16 %v5754, 0
        %v5803 = vmax.bf16 %v5755, 0
        %v5804 = vmax.bf16 %v5756, 0
        %v5805 = vmax.bf16 %v5757, 0
        %v5806 = vmax.bf16 %v5758, 0
        %v5807 = vmax.bf16 %v5759, 0
        %v5808 = vmax.bf16 %v5760, 0
        %v5809 = vmax.bf16 %v5761, 0
        %v5810 = vmax.bf16 %v5762, 0
        %v5811 = vmax.bf16 %v5763, 0
        %v5812 = vmax.bf16 %v5764, 0
        %v5813 = vmax.bf16 %v5765, 0
        %v5814 = vmax.bf16 %v5766, 0
        %v5815 = vmax.bf16 %v5767, 0
        %v5816 = vmax.bf16 %v5768, 0
        %v5817 = vmax.bf16 %v5769, 0
        %v5818 = vmax.bf16 %v5770, 0
        %v5819 = vmax.bf16 %v5771, 0
        %v5820 = vmax.bf16 %v5772, 0
        %v5821 = vmax.bf16 %v5773, 0
        %v5822 = vmax.bf16 %v5774, 0
        %v5823 = vmax.bf16 %v5775, 0
        %v5824 = vmax.bf16 %v5776, 0
        %v5825 = vmax.bf16 %v5777, 0
        %v5826 = vmax.bf16 %v5778, 0
        %v5827 = vmax.bf16 %v5779, 0
        %v5828 = vmax.bf16 %v5780, 0
        %v5829 = vmax.bf16 %v5781, 0
        %v5830 = vmax.bf16 %v5782, 0
        %v5831 = vmax.bf16 %v5783, 0
        %v5832 = vmax.bf16 %v5784, 0
        %v5833 = vmax.bf16 %v5785, 0
        %v5834 = vmax.bf16 %v5786, 0
        %v5835 = vmax.bf16 %v5787, 0
        %v5836 = vmax.bf16 %v5788, 0
        %v5837 = vmax.bf16 %v5789, 0
        %v5838 = vmax.bf16 %v5790, 0
        %v5839 = vmax.bf16 %v5791, 0
        %v5840 = vmax.bf16 %v5792, 0
        %v5841 = vmax.bf16 %v5793, 0
        %v5842 = vmax.bf16 %v5794, 0
        %v5843 = vmax.bf16 %v5795, 0
        %v5844 = vmax.bf16 %v5796, 0
        %v5845 = vmax.bf16 %v5797, 0
        %v5846 = vmax.bf16 %v5798, 0
        %v5847 = vld [vmem:[%s17] sm:$0xf]
        %v5848 = vld [vmem:[%s17 + $0x4] sm:$0xf]
        %v5849 = vld [vmem:[%s17 + $0x8] sm:$0xf]
        %v5850 = vld [vmem:[%s17 + $0xc] sm:$0xf]
        %v5851 = vld [vmem:[%s17 + $0x10] sm:$0xf]
        %v5852 = vld [vmem:[%s17 + $0x14] sm:$0xf]
        %v5853 = vld [vmem:[%s17 + $0x18] sm:$0xf]
        %v5854 = vld [vmem:[%s17 + $0x1c] sm:$0xf]
        %v5855 = vld [vmem:[%s17 + $0x20] sm:$0xf]
        %v5856 = vld [vmem:[%s17 + $0x24] sm:$0xf]
        %v5857 = vld [vmem:[%s17 + $0x28] sm:$0xf]
        %v5858 = vld [vmem:[%s17 + $0x2c] sm:$0xf]
        %v5859 = vld [vmem:[%s17 + $0x30] sm:$0xf]
        %v5860 = vld [vmem:[%s17 + $0x34] sm:$0xf]
        %v5861 = vld [vmem:[%s17 + $0x38] sm:$0xf]
        %v5862 = vld [vmem:[%s17 + $0x3c] sm:$0xf]
        %v5863 = vld [vmem:[%s17 + $0x40] sm:$0xf]
        %v5864 = vld [vmem:[%s17 + $0x44] sm:$0xf]
        %v5865 = vld [vmem:[%s17 + $0x48] sm:$0xf]
        %v5866 = vld [vmem:[%s17 + $0x4c] sm:$0xf]
        %v5867 = vld [vmem:[%s17 + $0x50] sm:$0xf]
        %v5868 = vld [vmem:[%s17 + $0x54] sm:$0xf]
        %v5869 = vld [vmem:[%s17 + $0x58] sm:$0xf]
        %v5870 = vld [vmem:[%s17 + $0x5c] sm:$0xf]
        %v5871 = vld [vmem:[%s17 + $0x60] sm:$0xf]
        %v5872 = vld [vmem:[%s17 + $0x64] sm:$0xf]
        %v5873 = vld [vmem:[%s17 + $0x68] sm:$0xf]
        %v5874 = vld [vmem:[%s17 + $0x6c] sm:$0xf]
        %v5875 = vld [vmem:[%s17 + $0x70] sm:$0xf]
        %v5876 = vld [vmem:[%s17 + $0x74] sm:$0xf]
        %v5877 = vld [vmem:[%s17 + $0x78] sm:$0xf]
        %v5878 = vld [vmem:[%s17 + $0x7c] sm:$0xf]
        %v5879 = vld [vmem:[%s18] sm:$0x1]
        %v5881 = vlaneseq
        %v5882 = vshrl.u32 %v5881, 7
        %v5883 = vsub.s32 0, %v5882
        %v5884 = vrot.slane %v5879, %v5883
        %v5918 = vunpack.c.l.b16 %v5847
        %v5919 = vunpack.c.l.b16 %v5848
        %v5920 = vunpack.c.l.b16 %v5849
        %v5921 = vunpack.c.l.b16 %v5850
        %v5922 = vunpack.c.l.b16 %v5851
        %v5923 = vunpack.c.l.b16 %v5852
        %v5924 = vunpack.c.l.b16 %v5853
        %v5925 = vunpack.c.l.b16 %v5854
        %v5926 = vunpack.c.l.b16 %v5855
        %v5927 = vunpack.c.l.b16 %v5856
        %v5928 = vunpack.c.l.b16 %v5857
        %v5929 = vunpack.c.l.b16 %v5858
        %v5930 = vunpack.c.l.b16 %v5859
        %v5931 = vunpack.c.l.b16 %v5860
        %v5932 = vunpack.c.l.b16 %v5861
        %v5933 = vunpack.c.l.b16 %v5862
        %v5934 = vunpack.c.l.b16 %v5863
        %v5935 = vunpack.c.l.b16 %v5864
        %v5936 = vunpack.c.l.b16 %v5865
        %v5937 = vunpack.c.l.b16 %v5866
        %v5938 = vunpack.c.l.b16 %v5867
        %v5939 = vunpack.c.l.b16 %v5868
        %v5940 = vunpack.c.l.b16 %v5869
        %v5941 = vunpack.c.l.b16 %v5870
        %v5942 = vunpack.c.l.b16 %v5871
        %v5943 = vunpack.c.l.b16 %v5872
        %v5944 = vunpack.c.l.b16 %v5873
        %v5945 = vunpack.c.l.b16 %v5874
        %v5946 = vunpack.c.l.b16 %v5875
        %v5947 = vunpack.c.l.b16 %v5876
        %v5948 = vunpack.c.l.b16 %v5877
        %v5949 = vunpack.c.l.b16 %v5878
        %v5950 = vpack.c.b16 %v5919, %v5918
        %v5951 = vpack.c.b16 %v5921, %v5920
        %v5952 = vpack.c.b16 %v5923, %v5922
        %v5953 = vpack.c.b16 %v5925, %v5924
        %v5954 = vpack.c.b16 %v5927, %v5926
        %v5955 = vpack.c.b16 %v5929, %v5928
        %v5956 = vpack.c.b16 %v5931, %v5930
        %v5957 = vpack.c.b16 %v5933, %v5932
        %v5958 = vpack.c.b16 %v5935, %v5934
        %v5959 = vpack.c.b16 %v5937, %v5936
        %v5960 = vpack.c.b16 %v5939, %v5938
        %v5961 = vpack.c.b16 %v5941, %v5940
        %v5962 = vpack.c.b16 %v5943, %v5942
        %v5963 = vpack.c.b16 %v5945, %v5944
        %v5964 = vpack.c.b16 %v5947, %v5946
        %v5965 = vpack.c.b16 %v5949, %v5948
        %5982 = vmatprep.subr.bf16.mxu0 0
        %5983 = vmatpush1.bf16.msra.mxu0 %v5957
        %5984 = vmatprep.subr.bf16.mxu0 0
        %5985 = vmatpush1.bf16.msra.mxu0 %v5956
        %5986 = vmatprep.subr.bf16.mxu0 0
        %5987 = vmatpush1.bf16.msra.mxu0 %v5955
        %5988 = vmatprep.subr.bf16.mxu0 0
        %5989 = vmatpush1.bf16.msra.mxu0 %v5954
        %5990 = vmatprep.subr.bf16.mxu0 0
        %5991 = vmatpush1.bf16.msra.mxu0 %v5953
        %5992 = vmatprep.subr.bf16.mxu0 0
        %5993 = vmatpush1.bf16.msra.mxu0 %v5952
        %5994 = vmatprep.subr.bf16.mxu0 0
        %5995 = vmatpush1.bf16.msra.mxu0 %v5951
        %5996 = vmatprep.subr.bf16.mxu0 0
        %5997 = vmatpush1.bf16.msra.mxu0 %v5950
        %5998 = vmatprep.subr.bf16.mxu0 0
        %5999 = vmatpush2.bf16.msra.mxu0 %v5965
        %6000 = vmatprep.subr.bf16.mxu0 0
        %6001 = vmatpush2.bf16.msra.mxu0 %v5964
        %6002 = vmatprep.subr.bf16.mxu0 0
        %6003 = vmatpush2.bf16.msra.mxu0 %v5963
        %6004 = vmatprep.subr.bf16.mxu0 0
        %6005 = vmatpush2.bf16.msra.mxu0 %v5962
        %6006 = vmatprep.subr.bf16.mxu0 0
        %6007 = vmatpush2.bf16.msra.mxu0 %v5961
        %6008 = vmatprep.subr.bf16.mxu0 0
        %6009 = vmatpush2.bf16.msra.mxu0 %v5960
        %6010 = vmatprep.subr.bf16.mxu0 0
        %6011 = vmatpush2.bf16.msra.mxu0 %v5959
        %6012 = vmatprep.subr.bf16.mxu0 0
        %6013 = vmatpush2.bf16.msra.mxu0 %v5958
        %6014 = vmatprep.mubr.bf16.mxu0 %v5800
        %6015 = vmatmul.mubr.bf16.gmra.mxu0 %v5799
        %v6016 = vpop.f32.mrf.mxu0
        %v6017 = vadd.f32 %v5884, %v6016
        %v6018 = vpop.f32.mrf.mxu0
        %v6019 = vpop.f32.mrf.mxu0
        %v6020 = vadd.f32 %v5884, %v6019
        %v6021 = vpop.f32.mrf.mxu0
        %6022 = vmatprep.mubr.bf16.mxu0 %v5802
        %6023 = vmatmul.mubr.bf16.gmra.mxu0 %v5801
        %v6024 = vpop.f32.mrf.mxu0
        %v6025 = vadd.f32 %v5884, %v6024
        %v6026 = vpop.f32.mrf.mxu0
        %v6027 = vpop.f32.mrf.mxu0
        %v6028 = vadd.f32 %v5884, %v6027
        %v6029 = vpop.f32.mrf.mxu0
        %6030 = vmatprep.mubr.bf16.mxu0 %v5804
        %6031 = vmatmul.mubr.bf16.gmra.mxu0 %v5803
        %v6032 = vpop.f32.mrf.mxu0
        %v6033 = vadd.f32 %v5884, %v6032
        %v6034 = vpop.f32.mrf.mxu0
        %v6035 = vpop.f32.mrf.mxu0
        %v6036 = vadd.f32 %v5884, %v6035
        %v6037 = vpop.f32.mrf.mxu0
        %6038 = vmatprep.mubr.bf16.mxu0 %v5806
        %6039 = vmatmul.mubr.bf16.gmra.mxu0 %v5805
        %v6040 = vpop.f32.mrf.mxu0
        %v6041 = vadd.f32 %v5884, %v6040
        %v6042 = vpop.f32.mrf.mxu0
        %v6043 = vpop.f32.mrf.mxu0
        %v6044 = vadd.f32 %v5884, %v6043
        %v6045 = vpop.f32.mrf.mxu0
        %6046 = vmatprep.mubr.bf16.mxu0 %v5808
        %6047 = vmatmul.mubr.bf16.gmra.mxu0 %v5807
        %v6048 = vpop.f32.mrf.mxu0
        %v6049 = vadd.f32 %v5884, %v6048
        %v6050 = vpop.f32.mrf.mxu0
        %v6051 = vpop.f32.mrf.mxu0
        %v6052 = vadd.f32 %v5884, %v6051
        %v6053 = vpop.f32.mrf.mxu0
        %6054 = vmatprep.mubr.bf16.mxu0 %v5810
        %6055 = vmatmul.mubr.bf16.gmra.mxu0 %v5809
        %v6056 = vpop.f32.mrf.mxu0
        %v6057 = vadd.f32 %v5884, %v6056
        %v6058 = vpop.f32.mrf.mxu0
        %v6059 = vpop.f32.mrf.mxu0
        %v6060 = vadd.f32 %v5884, %v6059
        %v6061 = vpop.f32.mrf.mxu0
        %6062 = vmatprep.mubr.bf16.mxu0 %v5812
        %6063 = vmatmul.mubr.bf16.gmra.mxu0 %v5811
        %v6064 = vpop.f32.mrf.mxu0
        %v6065 = vadd.f32 %v5884, %v6064
        %v6066 = vpop.f32.mrf.mxu0
        %v6067 = vpop.f32.mrf.mxu0
        %v6068 = vadd.f32 %v5884, %v6067
        %v6069 = vpop.f32.mrf.mxu0
        %6070 = vmatprep.mubr.bf16.mxu0 %v5814
        %6071 = vmatmul.mubr.bf16.gmra.mxu0 %v5813
        %v6072 = vpop.f32.mrf.mxu0
        %v6073 = vadd.f32 %v5884, %v6072
        %v6074 = vpop.f32.mrf.mxu0
        %v6075 = vpop.f32.mrf.mxu0
        %v6076 = vadd.f32 %v5884, %v6075
        %v6077 = vpop.f32.mrf.mxu0
        %6078 = vmatprep.mubr.bf16.mxu0 %v5816
        %6079 = vmatmul.mubr.bf16.gmra.mxu0 %v5815
        %v6080 = vpop.f32.mrf.mxu0
        %v6081 = vadd.f32 %v5884, %v6080
        %v6082 = vpop.f32.mrf.mxu0
        %v6083 = vpop.f32.mrf.mxu0
        %v6084 = vadd.f32 %v5884, %v6083
        %v6085 = vpop.f32.mrf.mxu0
        %6086 = vmatprep.mubr.bf16.mxu0 %v5818
        %6087 = vmatmul.mubr.bf16.gmra.mxu0 %v5817
        %v6088 = vpop.f32.mrf.mxu0
        %v6089 = vadd.f32 %v5884, %v6088
        %v6090 = vpop.f32.mrf.mxu0
        %v6091 = vpop.f32.mrf.mxu0
        %v6092 = vadd.f32 %v5884, %v6091
        %v6093 = vpop.f32.mrf.mxu0
        %6094 = vmatprep.mubr.bf16.mxu0 %v5820
        %6095 = vmatmul.mubr.bf16.gmra.mxu0 %v5819
        %v6096 = vpop.f32.mrf.mxu0
        %v6097 = vadd.f32 %v5884, %v6096
        %v6098 = vpop.f32.mrf.mxu0
        %v6099 = vpop.f32.mrf.mxu0
        %v6100 = vadd.f32 %v5884, %v6099
        %v6101 = vpop.f32.mrf.mxu0
        %6102 = vmatprep.mubr.bf16.mxu0 %v5822
        %6103 = vmatmul.mubr.bf16.gmra.mxu0 %v5821
        %v6104 = vpop.f32.mrf.mxu0
        %v6105 = vadd.f32 %v5884, %v6104
        %v6106 = vpop.f32.mrf.mxu0
        %v6107 = vpop.f32.mrf.mxu0
        %v6108 = vadd.f32 %v5884, %v6107
        %v6109 = vpop.f32.mrf.mxu0
        %6110 = vmatprep.mubr.bf16.mxu0 %v5824
        %6111 = vmatmul.mubr.bf16.gmra.mxu0 %v5823
        %v6112 = vpop.f32.mrf.mxu0
        %v6113 = vadd.f32 %v5884, %v6112
        %v6114 = vpop.f32.mrf.mxu0
        %v6115 = vpop.f32.mrf.mxu0
        %v6116 = vadd.f32 %v5884, %v6115
        %v6117 = vpop.f32.mrf.mxu0
        %6118 = vmatprep.mubr.bf16.mxu0 %v5826
        %6119 = vmatmul.mubr.bf16.gmra.mxu0 %v5825
        %v6120 = vpop.f32.mrf.mxu0
        %v6121 = vadd.f32 %v5884, %v6120
        %v6122 = vpop.f32.mrf.mxu0
        %v6123 = vpop.f32.mrf.mxu0
        %v6124 = vadd.f32 %v5884, %v6123
        %v6125 = vpop.f32.mrf.mxu0
        %6126 = vmatprep.mubr.bf16.mxu0 %v5828
        %6127 = vmatmul.mubr.bf16.gmra.mxu0 %v5827
        %v6128 = vpop.f32.mrf.mxu0
        %v6129 = vadd.f32 %v5884, %v6128
        %v6130 = vpop.f32.mrf.mxu0
        %v6131 = vpop.f32.mrf.mxu0
        %v6132 = vadd.f32 %v5884, %v6131
        %v6133 = vpop.f32.mrf.mxu0
        %6134 = vmatprep.mubr.bf16.mxu0 %v5830
        %6135 = vmatmul.mubr.bf16.gmra.mxu0 %v5829
        %v6136 = vpop.f32.mrf.mxu0
        %v6137 = vadd.f32 %v5884, %v6136
        %v6138 = vpop.f32.mrf.mxu0
        %v6139 = vpop.f32.mrf.mxu0
        %v6140 = vadd.f32 %v5884, %v6139
        %v6141 = vpop.f32.mrf.mxu0
        %6142 = vmatprep.mubr.bf16.mxu0 %v5832
        %6143 = vmatmul.mubr.bf16.gmra.mxu0 %v5831
        %v6144 = vpop.f32.mrf.mxu0
        %v6145 = vadd.f32 %v5884, %v6144
        %v6146 = vpop.f32.mrf.mxu0
        %v6147 = vpop.f32.mrf.mxu0
        %v6148 = vadd.f32 %v5884, %v6147
        %v6149 = vpop.f32.mrf.mxu0
        %6150 = vmatprep.mubr.bf16.mxu0 %v5834
        %6151 = vmatmul.mubr.bf16.gmra.mxu0 %v5833
        %v6152 = vpop.f32.mrf.mxu0
        %v6153 = vadd.f32 %v5884, %v6152
        %v6154 = vpop.f32.mrf.mxu0
        %v6155 = vpop.f32.mrf.mxu0
        %v6156 = vadd.f32 %v5884, %v6155
        %v6157 = vpop.f32.mrf.mxu0
        %6158 = vmatprep.mubr.bf16.mxu0 %v5836
        %6159 = vmatmul.mubr.bf16.gmra.mxu0 %v5835
        %v6160 = vpop.f32.mrf.mxu0
        %v6161 = vadd.f32 %v5884, %v6160
        %v6162 = vpop.f32.mrf.mxu0
        %v6163 = vpop.f32.mrf.mxu0
        %v6164 = vadd.f32 %v5884, %v6163
        %v6165 = vpop.f32.mrf.mxu0
        %6166 = vmatprep.mubr.bf16.mxu0 %v5838
        %6167 = vmatmul.mubr.bf16.gmra.mxu0 %v5837
        %v6168 = vpop.f32.mrf.mxu0
        %v6169 = vadd.f32 %v5884, %v6168
        %v6170 = vpop.f32.mrf.mxu0
        %v6171 = vpop.f32.mrf.mxu0
        %v6172 = vadd.f32 %v5884, %v6171
        %v6173 = vpop.f32.mrf.mxu0
        %6174 = vmatprep.mubr.bf16.mxu0 %v5840
        %6175 = vmatmul.mubr.bf16.gmra.mxu0 %v5839
        %v6176 = vpop.f32.mrf.mxu0
        %v6177 = vadd.f32 %v5884, %v6176
        %v6178 = vpop.f32.mrf.mxu0
        %v6179 = vpop.f32.mrf.mxu0
        %v6180 = vadd.f32 %v5884, %v6179
        %v6181 = vpop.f32.mrf.mxu0
        %6182 = vmatprep.mubr.bf16.mxu0 %v5842
        %6183 = vmatmul.mubr.bf16.gmra.mxu0 %v5841
        %v6184 = vpop.f32.mrf.mxu0
        %v6185 = vadd.f32 %v5884, %v6184
        %v6186 = vpop.f32.mrf.mxu0
        %v6187 = vpop.f32.mrf.mxu0
        %v6188 = vadd.f32 %v5884, %v6187
        %v6189 = vpop.f32.mrf.mxu0
        %6190 = vmatprep.mubr.bf16.mxu0 %v5844
        %6191 = vmatmul.mubr.bf16.gmra.mxu0 %v5843
        %v6192 = vpop.f32.mrf.mxu0
        %v6193 = vadd.f32 %v5884, %v6192
        %v6194 = vpop.f32.mrf.mxu0
        %v6195 = vpop.f32.mrf.mxu0
        %v6196 = vadd.f32 %v5884, %v6195
        %v6197 = vpop.f32.mrf.mxu0
        %6198 = vmatprep.mubr.bf16.mxu0 %v5846
        %6199 = vmatmul.mubr.bf16.gmra.mxu0 %v5845
        %v6200 = vpop.f32.mrf.mxu0
        %v6201 = vadd.f32 %v5884, %v6200
        %v6202 = vpop.f32.mrf.mxu0
        %v6203 = vpop.f32.mrf.mxu0
        %v6204 = vadd.f32 %v5884, %v6203
        %v6205 = vpop.f32.mrf.mxu0
        %6206 = vdwg.mxu0
        %vm6207 = vcmask 31744
        %6208 = vst.msk [vmem:[%s663] sm:$0xff] %vm6207, %v6017
        %6209 = vst.msk [vmem:[%s663 + $0x8] sm:$0xff] %vm6207, %v6020
        %6210 = vst.msk [vmem:[%s663 + $0x10] sm:$0xff] %vm6207, %v6025
        %6211 = vst.msk [vmem:[%s663 + $0x18] sm:$0xff] %vm6207, %v6028
        %6212 = vst.msk [vmem:[%s663 + $0x20] sm:$0xff] %vm6207, %v6033
        %6213 = vst.msk [vmem:[%s663 + $0x28] sm:$0xff] %vm6207, %v6036
        %6214 = vst.msk [vmem:[%s663 + $0x30] sm:$0xff] %vm6207, %v6041
        %6215 = vst.msk [vmem:[%s663 + $0x38] sm:$0xff] %vm6207, %v6044
        %6216 = vst.msk [vmem:[%s663 + $0x40] sm:$0xff] %vm6207, %v6049
        %6217 = vst.msk [vmem:[%s663 + $0x48] sm:$0xff] %vm6207, %v6052
        %6218 = vst.msk [vmem:[%s663 + $0x50] sm:$0xff] %vm6207, %v6057
        %6219 = vst.msk [vmem:[%s663 + $0x58] sm:$0xff] %vm6207, %v6060
        %6220 = vst.msk [vmem:[%s663 + $0x60] sm:$0xff] %vm6207, %v6065
        %6221 = vst.msk [vmem:[%s663 + $0x68] sm:$0xff] %vm6207, %v6068
        %6222 = vst.msk [vmem:[%s663 + $0x70] sm:$0xff] %vm6207, %v6073
        %6223 = vst.msk [vmem:[%s663 + $0x78] sm:$0xff] %vm6207, %v6076
        %6224 = vst.msk [vmem:[%s663 + $0x80] sm:$0xff] %vm6207, %v6081
        %6225 = vst.msk [vmem:[%s663 + $0x88] sm:$0xff] %vm6207, %v6084
        %6226 = vst.msk [vmem:[%s663 + $0x90] sm:$0xff] %vm6207, %v6089
        %6227 = vst.msk [vmem:[%s663 + $0x98] sm:$0xff] %vm6207, %v6092
        %6228 = vst.msk [vmem:[%s663 + $0xa0] sm:$0xff] %vm6207, %v6097
        %6229 = vst.msk [vmem:[%s663 + $0xa8] sm:$0xff] %vm6207, %v6100
        %6230 = vst.msk [vmem:[%s663 + $0xb0] sm:$0xff] %vm6207, %v6105
        %6231 = vst.msk [vmem:[%s663 + $0xb8] sm:$0xff] %vm6207, %v6108
        %6232 = vst.msk [vmem:[%s663 + $0xc0] sm:$0xff] %vm6207, %v6113
        %6233 = vst.msk [vmem:[%s663 + $0xc8] sm:$0xff] %vm6207, %v6116
        %6234 = vst.msk [vmem:[%s663 + $0xd0] sm:$0xff] %vm6207, %v6121
        %6235 = vst.msk [vmem:[%s663 + $0xd8] sm:$0xff] %vm6207, %v6124
        %6236 = vst.msk [vmem:[%s663 + $0xe0] sm:$0xff] %vm6207, %v6129
        %6237 = vst.msk [vmem:[%s663 + $0xe8] sm:$0xff] %vm6207, %v6132
        %6238 = vst.msk [vmem:[%s663 + $0xf0] sm:$0xff] %vm6207, %v6137
        %6239 = vst.msk [vmem:[%s663 + $0xf8] sm:$0xff] %vm6207, %v6140
        %6240 = vst.msk [vmem:[%s663 + $0x100] sm:$0xff] %vm6207, %v6145
        %6241 = vst.msk [vmem:[%s663 + $0x108] sm:$0xff] %vm6207, %v6148
        %6242 = vst.msk [vmem:[%s663 + $0x110] sm:$0xff] %vm6207, %v6153
        %6243 = vst.msk [vmem:[%s663 + $0x118] sm:$0xff] %vm6207, %v6156
        %6244 = vst.msk [vmem:[%s663 + $0x120] sm:$0xff] %vm6207, %v6161
        %6245 = vst.msk [vmem:[%s663 + $0x128] sm:$0xff] %vm6207, %v6164
        %6246 = vst.msk [vmem:[%s663 + $0x130] sm:$0xff] %vm6207, %v6169
        %6247 = vst.msk [vmem:[%s663 + $0x138] sm:$0xff] %vm6207, %v6172
        %6248 = vst.msk [vmem:[%s663 + $0x140] sm:$0xff] %vm6207, %v6177
        %6249 = vst.msk [vmem:[%s663 + $0x148] sm:$0xff] %vm6207, %v6180
        %6250 = vst.msk [vmem:[%s663 + $0x150] sm:$0xff] %vm6207, %v6185
        %6251 = vst.msk [vmem:[%s663 + $0x158] sm:$0xff] %vm6207, %v6188
        %6252 = vst.msk [vmem:[%s663 + $0x160] sm:$0xff] %vm6207, %v6193
        %6253 = vst.msk [vmem:[%s663 + $0x168] sm:$0xff] %vm6207, %v6196
        %6254 = vst.msk [vmem:[%s663 + $0x170] sm:$0xff] %vm6207, %v6201
        %6255 = vst.msk [vmem:[%s663 + $0x178] sm:$0xff] %vm6207, %v6204
        %s6256 = smul.u32 48, %s33
        %p6257 = scmp.lt.s32.totalorder %s6256, 95
        %s6258 = scalar_select %p6257, %s6256, 95
        %s6259 = smul.addr %s6258, 8
        %s6260 = scalar_lea.vmem %s19, %s6259
        // Predicated region
        $region113: #{tpu_custom_call.1} parent=95 // pred_check
          %p6261 = pneg %p455
        $region114: #{tpu_custom_call.1} parent=95 // pred_check_branch
          %6263 = sbr.rel (%p6261) target = $region116
        $region115: #{tpu_custom_call.1} parent=95 // pred_region
          %s6264 = smul.u32 48, %s33
        $region116: #{tpu_custom_call.1} parent=95 // pred_fallthru
          _
      $region96: #{tpu_custom_call.1} parent=5 // pred_fallthru
        _
      %p6265 = scmp.le.s32.totalorder 2, %s28
      // Predicated region
      $region117: #{tpu_custom_call.1} parent=5 // pred_check
        %p6266 = pneg %p6265
      $region118: #{tpu_custom_call.1} parent=5 // pred_check_branch
        %6268 = sbr.rel (%p6266) target = $region120
      $region119: #{tpu_custom_call.1} parent=5 // pred_region
        %s6269 = ssub.s32 %s28, 2
        // Predicated region
        $region121: #{tpu_custom_call.1} parent=119 // pred_check
          %p6270 = pneg %p461
        $region122: #{tpu_custom_call.1} parent=119 // pred_check_branch
          %6272 = sbr.rel (%p6270) target = $region124
        $region123: #{tpu_custom_call.1} parent=119 // pred_region
          %s6273 = smul.u32 48, %s34
          %p6274 = scmp.lt.s32.totalorder %s6273, 95
          %s6275 = scalar_select %p6274, %s6273, 95
          %s6276 = smul.addr %s6275, 8
          %s6277 = scalar_lea.vmem %s19, %s6276
        $region124: #{tpu_custom_call.1} parent=119 // pred_fallthru
          _
      $region120: #{tpu_custom_call.1} parent=5 // pred_fallthru
        _
    $region6: #{tpu_custom_call.1} parent=1 // loop_footer
      %s32 = sadd.s32 1, %s28
    $region7: #{tpu_custom_call.1} parent=1 // loop_footer_branch
      %27 = sbr.rel target = $region3
    $region8: #{tpu_custom_call.1} parent=1 // loop_exit
      _
    %6278 = vsyncpa [#allocation3], 1
    %s6279 = scalar_lea.sflag [#allocation3], 1
    %6280 = vsyncpa %s6279, 1
    %6281 = vsyncpa [#allocation5], 1
    %6282 = vsyncpa [#allocation8], 1

</llo_original>
